<compile_context>
chip_gen: v5e
topology: v5e:2x2
jax: 0.10.0
libtpu: 0.0.40
codegen_flags: <defaults>
</compile_context>

<pallas_src>
import functools

import jax
import jax.numpy as jnp
from jax import lax
from jax.experimental import pallas as pl
from jax.experimental.pallas import tpu as pltpu


def _round_up(x, m):
    return (x + m - 1) // m * m


def encoder_gru_kernel(emb_f_ref, emb_b_ref, len_ref,
                       wih_f_ref, wih_b_ref, bias_f_ref, bias_b_ref,
                       whh_f_ref, whh_b_ref, bhn_f_ref, bhn_b_ref, h0_ref,
                       out_f_ref, out_b_ref, hid_ref,
                       gi_f_ref, gi_b_ref, hf_ref, hb_ref,
                       *, C, B, H, unroll):
    """One grid step = one time-chunk of C steps for BOTH directions.

    emb_f_ref : (C, B, H)  bf16  forward chunk c of embedded inputs
    emb_b_ref : (C, B, H)  bf16  chunk nC-1-c (consumed in reverse in-kernel)
    len_ref   : (B, 1)     int32 per-batch valid lengths (0 for padded rows)
    wih_*     : (H, 3H)    bf16  W_ih^T per direction (gate-blocked)
    bias_*    : (1, 3H)    f32   b_ih + b_hh folded for r,z gates (b_ih for n)
    whh_*     : (H, 3H)    bf16  W_hh^T per direction
    bhn_*     : (1, H)     f32   b_hn per direction
    h0_ref    : (2, B, H)  f32   initial hidden (fwd, bwd)      [grid-invariant]
    out_f_ref : (C, B, H)  f32   fwd-direction outputs, chunk c
    out_b_ref : (C, B, H)  f32   bwd-direction outputs, chunk nC-1-c
    hid_ref   : (2, B, H)  f32   final hidden per direction     [grid-invariant]
    gi_*_ref  : (C, B, 3H) bf16  chunk input projections (scratch)
    hf/hb_ref : (B, H)     f32   carried hidden states (scratch)
    """
    c = pl.program_id(0)
    nC = pl.num_programs(0)
    H2, H3 = 2 * H, 3 * H

    @pl.when(c == 0)
    def _():
        hf_ref[...] = h0_ref[0]
        hb_ref[...] = h0_ref[1]

    # ---- (1) chunk-hoisted input projection: one big bf16 MXU matmul per
    #      direction; cached in bf16 scratch (never regressed to per-step).
    gi_f = jnp.dot(emb_f_ref[...].reshape(C * B, H), wih_f_ref[...],
                   preferred_element_type=jnp.float32) + bias_f_ref[...]
    gi_b = jnp.dot(emb_b_ref[...].reshape(C * B, H), wih_b_ref[...],
                   preferred_element_type=jnp.float32) + bias_b_ref[...]
    gi_f_ref[...] = gi_f.reshape(C, B, H3).astype(jnp.bfloat16)
    gi_b_ref[...] = gi_b.reshape(C, B, H3).astype(jnp.bfloat16)

    whh_f = whh_f_ref[...]
    whh_b = whh_b_ref[...]
    bhn_f = bhn_f_ref[...]
    bhn_b = bhn_b_ref[...]
    lengths = len_ref[...]                              # (B, 1) int32
    t0_f = c * C                                        # first fwd time of this chunk
    t0_b = (nC - 1 - c) * C                             # first time of the bwd chunk

    def cell(gi_t, h, whh, bhn):
        # gi_t already folds b_ih + b_hh for r,z gates; only b_hn is added here.
        gh = jnp.dot(h.astype(jnp.bfloat16), whh,
                     preferred_element_type=jnp.float32)            # (B, 3H)
        r = jax.nn.sigmoid(gi_t[:, 0:H] + gh[:, 0:H])
        z = jax.nn.sigmoid(gi_t[:, H:H2] + gh[:, H:H2])
        n = jnp.tanh(gi_t[:, H2:H3] + r * (gh[:, H2:H3] + bhn))
        return (1.0 - z) * n + z * h

    # ---- (2) fused fwd/bwd recurrence over the chunk.  Packed-sequence
    #      semantics: once t >= length[b] the hidden state for that row is
    #      frozen and the (padded) output position is 0.
    def step(i, carry):
        h_f, h_b = carry
        j = C - 1 - i                                   # bwd local index
        gi_f_t = gi_f_ref[i]                            # (B, 3H) bf16
        gi_b_t = gi_b_ref[j]

        m_f = (t0_f + i < lengths).astype(jnp.float32)  # (B, 1)
        m_b = (t0_b + j < lengths).astype(jnp.float32)

        hf_new = cell(gi_f_t, h_f, whh_f, bhn_f)
        hb_new = cell(gi_b_t, h_b, whh_b, bhn_b)

        out_f_ref[i] = m_f * hf_new                     # fwd output, chunk-local i
        out_b_ref[j] = m_b * hb_new                     # bwd output, chunk-local j

        h_f = m_f * hf_new + (1.0 - m_f) * h_f
        h_b = m_b * hb_new + (1.0 - m_b) * h_b
        return (h_f, h_b)

    h_f, h_b = lax.fori_loop(0, C, step, (hf_ref[...], hb_ref[...]),
                             unroll=unroll)
    hf_ref[...] = h_f
    hb_ref[...] = h_b

    @pl.when(c == nC - 1)
    def _():
        hid_ref[0] = h_f
        hid_ref[1] = h_b


def _pad_gates_w(w, H, Hp):
    """(3H, H) PyTorch row-stacked [W_r; W_z; W_n] -> (Hp, 3Hp) transposed,
    each gate zero-padded to a lane-aligned Hp block."""
    blocks = []
    for g in range(3):
        wg = w[g * H:(g + 1) * H, :]                        # (H, H)
        wg = jnp.pad(wg, ((0, Hp - H), (0, Hp - H)))        # (Hp, Hp)
        blocks.append(wg.T)                                 # x @ W_g^T form
    return jnp.concatenate(blocks, axis=1)                  # (Hp, 3Hp)


def _pad_gates_b(b, H, Hp):
    """(3H,) -> (3Hp,) with per-gate zero padding."""
    return jnp.concatenate(
        [jnp.pad(b[g * H:(g + 1) * H], (0, Hp - H)) for g in range(3)])


def _kernel_vmem_bytes(C, Bp, Hp):
    bf16, f32 = 2, 4
    emb_blocks = 2 * 2 * C * Bp * Hp * bf16            # 2 dirs x double buffer
    out_blocks = 2 * 2 * C * Bp * Hp * f32
    gi_scratch = 2 * C * Bp * 3 * Hp * bf16
    gi_f32_tmp = 2 * C * Bp * 3 * Hp * f32             # projection temp pre-cast
    weights = 4 * Hp * 3 * Hp * bf16 + 2 * (3 * Hp + Hp) * f32
    state = 3 * 2 * Bp * Hp * f32                      # h0 + hid + carried h
    total = emb_blocks + out_blocks + gi_scratch + gi_f32_tmp + weights + state
    # generous 2x headroom, floored at 32 MiB, capped at v7x's 64 MiB physical
    return int(min(max(2 * total, 32 << 20), 64 << 20))


def encoder_rnn_forward(input_seq, input_lengths, embedding_table, params,
                        hidden=None, chunk_size=None):
    """Equivalent of EncoderRNN('gru', H, embedding, 1, 0, bidirectional=True).

    NOTE: packed-sequence semantics rely on padded batch rows having length 0
    (the jnp.pad below guarantees this) — do not pass pre-padded garbage lengths.
    """
    T, B = input_seq.shape
    H = embedding_table.shape[1]
    Bp = _round_up(max(B, 8), 8)          # sublane tile (raise toward 256 if more
    Hp = _round_up(max(H, 128), 128)      # sequences exist: recurrence is weight-push bound)
    if chunk_size is None:
        chunk_size = min(T, 16)           # size so the chunk footprint fits VMEM
    C = max(1, min(chunk_size, T))
    Tp = _round_up(T, C)
    nC = Tp // C

    # ----- plain-JAX glue: bf16 embedding gather (no f32 intermediate) + padding
    emb = embedding_table.astype(jnp.bfloat16)[input_seq]            # (T, B, H) bf16
    emb = jnp.pad(emb, ((0, Tp - T), (0, Bp - B), (0, Hp - H)))      # (Tp, Bp, Hp)

    lengths = jnp.pad(input_lengths.astype(jnp.int32), (0, Bp - B))
    lengths = lengths.reshape(Bp, 1)                                 # padded rows: len 0

    # ----- weights: gate-blocked padding, transpose, bf16; fold r/z biases -----
    wih_f = _pad_gates_w(params["w_ih_f"], H, Hp).astype(jnp.bfloat16)   # (Hp, 3Hp)
    wih_b = _pad_gates_w(params["w_ih_b"], H, Hp).astype(jnp.bfloat16)
    whh_f = _pad_gates_w(params["w_hh_f"], H, Hp).astype(jnp.bfloat16)
    whh_b = _pad_gates_w(params["w_hh_b"], H, Hp).astype(jnp.bfloat16)

    def fold_bias(b_ih, b_hh):
        bih_p = _pad_gates_b(b_ih, H, Hp)
        bhh_p = _pad_gates_b(b_hh, H, Hp)
        fold = bih_p + jnp.concatenate(
            [bhh_p[:2 * Hp], jnp.zeros((Hp,), jnp.float32)])
        return (fold.reshape(1, 3 * Hp).astype(jnp.float32),
                bhh_p[2 * Hp:].reshape(1, Hp).astype(jnp.float32))

    bias_f, bhn_f = fold_bias(params["b_ih_f"], params["b_hh_f"])
    bias_b, bhn_b = fold_bias(params["b_ih_b"], params["b_hh_b"])

    if hidden is None:
        h0 = jnp.zeros((2, Bp, Hp), jnp.float32)
    else:
        h0 = jnp.pad(hidden.astype(jnp.float32),
                     ((0, 0), (0, Bp - B), (0, Hp - H)))

    full2 = lambda c: (0, 0)
    full3 = lambda c: (0, 0, 0)
    in_specs = [
        pl.BlockSpec((C, Bp, Hp), lambda c: (c, 0, 0)),              # emb fwd chunk
        pl.BlockSpec((C, Bp, Hp), lambda c: (nC - 1 - c, 0, 0)),     # emb bwd chunk
        pl.BlockSpec((Bp, 1), full2),                                # lengths
        pl.BlockSpec((Hp, 3 * Hp), full2),                           # wih_f (resident)
        pl.BlockSpec((Hp, 3 * Hp), full2),                           # wih_b
        pl.BlockSpec((1, 3 * Hp), full2),                            # bias_f
        pl.BlockSpec((1, 3 * Hp), full2),                            # bias_b
        pl.BlockSpec((Hp, 3 * Hp), full2),                           # whh_f
        pl.BlockSpec((Hp, 3 * Hp), full2),                           # whh_b
        pl.BlockSpec((1, Hp), full2),                                # bhn_f
        pl.BlockSpec((1, Hp), full2),                                # bhn_b
        pl.BlockSpec((2, Bp, Hp), full3),                            # h0 (resident)
    ]
    out_specs = (
        pl.BlockSpec((C, Bp, Hp), lambda c: (c, 0, 0)),              # fwd contribution
        pl.BlockSpec((C, Bp, Hp), lambda c: (nC - 1 - c, 0, 0)),     # bwd contribution
        pl.BlockSpec((2, Bp, Hp), full3),                            # final hidden
    )
    out_shape = (
        jax.ShapeDtypeStruct((Tp, Bp, Hp), jnp.float32),
        jax.ShapeDtypeStruct((Tp, Bp, Hp), jnp.float32),
        jax.ShapeDtypeStruct((2, Bp, Hp), jnp.float32),
    )
    scratch_shapes = [
        pltpu.VMEM((C, Bp, 3 * Hp), jnp.bfloat16),   # gi forward chunk (bf16)
        pltpu.VMEM((C, Bp, 3 * Hp), jnp.bfloat16),   # gi backward chunk (bf16)
        pltpu.VMEM((Bp, Hp), jnp.float32),           # carried fwd hidden state
        pltpu.VMEM((Bp, Hp), jnp.float32),           # carried bwd hidden state
    ]

    cost = pl.CostEstimate(
        flops=int(24 * Tp * Bp * Hp * Hp),                 # 2 dirs x (proj + recurrent)
        transcendentals=int(6 * Tp * Bp * Hp),             # 2 sigmoid + 1 tanh per dir
        bytes_accessed=int(Tp * Bp * Hp * (2 * 2 + 2 * 4)  # emb read x2, out x2
                           + 4 * Hp * 3 * Hp * 2           # weights
                           + 4 * Bp * Hp * 4),             # h0 + hid
    )

    kernel = functools.partial(encoder_gru_kernel, C=C, B=Bp, H=Hp,
                               unroll=min(C, 8))

    out_f, out_b, hid_p = pl.pallas_call(
        kernel,
        out_shape=out_shape,
        grid_spec=pltpu.PrefetchScalarGridSpec(
            num_scalar_prefetch=0,
            grid=(nC,),
            in_specs=in_specs,
            out_specs=out_specs,
            scratch_shapes=scratch_shapes),
        compiler_params=pltpu.CompilerParams(
            dimension_semantics=("arbitrary",),            # serial recurrence
            vmem_limit_bytes=_kernel_vmem_bytes(C, Bp, Hp)),
        cost_estimate=cost,
    )(emb, emb, lengths, wih_f, wih_b, bias_f, bias_b,
      whh_f, whh_b, bhn_f, bhn_b, h0)

    # Single XLA add of the two streamed direction outputs (cheap vs the serial
    # recurrence), then strip the tile padding.
    outputs = (out_f + out_b)[:T, :B, :H]
    return outputs, hid_p[:, :B, :H]


# ---------------- pure-JAX f32 reference (for sanity check) ----------------
def _reference_forward(input_seq, input_lengths, embedding_table, params):
    T, B = input_seq.shape
    H = embedding_table.shape[1]
    emb = embedding_table[input_seq].astype(jnp.float32)
    t_idx = jnp.arange(T, dtype=jnp.int32)[:, None]
    mask = (t_idx < input_lengths[None, :].astype(jnp.int32)).astype(jnp.float32)
    mask = mask[:, :, None]

    def cell(x_t, h, wih, whh, bih, bhh):
        gi = x_t @ wih.T + bih
        gh = h @ whh.T + bhh
        r = jax.nn.sigmoid(gi[:, :H] + gh[:, :H])
        z = jax.nn.sigmoid(gi[:, H:2 * H] + gh[:, H:2 * H])
        n = jnp.tanh(gi[:, 2 * H:] + r * gh[:, 2 * H:])
        return (1.0 - z) * n + z * h

    h = jnp.zeros((B, H), jnp.float32)
    out_f = []
    for t in range(T):
        h_new = cell(emb[t], h, params["w_ih_f"], params["w_hh_f"],
                     params["b_ih_f"], params["b_hh_f"])
        out_f.append(mask[t] * h_new)
        h = mask[t] * h_new + (1.0 - mask[t]) * h
    h_fwd = h

    h = jnp.zeros((B, H), jnp.float32)
    out_b = [None] * T
    for t in range(T - 1, -1, -1):
        h_new = cell(emb[t], h, params["w_ih_b"], params["w_hh_b"],
                     params["b_ih_b"], params["b_hh_b"])
        out_b[t] = mask[t] * h_new
        h = mask[t] * h_new + (1.0 - mask[t]) * h
    h_bwd = h

    outputs = jnp.stack(out_f) + jnp.stack(out_b)
    hid = jnp.stack([h_fwd, h_bwd])
    return outputs, hid


if __name__ == "__main__":
    T, B, H, VOCAB = 8, 2, 32, 50

    key = jax.random.PRNGKey(0)
    keys = jax.random.split(key, 12)

    scale = 1.0 / jnp.sqrt(jnp.float32(H))
    def uni(k, shape):
        return jax.random.uniform(k, shape, jnp.float32, -scale, scale)

    embedding_table = jax.random.normal(keys[0], (VOCAB, H), jnp.float32) * 0.1
    params = {
        "w_ih_f": uni(keys[1], (3 * H, H)), "w_hh_f": uni(keys[2], (3 * H, H)),
        "b_ih_f": uni(keys[3], (3 * H,)),   "b_hh_f": uni(keys[4], (3 * H,)),
        "w_ih_b": uni(keys[5], (3 * H, H)), "w_hh_b": uni(keys[6], (3 * H, H)),
        "b_ih_b": uni(keys[7], (3 * H,)),   "b_hh_b": uni(keys[8], (3 * H,)),
    }

    input_seq = jax.random.randint(keys[9], (T, B), 0, VOCAB, jnp.int32)
    # pack_padded_sequence default expects lengths sorted in decreasing order.
    input_lengths = jnp.array([T, 5], dtype=jnp.int32)

    ref_out, ref_hid = _reference_forward(input_seq, input_lengths,
                                          embedding_table, params)

    # multi-chunk grid (T divisible by chunk)
    outputs, hidden = encoder_rnn_forward(input_seq, input_lengths,
                                          embedding_table, params,
                                          chunk_size=4)
    outputs = jax.block_until_ready(outputs)
    hidden = jax.block_until_ready(hidden)
    assert outputs.shape == (T, B, H)
    assert hidden.shape == (2, B, H)
    assert jnp.allclose(outputs, ref_out, rtol=2e-2, atol=2e-2)
    assert jnp.allclose(hidden, ref_hid, rtol=2e-2, atol=2e-2)

    # chunk that does not divide T (exercises padded, fully-masked time steps)
    outputs2, hidden2 = encoder_rnn_forward(input_seq, input_lengths,
                                            embedding_table, params,
                                            chunk_size=3)
    outputs2 = jax.block_until_ready(outputs2)
    hidden2 = jax.block_until_ready(hidden2)
    assert jnp.allclose(outputs2, ref_out, rtol=2e-2, atol=2e-2)
    assert jnp.allclose(hidden2, ref_hid, rtol=2e-2, atol=2e-2)

    print("KERNEL_OK")
</pallas_src>

<mosaic_0001>
module attributes {stable_mosaic.version = 11 : i64} {
  func.func @encoder_gru_kernel(%arg0: i32, %arg1: memref<4x8x128xbf16, #tpu.memory_space<vmem>>, %arg2: memref<4x8x128xbf16, #tpu.memory_space<vmem>>, %arg3: memref<8x1xi32, #tpu.memory_space<vmem>>, %arg4: memref<128x384xbf16, #tpu.memory_space<vmem>>, %arg5: memref<128x384xbf16, #tpu.memory_space<vmem>>, %arg6: memref<1x384xf32, #tpu.memory_space<vmem>>, %arg7: memref<1x384xf32, #tpu.memory_space<vmem>>, %arg8: memref<128x384xbf16, #tpu.memory_space<vmem>>, %arg9: memref<128x384xbf16, #tpu.memory_space<vmem>>, %arg10: memref<1x128xf32, #tpu.memory_space<vmem>>, %arg11: memref<1x128xf32, #tpu.memory_space<vmem>>, %arg12: memref<2x8x128xf32, #tpu.memory_space<vmem>>, %arg13: memref<4x8x128xf32, #tpu.memory_space<vmem>>, %arg14: memref<4x8x128xf32, #tpu.memory_space<vmem>>, %arg15: memref<2x8x128xf32, #tpu.memory_space<vmem>>, %arg16: memref<4x8x384xbf16, #tpu.memory_space<vmem>>, %arg17: memref<4x8x384xbf16, #tpu.memory_space<vmem>>, %arg18: memref<8x128xf32, #tpu.memory_space<vmem>>, %arg19: memref<8x128xf32, #tpu.memory_space<vmem>>) attributes {dimension_semantics = [#tpu.dimension_semantics<arbitrary>], iteration_bounds = array<i64: 2>, scalar_prefetch = 0 : i64, scratch_operands = 4 : i64, tpu.core_type = #tpu.core_type<tc>, window_params = [{transform_indices = @transform_0, window_bounds = array<i64: 4, 8, 128>}, {transform_indices = @transform_1, window_bounds = array<i64: 4, 8, 128>}, {pipeline_mode = #tpu.pipeline_mode<synchronous>, transform_indices = @transform_2, window_bounds = array<i64: 8, 1>}, {pipeline_mode = #tpu.pipeline_mode<synchronous>, transform_indices = @transform_3, window_bounds = array<i64: 128, 384>}, {pipeline_mode = #tpu.pipeline_mode<synchronous>, transform_indices = @transform_4, window_bounds = array<i64: 128, 384>}, {pipeline_mode = #tpu.pipeline_mode<synchronous>, transform_indices = @transform_5, window_bounds = array<i64: 1, 384>}, {pipeline_mode = #tpu.pipeline_mode<synchronous>, transform_indices = @transform_6, window_bounds = array<i64: 1, 384>}, {pipeline_mode = #tpu.pipeline_mode<synchronous>, transform_indices = @transform_7, window_bounds = array<i64: 128, 384>}, {pipeline_mode = #tpu.pipeline_mode<synchronous>, transform_indices = @transform_8, window_bounds = array<i64: 128, 384>}, {pipeline_mode = #tpu.pipeline_mode<synchronous>, transform_indices = @transform_9, window_bounds = array<i64: 1, 128>}, {pipeline_mode = #tpu.pipeline_mode<synchronous>, transform_indices = @transform_10, window_bounds = array<i64: 1, 128>}, {pipeline_mode = #tpu.pipeline_mode<synchronous>, transform_indices = @transform_11, window_bounds = array<i64: 2, 8, 128>}, {transform_indices = @transform_12, window_bounds = array<i64: 4, 8, 128>}, {transform_indices = @transform_13, window_bounds = array<i64: 4, 8, 128>}, {pipeline_mode = #tpu.pipeline_mode<synchronous>, transform_indices = @transform_14, window_bounds = array<i64: 2, 8, 128>}]} {
    %c0_i32 = arith.constant 0 : i32
    %0 = arith.cmpi eq, %arg0, %c0_i32 : i32
    %1 = arith.extui %0 : i1 to i32
    %c0_i32_0 = arith.constant 0 : i32
    %2 = arith.cmpi ne, %1, %c0_i32_0 : i32
    scf.if %2 {
      %c0_121 = arith.constant 0 : index
      %c0_122 = arith.constant 0 : index
      %c0_123 = arith.constant 0 : index
      %474 = vector.load %arg12[%c0_121, %c0_122, %c0_123] : memref<2x8x128xf32, #tpu.memory_space<vmem>>, vector<1x8x128xf32>
      %475 = vector.shape_cast %474 : vector<1x8x128xf32> to vector<8x128xf32>
      %c0_124 = arith.constant 0 : index
      %c0_125 = arith.constant 0 : index
      %476 = vector.load %arg18[%c0_124, %c0_125] : memref<8x128xf32, #tpu.memory_space<vmem>>, vector<8x128xf32>
      tpu.vector_store %arg18[%c0_124, %c0_125], %475 {strides = array<i32>} : memref<8x128xf32, #tpu.memory_space<vmem>>, vector<8x128xf32>,
      %c1 = arith.constant 1 : index
      %c0_126 = arith.constant 0 : index
      %c0_127 = arith.constant 0 : index
      %477 = vector.load %arg12[%c1, %c0_126, %c0_127] : memref<2x8x128xf32, #tpu.memory_space<vmem>>, vector<1x8x128xf32>
      %478 = vector.shape_cast %477 : vector<1x8x128xf32> to vector<8x128xf32>
      %c0_128 = arith.constant 0 : index
      %c0_129 = arith.constant 0 : index
      %479 = vector.load %arg19[%c0_128, %c0_129] : memref<8x128xf32, #tpu.memory_space<vmem>>, vector<8x128xf32>
      tpu.vector_store %arg19[%c0_128, %c0_129], %478 {strides = array<i32>} : memref<8x128xf32, #tpu.memory_space<vmem>>, vector<8x128xf32>,
    } else {
    }
    %c0 = arith.constant 0 : index
    %c0_1 = arith.constant 0 : index
    %c0_2 = arith.constant 0 : index
    %3 = vector.load %arg1[%c0, %c0_1, %c0_2] : memref<4x8x128xbf16, #tpu.memory_space<vmem>>, vector<4x8x128xbf16>
    %4 = vector.shape_cast %3 : vector<4x8x128xbf16> to vector<32x128xbf16>
    %c0_3 = arith.constant 0 : index
    %c0_4 = arith.constant 0 : index
    %5 = vector.load %arg4[%c0_3, %c0_4] : memref<128x384xbf16, #tpu.memory_space<vmem>>, vector<128x384xbf16>
    %cst = arith.constant dense<0.000000e+00> : vector<32x384xf32>
    %6 = tpu.matmul %4, %5, %cst {dimension_numbers = #tpu.dot_dimension_numbers<[1], [0], [0], [1], [0, 0, 1, 1], [], []>} : vector<32x128xbf16>, vector<128x384xbf16>, vector<32x384xf32> -> vector<32x384xf32>
    %c0_5 = arith.constant 0 : index
    %c0_6 = arith.constant 0 : index
    %7 = vector.load %arg6[%c0_5, %c0_6] : memref<1x384xf32, #tpu.memory_space<vmem>>, vector<1x384xf32>
    %8 = vector.broadcast %7 : vector<1x384xf32> to vector<32x384xf32>
    %9 = arith.addf %6, %8 : vector<32x384xf32>
    %c0_7 = arith.constant 0 : index
    %c0_8 = arith.constant 0 : index
    %c0_9 = arith.constant 0 : index
    %10 = vector.load %arg2[%c0_7, %c0_8, %c0_9] : memref<4x8x128xbf16, #tpu.memory_space<vmem>>, vector<4x8x128xbf16>
    %11 = vector.shape_cast %10 : vector<4x8x128xbf16> to vector<32x128xbf16>
    %c0_10 = arith.constant 0 : index
    %c0_11 = arith.constant 0 : index
    %12 = vector.load %arg5[%c0_10, %c0_11] : memref<128x384xbf16, #tpu.memory_space<vmem>>, vector<128x384xbf16>
    %cst_12 = arith.constant dense<0.000000e+00> : vector<32x384xf32>
    %13 = tpu.matmul %11, %12, %cst_12 {dimension_numbers = #tpu.dot_dimension_numbers<[1], [0], [0], [1], [0, 0, 1, 1], [], []>} : vector<32x128xbf16>, vector<128x384xbf16>, vector<32x384xf32> -> vector<32x384xf32>
    %c0_13 = arith.constant 0 : index
    %c0_14 = arith.constant 0 : index
    %14 = vector.load %arg7[%c0_13, %c0_14] : memref<1x384xf32, #tpu.memory_space<vmem>>, vector<1x384xf32>
    %15 = vector.broadcast %14 : vector<1x384xf32> to vector<32x384xf32>
    %16 = arith.addf %13, %15 : vector<32x384xf32>
    %17 = vector.shape_cast %9 : vector<32x384xf32> to vector<4x8x384xf32>
    %18 = arith.truncf %17 : vector<4x8x384xf32> to vector<4x8x384xbf16>
    %c0_15 = arith.constant 0 : index
    %c0_16 = arith.constant 0 : index
    %c0_17 = arith.constant 0 : index
    %19 = vector.load %arg16[%c0_15, %c0_16, %c0_17] : memref<4x8x384xbf16, #tpu.memory_space<vmem>>, vector<4x8x384xbf16>
    tpu.vector_store %arg16[%c0_15, %c0_16, %c0_17], %18 {strides = array<i32>} : memref<4x8x384xbf16, #tpu.memory_space<vmem>>, vector<4x8x384xbf16>,
    %20 = vector.shape_cast %16 : vector<32x384xf32> to vector<4x8x384xf32>
    %21 = arith.truncf %20 : vector<4x8x384xf32> to vector<4x8x384xbf16>
    %c0_18 = arith.constant 0 : index
    %c0_19 = arith.constant 0 : index
    %c0_20 = arith.constant 0 : index
    %22 = vector.load %arg17[%c0_18, %c0_19, %c0_20] : memref<4x8x384xbf16, #tpu.memory_space<vmem>>, vector<4x8x384xbf16>
    tpu.vector_store %arg17[%c0_18, %c0_19, %c0_20], %21 {strides = array<i32>} : memref<4x8x384xbf16, #tpu.memory_space<vmem>>, vector<4x8x384xbf16>,
    %c0_21 = arith.constant 0 : index
    %c0_22 = arith.constant 0 : index
    %23 = vector.load %arg8[%c0_21, %c0_22] : memref<128x384xbf16, #tpu.memory_space<vmem>>, vector<128x384xbf16>
    %c0_23 = arith.constant 0 : index
    %c0_24 = arith.constant 0 : index
    %24 = vector.load %arg9[%c0_23, %c0_24] : memref<128x384xbf16, #tpu.memory_space<vmem>>, vector<128x384xbf16>
    %c0_25 = arith.constant 0 : index
    %c0_26 = arith.constant 0 : index
    %25 = vector.load %arg10[%c0_25, %c0_26] : memref<1x128xf32, #tpu.memory_space<vmem>>, vector<1x128xf32>
    %c0_27 = arith.constant 0 : index
    %c0_28 = arith.constant 0 : index
    %26 = vector.load %arg11[%c0_27, %c0_28] : memref<1x128xf32, #tpu.memory_space<vmem>>, vector<1x128xf32>
    %c0_29 = arith.constant 0 : index
    %c0_30 = arith.constant 0 : index
    %27 = vector.load %arg3[%c0_29, %c0_30] : memref<8x1xi32, #tpu.memory_space<vmem>>, vector<8x1xi32>
    %c4_i32 = arith.constant 4 : i32
    %28 = arith.muli %arg0, %c4_i32 : i32
    %c1_i32 = arith.constant 1 : i32
    %29 = arith.subi %c1_i32, %arg0 : i32
    %c4_i32_31 = arith.constant 4 : i32
    %30 = arith.muli %29, %c4_i32_31 : i32
    %c0_32 = arith.constant 0 : index
    %c0_33 = arith.constant 0 : index
    %31 = vector.load %arg18[%c0_32, %c0_33] : memref<8x128xf32, #tpu.memory_space<vmem>>, vector<8x128xf32>
    %c0_34 = arith.constant 0 : index
    %c0_35 = arith.constant 0 : index
    %32 = vector.load %arg19[%c0_34, %c0_35] : memref<8x128xf32, #tpu.memory_space<vmem>>, vector<8x128xf32>
    %c0_i32_36 = arith.constant 0 : i32
    %c3_i32 = arith.constant 3 : i32
    %33 = arith.subi %c3_i32, %c0_i32_36 : i32
    %34 = arith.index_cast %c0_i32_36 : i32 to index
    %c0_37 = arith.constant 0 : index
    %c0_38 = arith.constant 0 : index
    %35 = vector.load %arg16[%34, %c0_37, %c0_38] : memref<4x8x384xbf16, #tpu.memory_space<vmem>>, vector<1x8x384xbf16>
    %36 = vector.shape_cast %35 : vector<1x8x384xbf16> to vector<8x384xbf16>
    %37 = arith.index_cast %33 : i32 to index
    %c0_39 = arith.constant 0 : index
    %c0_40 = arith.constant 0 : index
    %38 = vector.load %arg17[%37, %c0_39, %c0_40] : memref<4x8x384xbf16, #tpu.memory_space<vmem>>, vector<1x8x384xbf16>
    %39 = vector.shape_cast %38 : vector<1x8x384xbf16> to vector<8x384xbf16>
    %40 = arith.addi %28, %c0_i32_36 : i32
    %41 = vector.broadcast %40 : i32 to vector<8x1xi32>
    %42 = arith.cmpi slt, %41, %27 : vector<8x1xi32>
    %43 = arith.extui %42 : vector<8x1xi1> to vector<8x1xi32>
    %44 = arith.sitofp %43 : vector<8x1xi32> to vector<8x1xf32>
    %45 = arith.addi %30, %33 : i32
    %46 = vector.broadcast %45 : i32 to vector<8x1xi32>
    %47 = arith.cmpi slt, %46, %27 : vector<8x1xi32>
    %48 = arith.extui %47 : vector<8x1xi1> to vector<8x1xi32>
    %49 = arith.sitofp %48 : vector<8x1xi32> to vector<8x1xf32>
    %50 = arith.truncf %31 : vector<8x128xf32> to vector<8x128xbf16>
    %cst_41 = arith.constant dense<0.000000e+00> : vector<8x384xf32>
    %51 = tpu.matmul %50, %23, %cst_41 {dimension_numbers = #tpu.dot_dimension_numbers<[1], [0], [0], [1], [0, 0, 1, 1], [], []>} : vector<8x128xbf16>, vector<128x384xbf16>, vector<8x384xf32> -> vector<8x384xf32>
    %52 = vector.extract_strided_slice %36 {offsets = [0, 0], sizes = [8, 128], strides = [1, 1]} : vector<8x384xbf16> to vector<8x128xbf16>
    %53 = vector.extract_strided_slice %51 {offsets = [0, 0], sizes = [8, 128], strides = [1, 1]} : vector<8x384xf32> to vector<8x128xf32>
    %54 = arith.extf %52 : vector<8x128xbf16> to vector<8x128xf32>
    %55 = arith.addf %54, %53 : vector<8x128xf32>
    %56 = arith.negf %55 : vector<8x128xf32>
    %57 = math.exp %56 : vector<8x128xf32>
    %cst_42 = arith.constant 1.000000e+00 : f32
    %58 = vector.broadcast %cst_42 : f32 to vector<8x128xf32>
    %59 = arith.addf %58, %57 : vector<8x128xf32>
    %60 = arith.divf %58, %59 : vector<8x128xf32>
    %61 = vector.extract_strided_slice %36 {offsets = [0, 128], sizes = [8, 128], strides = [1, 1]} : vector<8x384xbf16> to vector<8x128xbf16>
    %62 = vector.extract_strided_slice %51 {offsets = [0, 128], sizes = [8, 128], strides = [1, 1]} : vector<8x384xf32> to vector<8x128xf32>
    %63 = arith.extf %61 : vector<8x128xbf16> to vector<8x128xf32>
    %64 = arith.addf %63, %62 : vector<8x128xf32>
    %65 = arith.negf %64 : vector<8x128xf32>
    %66 = math.exp %65 : vector<8x128xf32>
    %cst_43 = arith.constant 1.000000e+00 : f32
    %67 = vector.broadcast %cst_43 : f32 to vector<8x128xf32>
    %68 = arith.addf %67, %66 : vector<8x128xf32>
    %69 = arith.divf %67, %68 : vector<8x128xf32>
    %70 = vector.extract_strided_slice %36 {offsets = [0, 256], sizes = [8, 128], strides = [1, 1]} : vector<8x384xbf16> to vector<8x128xbf16>
    %71 = vector.extract_strided_slice %51 {offsets = [0, 256], sizes = [8, 128], strides = [1, 1]} : vector<8x384xf32> to vector<8x128xf32>
    %72 = vector.broadcast %25 : vector<1x128xf32> to vector<8x128xf32>
    %73 = arith.addf %71, %72 : vector<8x128xf32>
    %74 = arith.mulf %60, %73 : vector<8x128xf32>
    %75 = arith.extf %70 : vector<8x128xbf16> to vector<8x128xf32>
    %76 = arith.addf %75, %74 : vector<8x128xf32>
    %77 = math.tanh %76 : vector<8x128xf32>
    %cst_44 = arith.constant 1.000000e+00 : f32
    %78 = vector.broadcast %cst_44 : f32 to vector<8x128xf32>
    %79 = arith.subf %78, %69 : vector<8x128xf32>
    %80 = arith.mulf %79, %77 : vector<8x128xf32>
    %81 = arith.mulf %69, %31 : vector<8x128xf32>
    %82 = arith.addf %80, %81 : vector<8x128xf32>
    %83 = arith.truncf %32 : vector<8x128xf32> to vector<8x128xbf16>
    %cst_45 = arith.constant dense<0.000000e+00> : vector<8x384xf32>
    %84 = tpu.matmul %83, %24, %cst_45 {dimension_numbers = #tpu.dot_dimension_numbers<[1], [0], [0], [1], [0, 0, 1, 1], [], []>} : vector<8x128xbf16>, vector<128x384xbf16>, vector<8x384xf32> -> vector<8x384xf32>
    %85 = vector.extract_strided_slice %39 {offsets = [0, 0], sizes = [8, 128], strides = [1, 1]} : vector<8x384xbf16> to vector<8x128xbf16>
    %86 = vector.extract_strided_slice %84 {offsets = [0, 0], sizes = [8, 128], strides = [1, 1]} : vector<8x384xf32> to vector<8x128xf32>
    %87 = arith.extf %85 : vector<8x128xbf16> to vector<8x128xf32>
    %88 = arith.addf %87, %86 : vector<8x128xf32>
    %89 = arith.negf %88 : vector<8x128xf32>
    %90 = math.exp %89 : vector<8x128xf32>
    %cst_46 = arith.constant 1.000000e+00 : f32
    %91 = vector.broadcast %cst_46 : f32 to vector<8x128xf32>
    %92 = arith.addf %91, %90 : vector<8x128xf32>
    %93 = arith.divf %91, %92 : vector<8x128xf32>
    %94 = vector.extract_strided_slice %39 {offsets = [0, 128], sizes = [8, 128], strides = [1, 1]} : vector<8x384xbf16> to vector<8x128xbf16>
    %95 = vector.extract_strided_slice %84 {offsets = [0, 128], sizes = [8, 128], strides = [1, 1]} : vector<8x384xf32> to vector<8x128xf32>
    %96 = arith.extf %94 : vector<8x128xbf16> to vector<8x128xf32>
    %97 = arith.addf %96, %95 : vector<8x128xf32>
    %98 = arith.negf %97 : vector<8x128xf32>
    %99 = math.exp %98 : vector<8x128xf32>
    %cst_47 = arith.constant 1.000000e+00 : f32
    %100 = vector.broadcast %cst_47 : f32 to vector<8x128xf32>
    %101 = arith.addf %100, %99 : vector<8x128xf32>
    %102 = arith.divf %100, %101 : vector<8x128xf32>
    %103 = vector.extract_strided_slice %39 {offsets = [0, 256], sizes = [8, 128], strides = [1, 1]} : vector<8x384xbf16> to vector<8x128xbf16>
    %104 = vector.extract_strided_slice %84 {offsets = [0, 256], sizes = [8, 128], strides = [1, 1]} : vector<8x384xf32> to vector<8x128xf32>
    %105 = vector.broadcast %26 : vector<1x128xf32> to vector<8x128xf32>
    %106 = arith.addf %104, %105 : vector<8x128xf32>
    %107 = arith.mulf %93, %106 : vector<8x128xf32>
    %108 = arith.extf %103 : vector<8x128xbf16> to vector<8x128xf32>
    %109 = arith.addf %108, %107 : vector<8x128xf32>
    %110 = math.tanh %109 : vector<8x128xf32>
    %cst_48 = arith.constant 1.000000e+00 : f32
    %111 = vector.broadcast %cst_48 : f32 to vector<8x128xf32>
    %112 = arith.subf %111, %102 : vector<8x128xf32>
    %113 = arith.mulf %112, %110 : vector<8x128xf32>
    %114 = arith.mulf %102, %32 : vector<8x128xf32>
    %115 = arith.addf %113, %114 : vector<8x128xf32>
    %116 = vector.broadcast %44 : vector<8x1xf32> to vector<8x128xf32>
    %117 = arith.mulf %116, %82 : vector<8x128xf32>
    %118 = arith.index_cast %c0_i32_36 : i32 to index
    %c0_49 = arith.constant 0 : index
    %c0_50 = arith.constant 0 : index
    %119 = vector.load %arg13[%118, %c0_49, %c0_50] : memref<4x8x128xf32, #tpu.memory_space<vmem>>, vector<1x8x128xf32>
    %120 = vector.shape_cast %119 : vector<1x8x128xf32> to vector<8x128xf32>
    %121 = vector.shape_cast %117 : vector<8x128xf32> to vector<1x8x128xf32>
    tpu.vector_store %arg13[%118, %c0_49, %c0_50], %121 {strides = array<i32>} : memref<4x8x128xf32, #tpu.memory_space<vmem>>, vector<1x8x128xf32>,
    %122 = vector.broadcast %49 : vector<8x1xf32> to vector<8x128xf32>
    %123 = arith.mulf %122, %115 : vector<8x128xf32>
    %124 = arith.index_cast %33 : i32 to index
    %c0_51 = arith.constant 0 : index
    %c0_52 = arith.constant 0 : index
    %125 = vector.load %arg14[%124, %c0_51, %c0_52] : memref<4x8x128xf32, #tpu.memory_space<vmem>>, vector<1x8x128xf32>
    %126 = vector.shape_cast %125 : vector<1x8x128xf32> to vector<8x128xf32>
    %127 = vector.shape_cast %123 : vector<8x128xf32> to vector<1x8x128xf32>
    tpu.vector_store %arg14[%124, %c0_51, %c0_52], %127 {strides = array<i32>} : memref<4x8x128xf32, #tpu.memory_space<vmem>>, vector<1x8x128xf32>,
    %128 = vector.broadcast %44 : vector<8x1xf32> to vector<8x128xf32>
    %129 = arith.mulf %128, %82 : vector<8x128xf32>
    %cst_53 = arith.constant 1.000000e+00 : f32
    %130 = vector.broadcast %cst_53 : f32 to vector<8x1xf32>
    %131 = arith.subf %130, %44 : vector<8x1xf32>
    %132 = vector.broadcast %131 : vector<8x1xf32> to vector<8x128xf32>
    %133 = arith.mulf %132, %31 : vector<8x128xf32>
    %134 = arith.addf %129, %133 : vector<8x128xf32>
    %135 = vector.broadcast %49 : vector<8x1xf32> to vector<8x128xf32>
    %136 = arith.mulf %135, %115 : vector<8x128xf32>
    %cst_54 = arith.constant 1.000000e+00 : f32
    %137 = vector.broadcast %cst_54 : f32 to vector<8x1xf32>
    %138 = arith.subf %137, %49 : vector<8x1xf32>
    %139 = vector.broadcast %138 : vector<8x1xf32> to vector<8x128xf32>
    %140 = arith.mulf %139, %32 : vector<8x128xf32>
    %141 = arith.addf %136, %140 : vector<8x128xf32>
    %c1_i32_55 = arith.constant 1 : i32
    %c3_i32_56 = arith.constant 3 : i32
    %142 = arith.subi %c3_i32_56, %c1_i32_55 : i32
    %143 = arith.index_cast %c1_i32_55 : i32 to index
    %c0_57 = arith.constant 0 : index
    %c0_58 = arith.constant 0 : index
    %144 = vector.load %arg16[%143, %c0_57, %c0_58] : memref<4x8x384xbf16, #tpu.memory_space<vmem>>, vector<1x8x384xbf16>
    %145 = vector.shape_cast %144 : vector<1x8x384xbf16> to vector<8x384xbf16>
    %146 = arith.index_cast %142 : i32 to index
    %c0_59 = arith.constant 0 : index
    %c0_60 = arith.constant 0 : index
    %147 = vector.load %arg17[%146, %c0_59, %c0_60] : memref<4x8x384xbf16, #tpu.memory_space<vmem>>, vector<1x8x384xbf16>
    %148 = vector.shape_cast %147 : vector<1x8x384xbf16> to vector<8x384xbf16>
    %149 = arith.addi %28, %c1_i32_55 : i32
    %150 = vector.broadcast %149 : i32 to vector<8x1xi32>
    %151 = arith.cmpi slt, %150, %27 : vector<8x1xi32>
    %152 = arith.extui %151 : vector<8x1xi1> to vector<8x1xi32>
    %153 = arith.sitofp %152 : vector<8x1xi32> to vector<8x1xf32>
    %154 = arith.addi %30, %142 : i32
    %155 = vector.broadcast %154 : i32 to vector<8x1xi32>
    %156 = arith.cmpi slt, %155, %27 : vector<8x1xi32>
    %157 = arith.extui %156 : vector<8x1xi1> to vector<8x1xi32>
    %158 = arith.sitofp %157 : vector<8x1xi32> to vector<8x1xf32>
    %159 = arith.truncf %134 : vector<8x128xf32> to vector<8x128xbf16>
    %cst_61 = arith.constant dense<0.000000e+00> : vector<8x384xf32>
    %160 = tpu.matmul %159, %23, %cst_61 {dimension_numbers = #tpu.dot_dimension_numbers<[1], [0], [0], [1], [0, 0, 1, 1], [], []>} : vector<8x128xbf16>, vector<128x384xbf16>, vector<8x384xf32> -> vector<8x384xf32>
    %161 = vector.extract_strided_slice %145 {offsets = [0, 0], sizes = [8, 128], strides = [1, 1]} : vector<8x384xbf16> to vector<8x128xbf16>
    %162 = vector.extract_strided_slice %160 {offsets = [0, 0], sizes = [8, 128], strides = [1, 1]} : vector<8x384xf32> to vector<8x128xf32>
    %163 = arith.extf %161 : vector<8x128xbf16> to vector<8x128xf32>
    %164 = arith.addf %163, %162 : vector<8x128xf32>
    %165 = arith.negf %164 : vector<8x128xf32>
    %166 = math.exp %165 : vector<8x128xf32>
    %cst_62 = arith.constant 1.000000e+00 : f32
    %167 = vector.broadcast %cst_62 : f32 to vector<8x128xf32>
    %168 = arith.addf %167, %166 : vector<8x128xf32>
    %169 = arith.divf %167, %168 : vector<8x128xf32>
    %170 = vector.extract_strided_slice %145 {offsets = [0, 128], sizes = [8, 128], strides = [1, 1]} : vector<8x384xbf16> to vector<8x128xbf16>
    %171 = vector.extract_strided_slice %160 {offsets = [0, 128], sizes = [8, 128], strides = [1, 1]} : vector<8x384xf32> to vector<8x128xf32>
    %172 = arith.extf %170 : vector<8x128xbf16> to vector<8x128xf32>
    %173 = arith.addf %172, %171 : vector<8x128xf32>
    %174 = arith.negf %173 : vector<8x128xf32>
    %175 = math.exp %174 : vector<8x128xf32>
    %cst_63 = arith.constant 1.000000e+00 : f32
    %176 = vector.broadcast %cst_63 : f32 to vector<8x128xf32>
    %177 = arith.addf %176, %175 : vector<8x128xf32>
    %178 = arith.divf %176, %177 : vector<8x128xf32>
    %179 = vector.extract_strided_slice %145 {offsets = [0, 256], sizes = [8, 128], strides = [1, 1]} : vector<8x384xbf16> to vector<8x128xbf16>
    %180 = vector.extract_strided_slice %160 {offsets = [0, 256], sizes = [8, 128], strides = [1, 1]} : vector<8x384xf32> to vector<8x128xf32>
    %181 = vector.broadcast %25 : vector<1x128xf32> to vector<8x128xf32>
    %182 = arith.addf %180, %181 : vector<8x128xf32>
    %183 = arith.mulf %169, %182 : vector<8x128xf32>
    %184 = arith.extf %179 : vector<8x128xbf16> to vector<8x128xf32>
    %185 = arith.addf %184, %183 : vector<8x128xf32>
    %186 = math.tanh %185 : vector<8x128xf32>
    %cst_64 = arith.constant 1.000000e+00 : f32
    %187 = vector.broadcast %cst_64 : f32 to vector<8x128xf32>
    %188 = arith.subf %187, %178 : vector<8x128xf32>
    %189 = arith.mulf %188, %186 : vector<8x128xf32>
    %190 = arith.mulf %178, %134 : vector<8x128xf32>
    %191 = arith.addf %189, %190 : vector<8x128xf32>
    %192 = arith.truncf %141 : vector<8x128xf32> to vector<8x128xbf16>
    %cst_65 = arith.constant dense<0.000000e+00> : vector<8x384xf32>
    %193 = tpu.matmul %192, %24, %cst_65 {dimension_numbers = #tpu.dot_dimension_numbers<[1], [0], [0], [1], [0, 0, 1, 1], [], []>} : vector<8x128xbf16>, vector<128x384xbf16>, vector<8x384xf32> -> vector<8x384xf32>
    %194 = vector.extract_strided_slice %148 {offsets = [0, 0], sizes = [8, 128], strides = [1, 1]} : vector<8x384xbf16> to vector<8x128xbf16>
    %195 = vector.extract_strided_slice %193 {offsets = [0, 0], sizes = [8, 128], strides = [1, 1]} : vector<8x384xf32> to vector<8x128xf32>
    %196 = arith.extf %194 : vector<8x128xbf16> to vector<8x128xf32>
    %197 = arith.addf %196, %195 : vector<8x128xf32>
    %198 = arith.negf %197 : vector<8x128xf32>
    %199 = math.exp %198 : vector<8x128xf32>
    %cst_66 = arith.constant 1.000000e+00 : f32
    %200 = vector.broadcast %cst_66 : f32 to vector<8x128xf32>
    %201 = arith.addf %200, %199 : vector<8x128xf32>
    %202 = arith.divf %200, %201 : vector<8x128xf32>
    %203 = vector.extract_strided_slice %148 {offsets = [0, 128], sizes = [8, 128], strides = [1, 1]} : vector<8x384xbf16> to vector<8x128xbf16>
    %204 = vector.extract_strided_slice %193 {offsets = [0, 128], sizes = [8, 128], strides = [1, 1]} : vector<8x384xf32> to vector<8x128xf32>
    %205 = arith.extf %203 : vector<8x128xbf16> to vector<8x128xf32>
    %206 = arith.addf %205, %204 : vector<8x128xf32>
    %207 = arith.negf %206 : vector<8x128xf32>
    %208 = math.exp %207 : vector<8x128xf32>
    %cst_67 = arith.constant 1.000000e+00 : f32
    %209 = vector.broadcast %cst_67 : f32 to vector<8x128xf32>
    %210 = arith.addf %209, %208 : vector<8x128xf32>
    %211 = arith.divf %209, %210 : vector<8x128xf32>
    %212 = vector.extract_strided_slice %148 {offsets = [0, 256], sizes = [8, 128], strides = [1, 1]} : vector<8x384xbf16> to vector<8x128xbf16>
    %213 = vector.extract_strided_slice %193 {offsets = [0, 256], sizes = [8, 128], strides = [1, 1]} : vector<8x384xf32> to vector<8x128xf32>
    %214 = vector.broadcast %26 : vector<1x128xf32> to vector<8x128xf32>
    %215 = arith.addf %213, %214 : vector<8x128xf32>
    %216 = arith.mulf %202, %215 : vector<8x128xf32>
    %217 = arith.extf %212 : vector<8x128xbf16> to vector<8x128xf32>
    %218 = arith.addf %217, %216 : vector<8x128xf32>
    %219 = math.tanh %218 : vector<8x128xf32>
    %cst_68 = arith.constant 1.000000e+00 : f32
    %220 = vector.broadcast %cst_68 : f32 to vector<8x128xf32>
    %221 = arith.subf %220, %211 : vector<8x128xf32>
    %222 = arith.mulf %221, %219 : vector<8x128xf32>
    %223 = arith.mulf %211, %141 : vector<8x128xf32>
    %224 = arith.addf %222, %223 : vector<8x128xf32>
    %225 = vector.broadcast %153 : vector<8x1xf32> to vector<8x128xf32>
    %226 = arith.mulf %225, %191 : vector<8x128xf32>
    %227 = arith.index_cast %c1_i32_55 : i32 to index
    %c0_69 = arith.constant 0 : index
    %c0_70 = arith.constant 0 : index
    %228 = vector.load %arg13[%227, %c0_69, %c0_70] : memref<4x8x128xf32, #tpu.memory_space<vmem>>, vector<1x8x128xf32>
    %229 = vector.shape_cast %228 : vector<1x8x128xf32> to vector<8x128xf32>
    %230 = vector.shape_cast %226 : vector<8x128xf32> to vector<1x8x128xf32>
    tpu.vector_store %arg13[%227, %c0_69, %c0_70], %230 {strides = array<i32>} : memref<4x8x128xf32, #tpu.memory_space<vmem>>, vector<1x8x128xf32>,
    %231 = vector.broadcast %158 : vector<8x1xf32> to vector<8x128xf32>
    %232 = arith.mulf %231, %224 : vector<8x128xf32>
    %233 = arith.index_cast %142 : i32 to index
    %c0_71 = arith.constant 0 : index
    %c0_72 = arith.constant 0 : index
    %234 = vector.load %arg14[%233, %c0_71, %c0_72] : memref<4x8x128xf32, #tpu.memory_space<vmem>>, vector<1x8x128xf32>
    %235 = vector.shape_cast %234 : vector<1x8x128xf32> to vector<8x128xf32>
    %236 = vector.shape_cast %232 : vector<8x128xf32> to vector<1x8x128xf32>
    tpu.vector_store %arg14[%233, %c0_71, %c0_72], %236 {strides = array<i32>} : memref<4x8x128xf32, #tpu.memory_space<vmem>>, vector<1x8x128xf32>,
    %237 = vector.broadcast %153 : vector<8x1xf32> to vector<8x128xf32>
    %238 = arith.mulf %237, %191 : vector<8x128xf32>
    %cst_73 = arith.constant 1.000000e+00 : f32
    %239 = vector.broadcast %cst_73 : f32 to vector<8x1xf32>
    %240 = arith.subf %239, %153 : vector<8x1xf32>
    %241 = vector.broadcast %240 : vector<8x1xf32> to vector<8x128xf32>
    %242 = arith.mulf %241, %134 : vector<8x128xf32>
    %243 = arith.addf %238, %242 : vector<8x128xf32>
    %244 = vector.broadcast %158 : vector<8x1xf32> to vector<8x128xf32>
    %245 = arith.mulf %244, %224 : vector<8x128xf32>
    %cst_74 = arith.constant 1.000000e+00 : f32
    %246 = vector.broadcast %cst_74 : f32 to vector<8x1xf32>
    %247 = arith.subf %246, %158 : vector<8x1xf32>
    %248 = vector.broadcast %247 : vector<8x1xf32> to vector<8x128xf32>
    %249 = arith.mulf %248, %141 : vector<8x128xf32>
    %250 = arith.addf %245, %249 : vector<8x128xf32>
    %c2_i32 = arith.constant 2 : i32
    %c3_i32_75 = arith.constant 3 : i32
    %251 = arith.subi %c3_i32_75, %c2_i32 : i32
    %252 = arith.index_cast %c2_i32 : i32 to index
    %c0_76 = arith.constant 0 : index
    %c0_77 = arith.constant 0 : index
    %253 = vector.load %arg16[%252, %c0_76, %c0_77] : memref<4x8x384xbf16, #tpu.memory_space<vmem>>, vector<1x8x384xbf16>
    %254 = vector.shape_cast %253 : vector<1x8x384xbf16> to vector<8x384xbf16>
    %255 = arith.index_cast %251 : i32 to index
    %c0_78 = arith.constant 0 : index
    %c0_79 = arith.constant 0 : index
    %256 = vector.load %arg17[%255, %c0_78, %c0_79] : memref<4x8x384xbf16, #tpu.memory_space<vmem>>, vector<1x8x384xbf16>
    %257 = vector.shape_cast %256 : vector<1x8x384xbf16> to vector<8x384xbf16>
    %258 = arith.addi %28, %c2_i32 : i32
    %259 = vector.broadcast %258 : i32 to vector<8x1xi32>
    %260 = arith.cmpi slt, %259, %27 : vector<8x1xi32>
    %261 = arith.extui %260 : vector<8x1xi1> to vector<8x1xi32>
    %262 = arith.sitofp %261 : vector<8x1xi32> to vector<8x1xf32>
    %263 = arith.addi %30, %251 : i32
    %264 = vector.broadcast %263 : i32 to vector<8x1xi32>
    %265 = arith.cmpi slt, %264, %27 : vector<8x1xi32>
    %266 = arith.extui %265 : vector<8x1xi1> to vector<8x1xi32>
    %267 = arith.sitofp %266 : vector<8x1xi32> to vector<8x1xf32>
    %268 = arith.truncf %243 : vector<8x128xf32> to vector<8x128xbf16>
    %cst_80 = arith.constant dense<0.000000e+00> : vector<8x384xf32>
    %269 = tpu.matmul %268, %23, %cst_80 {dimension_numbers = #tpu.dot_dimension_numbers<[1], [0], [0], [1], [0, 0, 1, 1], [], []>} : vector<8x128xbf16>, vector<128x384xbf16>, vector<8x384xf32> -> vector<8x384xf32>
    %270 = vector.extract_strided_slice %254 {offsets = [0, 0], sizes = [8, 128], strides = [1, 1]} : vector<8x384xbf16> to vector<8x128xbf16>
    %271 = vector.extract_strided_slice %269 {offsets = [0, 0], sizes = [8, 128], strides = [1, 1]} : vector<8x384xf32> to vector<8x128xf32>
    %272 = arith.extf %270 : vector<8x128xbf16> to vector<8x128xf32>
    %273 = arith.addf %272, %271 : vector<8x128xf32>
    %274 = arith.negf %273 : vector<8x128xf32>
    %275 = math.exp %274 : vector<8x128xf32>
    %cst_81 = arith.constant 1.000000e+00 : f32
    %276 = vector.broadcast %cst_81 : f32 to vector<8x128xf32>
    %277 = arith.addf %276, %275 : vector<8x128xf32>
    %278 = arith.divf %276, %277 : vector<8x128xf32>
    %279 = vector.extract_strided_slice %254 {offsets = [0, 128], sizes = [8, 128], strides = [1, 1]} : vector<8x384xbf16> to vector<8x128xbf16>
    %280 = vector.extract_strided_slice %269 {offsets = [0, 128], sizes = [8, 128], strides = [1, 1]} : vector<8x384xf32> to vector<8x128xf32>
    %281 = arith.extf %279 : vector<8x128xbf16> to vector<8x128xf32>
    %282 = arith.addf %281, %280 : vector<8x128xf32>
    %283 = arith.negf %282 : vector<8x128xf32>
    %284 = math.exp %283 : vector<8x128xf32>
    %cst_82 = arith.constant 1.000000e+00 : f32
    %285 = vector.broadcast %cst_82 : f32 to vector<8x128xf32>
    %286 = arith.addf %285, %284 : vector<8x128xf32>
    %287 = arith.divf %285, %286 : vector<8x128xf32>
    %288 = vector.extract_strided_slice %254 {offsets = [0, 256], sizes = [8, 128], strides = [1, 1]} : vector<8x384xbf16> to vector<8x128xbf16>
    %289 = vector.extract_strided_slice %269 {offsets = [0, 256], sizes = [8, 128], strides = [1, 1]} : vector<8x384xf32> to vector<8x128xf32>
    %290 = vector.broadcast %25 : vector<1x128xf32> to vector<8x128xf32>
    %291 = arith.addf %289, %290 : vector<8x128xf32>
    %292 = arith.mulf %278, %291 : vector<8x128xf32>
    %293 = arith.extf %288 : vector<8x128xbf16> to vector<8x128xf32>
    %294 = arith.addf %293, %292 : vector<8x128xf32>
    %295 = math.tanh %294 : vector<8x128xf32>
    %cst_83 = arith.constant 1.000000e+00 : f32
    %296 = vector.broadcast %cst_83 : f32 to vector<8x128xf32>
    %297 = arith.subf %296, %287 : vector<8x128xf32>
    %298 = arith.mulf %297, %295 : vector<8x128xf32>
    %299 = arith.mulf %287, %243 : vector<8x128xf32>
    %300 = arith.addf %298, %299 : vector<8x128xf32>
    %301 = arith.truncf %250 : vector<8x128xf32> to vector<8x128xbf16>
    %cst_84 = arith.constant dense<0.000000e+00> : vector<8x384xf32>
    %302 = tpu.matmul %301, %24, %cst_84 {dimension_numbers = #tpu.dot_dimension_numbers<[1], [0], [0], [1], [0, 0, 1, 1], [], []>} : vector<8x128xbf16>, vector<128x384xbf16>, vector<8x384xf32> -> vector<8x384xf32>
    %303 = vector.extract_strided_slice %257 {offsets = [0, 0], sizes = [8, 128], strides = [1, 1]} : vector<8x384xbf16> to vector<8x128xbf16>
    %304 = vector.extract_strided_slice %302 {offsets = [0, 0], sizes = [8, 128], strides = [1, 1]} : vector<8x384xf32> to vector<8x128xf32>
    %305 = arith.extf %303 : vector<8x128xbf16> to vector<8x128xf32>
    %306 = arith.addf %305, %304 : vector<8x128xf32>
    %307 = arith.negf %306 : vector<8x128xf32>
    %308 = math.exp %307 : vector<8x128xf32>
    %cst_85 = arith.constant 1.000000e+00 : f32
    %309 = vector.broadcast %cst_85 : f32 to vector<8x128xf32>
    %310 = arith.addf %309, %308 : vector<8x128xf32>
    %311 = arith.divf %309, %310 : vector<8x128xf32>
    %312 = vector.extract_strided_slice %257 {offsets = [0, 128], sizes = [8, 128], strides = [1, 1]} : vector<8x384xbf16> to vector<8x128xbf16>
    %313 = vector.extract_strided_slice %302 {offsets = [0, 128], sizes = [8, 128], strides = [1, 1]} : vector<8x384xf32> to vector<8x128xf32>
    %314 = arith.extf %312 : vector<8x128xbf16> to vector<8x128xf32>
    %315 = arith.addf %314, %313 : vector<8x128xf32>
    %316 = arith.negf %315 : vector<8x128xf32>
    %317 = math.exp %316 : vector<8x128xf32>
    %cst_86 = arith.constant 1.000000e+00 : f32
    %318 = vector.broadcast %cst_86 : f32 to vector<8x128xf32>
    %319 = arith.addf %318, %317 : vector<8x128xf32>
    %320 = arith.divf %318, %319 : vector<8x128xf32>
    %321 = vector.extract_strided_slice %257 {offsets = [0, 256], sizes = [8, 128], strides = [1, 1]} : vector<8x384xbf16> to vector<8x128xbf16>
    %322 = vector.extract_strided_slice %302 {offsets = [0, 256], sizes = [8, 128], strides = [1, 1]} : vector<8x384xf32> to vector<8x128xf32>
    %323 = vector.broadcast %26 : vector<1x128xf32> to vector<8x128xf32>
    %324 = arith.addf %322, %323 : vector<8x128xf32>
    %325 = arith.mulf %311, %324 : vector<8x128xf32>
    %326 = arith.extf %321 : vector<8x128xbf16> to vector<8x128xf32>
    %327 = arith.addf %326, %325 : vector<8x128xf32>
    %328 = math.tanh %327 : vector<8x128xf32>
    %cst_87 = arith.constant 1.000000e+00 : f32
    %329 = vector.broadcast %cst_87 : f32 to vector<8x128xf32>
    %330 = arith.subf %329, %320 : vector<8x128xf32>
    %331 = arith.mulf %330, %328 : vector<8x128xf32>
    %332 = arith.mulf %320, %250 : vector<8x128xf32>
    %333 = arith.addf %331, %332 : vector<8x128xf32>
    %334 = vector.broadcast %262 : vector<8x1xf32> to vector<8x128xf32>
    %335 = arith.mulf %334, %300 : vector<8x128xf32>
    %336 = arith.index_cast %c2_i32 : i32 to index
    %c0_88 = arith.constant 0 : index
    %c0_89 = arith.constant 0 : index
    %337 = vector.load %arg13[%336, %c0_88, %c0_89] : memref<4x8x128xf32, #tpu.memory_space<vmem>>, vector<1x8x128xf32>
    %338 = vector.shape_cast %337 : vector<1x8x128xf32> to vector<8x128xf32>
    %339 = vector.shape_cast %335 : vector<8x128xf32> to vector<1x8x128xf32>
    tpu.vector_store %arg13[%336, %c0_88, %c0_89], %339 {strides = array<i32>} : memref<4x8x128xf32, #tpu.memory_space<vmem>>, vector<1x8x128xf32>,
    %340 = vector.broadcast %267 : vector<8x1xf32> to vector<8x128xf32>
    %341 = arith.mulf %340, %333 : vector<8x128xf32>
    %342 = arith.index_cast %251 : i32 to index
    %c0_90 = arith.constant 0 : index
    %c0_91 = arith.constant 0 : index
    %343 = vector.load %arg14[%342, %c0_90, %c0_91] : memref<4x8x128xf32, #tpu.memory_space<vmem>>, vector<1x8x128xf32>
    %344 = vector.shape_cast %343 : vector<1x8x128xf32> to vector<8x128xf32>
    %345 = vector.shape_cast %341 : vector<8x128xf32> to vector<1x8x128xf32>
    tpu.vector_store %arg14[%342, %c0_90, %c0_91], %345 {strides = array<i32>} : memref<4x8x128xf32, #tpu.memory_space<vmem>>, vector<1x8x128xf32>,
    %346 = vector.broadcast %262 : vector<8x1xf32> to vector<8x128xf32>
    %347 = arith.mulf %346, %300 : vector<8x128xf32>
    %cst_92 = arith.constant 1.000000e+00 : f32
    %348 = vector.broadcast %cst_92 : f32 to vector<8x1xf32>
    %349 = arith.subf %348, %262 : vector<8x1xf32>
    %350 = vector.broadcast %349 : vector<8x1xf32> to vector<8x128xf32>
    %351 = arith.mulf %350, %243 : vector<8x128xf32>
    %352 = arith.addf %347, %351 : vector<8x128xf32>
    %353 = vector.broadcast %267 : vector<8x1xf32> to vector<8x128xf32>
    %354 = arith.mulf %353, %333 : vector<8x128xf32>
    %cst_93 = arith.constant 1.000000e+00 : f32
    %355 = vector.broadcast %cst_93 : f32 to vector<8x1xf32>
    %356 = arith.subf %355, %267 : vector<8x1xf32>
    %357 = vector.broadcast %356 : vector<8x1xf32> to vector<8x128xf32>
    %358 = arith.mulf %357, %250 : vector<8x128xf32>
    %359 = arith.addf %354, %358 : vector<8x128xf32>
    %c3_i32_94 = arith.constant 3 : i32
    %c3_i32_95 = arith.constant 3 : i32
    %360 = arith.subi %c3_i32_95, %c3_i32_94 : i32
    %361 = arith.index_cast %c3_i32_94 : i32 to index
    %c0_96 = arith.constant 0 : index
    %c0_97 = arith.constant 0 : index
    %362 = vector.load %arg16[%361, %c0_96, %c0_97] : memref<4x8x384xbf16, #tpu.memory_space<vmem>>, vector<1x8x384xbf16>
    %363 = vector.shape_cast %362 : vector<1x8x384xbf16> to vector<8x384xbf16>
    %364 = arith.index_cast %360 : i32 to index
    %c0_98 = arith.constant 0 : index
    %c0_99 = arith.constant 0 : index
    %365 = vector.load %arg17[%364, %c0_98, %c0_99] : memref<4x8x384xbf16, #tpu.memory_space<vmem>>, vector<1x8x384xbf16>
    %366 = vector.shape_cast %365 : vector<1x8x384xbf16> to vector<8x384xbf16>
    %367 = arith.addi %28, %c3_i32_94 : i32
    %368 = vector.broadcast %367 : i32 to vector<8x1xi32>
    %369 = arith.cmpi slt, %368, %27 : vector<8x1xi32>
    %370 = arith.extui %369 : vector<8x1xi1> to vector<8x1xi32>
    %371 = arith.sitofp %370 : vector<8x1xi32> to vector<8x1xf32>
    %372 = arith.addi %30, %360 : i32
    %373 = vector.broadcast %372 : i32 to vector<8x1xi32>
    %374 = arith.cmpi slt, %373, %27 : vector<8x1xi32>
    %375 = arith.extui %374 : vector<8x1xi1> to vector<8x1xi32>
    %376 = arith.sitofp %375 : vector<8x1xi32> to vector<8x1xf32>
    %377 = arith.truncf %352 : vector<8x128xf32> to vector<8x128xbf16>
    %cst_100 = arith.constant dense<0.000000e+00> : vector<8x384xf32>
    %378 = tpu.matmul %377, %23, %cst_100 {dimension_numbers = #tpu.dot_dimension_numbers<[1], [0], [0], [1], [0, 0, 1, 1], [], []>} : vector<8x128xbf16>, vector<128x384xbf16>, vector<8x384xf32> -> vector<8x384xf32>
    %379 = vector.extract_strided_slice %363 {offsets = [0, 0], sizes = [8, 128], strides = [1, 1]} : vector<8x384xbf16> to vector<8x128xbf16>
    %380 = vector.extract_strided_slice %378 {offsets = [0, 0], sizes = [8, 128], strides = [1, 1]} : vector<8x384xf32> to vector<8x128xf32>
    %381 = arith.extf %379 : vector<8x128xbf16> to vector<8x128xf32>
    %382 = arith.addf %381, %380 : vector<8x128xf32>
    %383 = arith.negf %382 : vector<8x128xf32>
    %384 = math.exp %383 : vector<8x128xf32>
    %cst_101 = arith.constant 1.000000e+00 : f32
    %385 = vector.broadcast %cst_101 : f32 to vector<8x128xf32>
    %386 = arith.addf %385, %384 : vector<8x128xf32>
    %387 = arith.divf %385, %386 : vector<8x128xf32>
    %388 = vector.extract_strided_slice %363 {offsets = [0, 128], sizes = [8, 128], strides = [1, 1]} : vector<8x384xbf16> to vector<8x128xbf16>
    %389 = vector.extract_strided_slice %378 {offsets = [0, 128], sizes = [8, 128], strides = [1, 1]} : vector<8x384xf32> to vector<8x128xf32>
    %390 = arith.extf %388 : vector<8x128xbf16> to vector<8x128xf32>
    %391 = arith.addf %390, %389 : vector<8x128xf32>
    %392 = arith.negf %391 : vector<8x128xf32>
    %393 = math.exp %392 : vector<8x128xf32>
    %cst_102 = arith.constant 1.000000e+00 : f32
    %394 = vector.broadcast %cst_102 : f32 to vector<8x128xf32>
    %395 = arith.addf %394, %393 : vector<8x128xf32>
    %396 = arith.divf %394, %395 : vector<8x128xf32>
    %397 = vector.extract_strided_slice %363 {offsets = [0, 256], sizes = [8, 128], strides = [1, 1]} : vector<8x384xbf16> to vector<8x128xbf16>
    %398 = vector.extract_strided_slice %378 {offsets = [0, 256], sizes = [8, 128], strides = [1, 1]} : vector<8x384xf32> to vector<8x128xf32>
    %399 = vector.broadcast %25 : vector<1x128xf32> to vector<8x128xf32>
    %400 = arith.addf %398, %399 : vector<8x128xf32>
    %401 = arith.mulf %387, %400 : vector<8x128xf32>
    %402 = arith.extf %397 : vector<8x128xbf16> to vector<8x128xf32>
    %403 = arith.addf %402, %401 : vector<8x128xf32>
    %404 = math.tanh %403 : vector<8x128xf32>
    %cst_103 = arith.constant 1.000000e+00 : f32
    %405 = vector.broadcast %cst_103 : f32 to vector<8x128xf32>
    %406 = arith.subf %405, %396 : vector<8x128xf32>
    %407 = arith.mulf %406, %404 : vector<8x128xf32>
    %408 = arith.mulf %396, %352 : vector<8x128xf32>
    %409 = arith.addf %407, %408 : vector<8x128xf32>
    %410 = arith.truncf %359 : vector<8x128xf32> to vector<8x128xbf16>
    %cst_104 = arith.constant dense<0.000000e+00> : vector<8x384xf32>
    %411 = tpu.matmul %410, %24, %cst_104 {dimension_numbers = #tpu.dot_dimension_numbers<[1], [0], [0], [1], [0, 0, 1, 1], [], []>} : vector<8x128xbf16>, vector<128x384xbf16>, vector<8x384xf32> -> vector<8x384xf32>
    %412 = vector.extract_strided_slice %366 {offsets = [0, 0], sizes = [8, 128], strides = [1, 1]} : vector<8x384xbf16> to vector<8x128xbf16>
    %413 = vector.extract_strided_slice %411 {offsets = [0, 0], sizes = [8, 128], strides = [1, 1]} : vector<8x384xf32> to vector<8x128xf32>
    %414 = arith.extf %412 : vector<8x128xbf16> to vector<8x128xf32>
    %415 = arith.addf %414, %413 : vector<8x128xf32>
    %416 = arith.negf %415 : vector<8x128xf32>
    %417 = math.exp %416 : vector<8x128xf32>
    %cst_105 = arith.constant 1.000000e+00 : f32
    %418 = vector.broadcast %cst_105 : f32 to vector<8x128xf32>
    %419 = arith.addf %418, %417 : vector<8x128xf32>
    %420 = arith.divf %418, %419 : vector<8x128xf32>
    %421 = vector.extract_strided_slice %366 {offsets = [0, 128], sizes = [8, 128], strides = [1, 1]} : vector<8x384xbf16> to vector<8x128xbf16>
    %422 = vector.extract_strided_slice %411 {offsets = [0, 128], sizes = [8, 128], strides = [1, 1]} : vector<8x384xf32> to vector<8x128xf32>
    %423 = arith.extf %421 : vector<8x128xbf16> to vector<8x128xf32>
    %424 = arith.addf %423, %422 : vector<8x128xf32>
    %425 = arith.negf %424 : vector<8x128xf32>
    %426 = math.exp %425 : vector<8x128xf32>
    %cst_106 = arith.constant 1.000000e+00 : f32
    %427 = vector.broadcast %cst_106 : f32 to vector<8x128xf32>
    %428 = arith.addf %427, %426 : vector<8x128xf32>
    %429 = arith.divf %427, %428 : vector<8x128xf32>
    %430 = vector.extract_strided_slice %366 {offsets = [0, 256], sizes = [8, 128], strides = [1, 1]} : vector<8x384xbf16> to vector<8x128xbf16>
    %431 = vector.extract_strided_slice %411 {offsets = [0, 256], sizes = [8, 128], strides = [1, 1]} : vector<8x384xf32> to vector<8x128xf32>
    %432 = vector.broadcast %26 : vector<1x128xf32> to vector<8x128xf32>
    %433 = arith.addf %431, %432 : vector<8x128xf32>
    %434 = arith.mulf %420, %433 : vector<8x128xf32>
    %435 = arith.extf %430 : vector<8x128xbf16> to vector<8x128xf32>
    %436 = arith.addf %435, %434 : vector<8x128xf32>
    %437 = math.tanh %436 : vector<8x128xf32>
    %cst_107 = arith.constant 1.000000e+00 : f32
    %438 = vector.broadcast %cst_107 : f32 to vector<8x128xf32>
    %439 = arith.subf %438, %429 : vector<8x128xf32>
    %440 = arith.mulf %439, %437 : vector<8x128xf32>
    %441 = arith.mulf %429, %359 : vector<8x128xf32>
    %442 = arith.addf %440, %441 : vector<8x128xf32>
    %443 = vector.broadcast %371 : vector<8x1xf32> to vector<8x128xf32>
    %444 = arith.mulf %443, %409 : vector<8x128xf32>
    %445 = arith.index_cast %c3_i32_94 : i32 to index
    %c0_108 = arith.constant 0 : index
    %c0_109 = arith.constant 0 : index
    %446 = vector.load %arg13[%445, %c0_108, %c0_109] : memref<4x8x128xf32, #tpu.memory_space<vmem>>, vector<1x8x128xf32>
    %447 = vector.shape_cast %446 : vector<1x8x128xf32> to vector<8x128xf32>
    %448 = vector.shape_cast %444 : vector<8x128xf32> to vector<1x8x128xf32>
    tpu.vector_store %arg13[%445, %c0_108, %c0_109], %448 {strides = array<i32>} : memref<4x8x128xf32, #tpu.memory_space<vmem>>, vector<1x8x128xf32>,
    %449 = vector.broadcast %376 : vector<8x1xf32> to vector<8x128xf32>
    %450 = arith.mulf %449, %442 : vector<8x128xf32>
    %451 = arith.index_cast %360 : i32 to index
    %c0_110 = arith.constant 0 : index
    %c0_111 = arith.constant 0 : index
    %452 = vector.load %arg14[%451, %c0_110, %c0_111] : memref<4x8x128xf32, #tpu.memory_space<vmem>>, vector<1x8x128xf32>
    %453 = vector.shape_cast %452 : vector<1x8x128xf32> to vector<8x128xf32>
    %454 = vector.shape_cast %450 : vector<8x128xf32> to vector<1x8x128xf32>
    tpu.vector_store %arg14[%451, %c0_110, %c0_111], %454 {strides = array<i32>} : memref<4x8x128xf32, #tpu.memory_space<vmem>>, vector<1x8x128xf32>,
    %455 = vector.broadcast %371 : vector<8x1xf32> to vector<8x128xf32>
    %456 = arith.mulf %455, %409 : vector<8x128xf32>
    %cst_112 = arith.constant 1.000000e+00 : f32
    %457 = vector.broadcast %cst_112 : f32 to vector<8x1xf32>
    %458 = arith.subf %457, %371 : vector<8x1xf32>
    %459 = vector.broadcast %458 : vector<8x1xf32> to vector<8x128xf32>
    %460 = arith.mulf %459, %352 : vector<8x128xf32>
    %461 = arith.addf %456, %460 : vector<8x128xf32>
    %462 = vector.broadcast %376 : vector<8x1xf32> to vector<8x128xf32>
    %463 = arith.mulf %462, %442 : vector<8x128xf32>
    %cst_113 = arith.constant 1.000000e+00 : f32
    %464 = vector.broadcast %cst_113 : f32 to vector<8x1xf32>
    %465 = arith.subf %464, %376 : vector<8x1xf32>
    %466 = vector.broadcast %465 : vector<8x1xf32> to vector<8x128xf32>
    %467 = arith.mulf %466, %359 : vector<8x128xf32>
    %468 = arith.addf %463, %467 : vector<8x128xf32>
    %c4_i32_114 = arith.constant 4 : i32
    %c0_115 = arith.constant 0 : index
    %c0_116 = arith.constant 0 : index
    %469 = vector.load %arg18[%c0_115, %c0_116] : memref<8x128xf32, #tpu.memory_space<vmem>>, vector<8x128xf32>
    tpu.vector_store %arg18[%c0_115, %c0_116], %461 {strides = array<i32>} : memref<8x128xf32, #tpu.memory_space<vmem>>, vector<8x128xf32>,
    %c0_117 = arith.constant 0 : index
    %c0_118 = arith.constant 0 : index
    %470 = vector.load %arg19[%c0_117, %c0_118] : memref<8x128xf32, #tpu.memory_space<vmem>>, vector<8x128xf32>
    tpu.vector_store %arg19[%c0_117, %c0_118], %468 {strides = array<i32>} : memref<8x128xf32, #tpu.memory_space<vmem>>, vector<8x128xf32>,
    %c1_i32_119 = arith.constant 1 : i32
    %471 = arith.cmpi eq, %arg0, %c1_i32_119 : i32
    %472 = arith.extui %471 : i1 to i32
    %c0_i32_120 = arith.constant 0 : i32
    %473 = arith.cmpi ne, %472, %c0_i32_120 : i32
    scf.if %473 {
      %c0_121 = arith.constant 0 : index
      %c0_122 = arith.constant 0 : index
      %c0_123 = arith.constant 0 : index
      %474 = vector.load %arg15[%c0_121, %c0_122, %c0_123] : memref<2x8x128xf32, #tpu.memory_space<vmem>>, vector<1x8x128xf32>
      %475 = vector.shape_cast %474 : vector<1x8x128xf32> to vector<8x128xf32>
      %476 = vector.shape_cast %461 : vector<8x128xf32> to vector<1x8x128xf32>
      tpu.vector_store %arg15[%c0_121, %c0_122, %c0_123], %476 {strides = array<i32>} : memref<2x8x128xf32, #tpu.memory_space<vmem>>, vector<1x8x128xf32>,
      %c1 = arith.constant 1 : index
      %c0_124 = arith.constant 0 : index
      %c0_125 = arith.constant 0 : index
      %477 = vector.load %arg15[%c1, %c0_124, %c0_125] : memref<2x8x128xf32, #tpu.memory_space<vmem>>, vector<1x8x128xf32>
      %478 = vector.shape_cast %477 : vector<1x8x128xf32> to vector<8x128xf32>
      %479 = vector.shape_cast %468 : vector<8x128xf32> to vector<1x8x128xf32>
      tpu.vector_store %arg15[%c1, %c0_124, %c0_125], %479 {strides = array<i32>} : memref<2x8x128xf32, #tpu.memory_space<vmem>>, vector<1x8x128xf32>,
    } else {
    }
    return
  }
  func.func @transform_0(%arg0: i32) -> (i32, i32, i32) {
    %c0_i32 = arith.constant 0 : i32
    %c0_i32_0 = arith.constant 0 : i32
    %c0_i32_1 = arith.constant 0 : i32
    return %arg0, %c0_i32, %c0_i32_0 : i32, i32, i32
  }
  func.func @transform_1(%arg0: i32) -> (i32, i32, i32) {
    %c1_i32 = arith.constant 1 : i32
    %0 = arith.subi %c1_i32, %arg0 : i32
    %c0_i32 = arith.constant 0 : i32
    %c0_i32_0 = arith.constant 0 : i32
    %c0_i32_1 = arith.constant 0 : i32
    return %0, %c0_i32, %c0_i32_0 : i32, i32, i32
  }
  func.func @transform_2(%arg0: i32) -> (i32, i32) {
    %c0_i32 = arith.constant 0 : i32
    %c0_i32_0 = arith.constant 0 : i32
    %c0_i32_1 = arith.constant 0 : i32
    return %c0_i32, %c0_i32_0 : i32, i32
  }
  func.func @transform_3(%arg0: i32) -> (i32, i32) {
    %c0_i32 = arith.constant 0 : i32
    %c0_i32_0 = arith.constant 0 : i32
    %c0_i32_1 = arith.constant 0 : i32
    return %c0_i32, %c0_i32_0 : i32, i32
  }
  func.func @transform_4(%arg0: i32) -> (i32, i32) {
    %c0_i32 = arith.constant 0 : i32
    %c0_i32_0 = arith.constant 0 : i32
    %c0_i32_1 = arith.constant 0 : i32
    return %c0_i32, %c0_i32_0 : i32, i32
  }
  func.func @transform_5(%arg0: i32) -> (i32, i32) {
    %c0_i32 = arith.constant 0 : i32
    %c0_i32_0 = arith.constant 0 : i32
    %c0_i32_1 = arith.constant 0 : i32
    return %c0_i32, %c0_i32_0 : i32, i32
  }
  func.func @transform_6(%arg0: i32) -> (i32, i32) {
    %c0_i32 = arith.constant 0 : i32
    %c0_i32_0 = arith.constant 0 : i32
    %c0_i32_1 = arith.constant 0 : i32
    return %c0_i32, %c0_i32_0 : i32, i32
  }
  func.func @transform_7(%arg0: i32) -> (i32, i32) {
    %c0_i32 = arith.constant 0 : i32
    %c0_i32_0 = arith.constant 0 : i32
    %c0_i32_1 = arith.constant 0 : i32
    return %c0_i32, %c0_i32_0 : i32, i32
  }
  func.func @transform_8(%arg0: i32) -> (i32, i32) {
    %c0_i32 = arith.constant 0 : i32
    %c0_i32_0 = arith.constant 0 : i32
    %c0_i32_1 = arith.constant 0 : i32
    return %c0_i32, %c0_i32_0 : i32, i32
  }
  func.func @transform_9(%arg0: i32) -> (i32, i32) {
    %c0_i32 = arith.constant 0 : i32
    %c0_i32_0 = arith.constant 0 : i32
    %c0_i32_1 = arith.constant 0 : i32
    return %c0_i32, %c0_i32_0 : i32, i32
  }
  func.func @transform_10(%arg0: i32) -> (i32, i32) {
    %c0_i32 = arith.constant 0 : i32
    %c0_i32_0 = arith.constant 0 : i32
    %c0_i32_1 = arith.constant 0 : i32
    return %c0_i32, %c0_i32_0 : i32, i32
  }
  func.func @transform_11(%arg0: i32) -> (i32, i32, i32) {
    %c0_i32 = arith.constant 0 : i32
    %c0_i32_0 = arith.constant 0 : i32
    %c0_i32_1 = arith.constant 0 : i32
    %c0_i32_2 = arith.constant 0 : i32
    return %c0_i32, %c0_i32_0, %c0_i32_1 : i32, i32, i32
  }
  func.func @transform_12(%arg0: i32) -> (i32, i32, i32) {
    %c0_i32 = arith.constant 0 : i32
    %c0_i32_0 = arith.constant 0 : i32
    %c0_i32_1 = arith.constant 0 : i32
    return %arg0, %c0_i32, %c0_i32_0 : i32, i32, i32
  }
  func.func @transform_13(%arg0: i32) -> (i32, i32, i32) {
    %c1_i32 = arith.constant 1 : i32
    %0 = arith.subi %c1_i32, %arg0 : i32
    %c0_i32 = arith.constant 0 : i32
    %c0_i32_0 = arith.constant 0 : i32
    %c0_i32_1 = arith.constant 0 : i32
    return %0, %c0_i32, %c0_i32_0 : i32, i32, i32
  }
  func.func @transform_14(%arg0: i32) -> (i32, i32, i32) {
    %c0_i32 = arith.constant 0 : i32
    %c0_i32_0 = arith.constant 0 : i32
    %c0_i32_1 = arith.constant 0 : i32
    %c0_i32_2 = arith.constant 0 : i32
    return %c0_i32, %c0_i32_0, %c0_i32_1 : i32, i32, i32
  }
}

</mosaic_0001>

<llo_original>
// kernel: tpu_custom_call.1
$region0: #{tpu_custom_call.1}
  #allocation0 [shape = 'u32[]', space=smem, size = 0x4, offset = 0x4, fixed_abs, tag = 'smem constant byte address 0x4 - core index']
  #allocation1 [shape = 'u32[72,128]{1,0:T(1,128)}', space=vmem, size = 0x9000, scoped, tag = 'internal scratch']
  #allocation2 [shape = 'bf16[4,8,384]{2,1,0:T(8,128)(2,1)}', space=vmem, size = 0x6000, scoped, tag = 'scratch operand']
  #allocation3 [shape = 'bf16[4,8,384]{2,1,0:T(8,128)(2,1)}', space=vmem, size = 0x6000, scoped, tag = 'scratch operand']
  #allocation4 [shape = 'f32[8,128]{1,0:T(8,128)}', space=vmem, size = 0x1000, scoped, tag = 'scratch operand']
  #allocation5 [shape = 'f32[8,128]{1,0:T(8,128)}', space=vmem, size = 0x1000, scoped, tag = 'scratch operand']
  %s0 = inlined_call_operand.hbm [shape: bf16[8,8,128], index: 0, kind: input, shape index: {}]
  %s1 = inlined_call_operand.hbm [shape: bf16[8,8,128], index: 1, kind: input, shape index: {}]
  %s2 = inlined_call_operand.vmem [shape: s32[8,1], index: 2, kind: input, shape index: {}]
  %s3 = inlined_call_operand.hbm [shape: bf16[128,384], index: 3, kind: input, shape index: {}]
  %s4 = inlined_call_operand.hbm [shape: bf16[128,384], index: 4, kind: input, shape index: {}]
  %s5 = inlined_call_operand.vmem [shape: f32[1,384], index: 5, kind: input, shape index: {}]
  %s6 = inlined_call_operand.hbm [shape: f32[1,384], index: 6, kind: input, shape index: {}]
  %s7 = inlined_call_operand.hbm [shape: bf16[128,384], index: 7, kind: input, shape index: {}]
  %s8 = inlined_call_operand.hbm [shape: bf16[128,384], index: 8, kind: input, shape index: {}]
  %s9 = inlined_call_operand.hbm [shape: f32[1,128], index: 9, kind: input, shape index: {}]
  %s10 = inlined_call_operand.hbm [shape: f32[1,128], index: 10, kind: input, shape index: {}]
  %s11 = inlined_call_operand.vmem [shape: f32[2,8,128], index: 11, kind: input, shape index: {}]
  %s12 = inlined_call_operand.hbm [shape: f32[8,8,128], index: 12, kind: output, shape index: {0}]
  %s13 = inlined_call_operand.hbm [shape: f32[8,8,128], index: 13, kind: output, shape index: {1}]
  %s14 = inlined_call_operand.hbm [shape: f32[2,8,128], index: 14, kind: output, shape index: {2}]
  %15 = xla_tuple %s12, %s13, %s14
  %s16 = sld [smem:[#allocation0]]
  $region141: #{tpu_custom_call.1} parent=0
    _
  %s18 = ssub.s32 1, %s16
  %s19 = scalar_select 0, %s18, %s16
  $region1: #{tpu_custom_call.1} parent=0
    #allocation6 [shape = 'u8[16384]{0}', space=vmem, size = 0x4000, scoped, tag = 'input window, operand 0']
    #allocation7 [shape = 's32[2]{0}', space=sflag, size = 0x8, scoped, tag = 'scoped memory for tpu_custom_call.1']
    #allocation8 [shape = 's32[2]{0}', space=sflag, size = 0x8, scoped, tag = 'scoped memory for tpu_custom_call.1']
    #allocation9 [shape = 'u8[16384]{0}', space=vmem, size = 0x4000, scoped, tag = 'input window, operand 1']
    #allocation10 [shape = 's32[2]{0}', space=sflag, size = 0x8, scoped, tag = 'scoped memory for tpu_custom_call.1']
    #allocation11 [shape = 'u8[98304]{0}', space=vmem, size = 0x18000, scoped, tag = 'input window, operand 3, single buffered']
    #allocation12 [shape = 'u8[98304]{0}', space=vmem, size = 0x18000, scoped, tag = 'input window, operand 4, single buffered']
    #allocation13 [shape = 's32[1]{0}', space=sflag, size = 0x4, scoped, tag = 'scoped memory for tpu_custom_call.1']
    #allocation14 [shape = 'u8[1536]{0}', space=vmem, size = 0x800, scoped, tag = 'input window, operand 6, single buffered']
    #allocation15 [shape = 'u8[98304]{0}', space=vmem, size = 0x18000, scoped, tag = 'input window, operand 7, single buffered']
    #allocation16 [shape = 's32[1]{0}', space=sflag, size = 0x4, scoped, tag = 'scoped memory for tpu_custom_call.1']
    #allocation17 [shape = 'u8[98304]{0}', space=vmem, size = 0x18000, scoped, tag = 'input window, operand 8, single buffered']
    #allocation18 [shape = 'u8[512]{0}', space=vmem, size = 0x400, scoped, tag = 'input window, operand 9, single buffered']
    #allocation19 [shape = 's32[1]{0}', space=sflag, size = 0x4, scoped, tag = 'scoped memory for tpu_custom_call.1']
    #allocation20 [shape = 'u8[512]{0}', space=vmem, size = 0x400, scoped, tag = 'input window, operand 10, single buffered']
    #allocation21 [shape = 'u8[32768]{0}', space=vmem, size = 0x8000, scoped, tag = 'output window, operand 0']
    #allocation22 [shape = 'u8[32768]{0}', space=vmem, size = 0x8000, scoped, tag = 'output window, operand 1']
    #allocation23 [shape = 's32[2]{0}', space=sflag, size = 0x8, scoped, tag = 'scoped memory for tpu_custom_call.1']
    #allocation24 [shape = 'u8[8192]{0}', space=vmem, size = 0x2000, scoped, tag = 'output window, operand 2, single buffered']
    %20 = vsyncpa [#allocation7], 0
    %s21 = scalar_lea.sflag [#allocation7], 1
    %22 = vsyncpa %s21, 0
    %23 = vsyncpa [#allocation10], 0
    %s24 = scalar_lea.sflag [#allocation10], 1
    %25 = vsyncpa %s24, 0
    %26 = vsyncpa [#allocation13], 0
    %27 = vsyncpa [#allocation16], 0
    %28 = vsyncpa [#allocation19], 0
    %29 = vsyncpa [#allocation8], 0
    %s30 = scalar_lea.sflag [#allocation8], 1
    %31 = vsyncpa %s30, 0
    %32 = vsyncpa [#allocation23], 0
    %s33 = scalar_lea.sflag [#allocation23], 1
    %34 = vsyncpa %s33, 0
    loop: start=0, step=1, limit=4
    $region2: #{tpu_custom_call.1} parent=1 // loop_pre_header
      _
    $region3: #{tpu_custom_call.1} parent=1 // loop_header
      %s36 = sphi 0, %s40
      %p37 = scmp.ge.s32.totalorder %s36, 4
      %s46 = sphi 0, %s48
      %s49 = sphi 0, %s46
      %s50 = sphi 0, %s49
      %s66 = sphi 0, %s50
      %s74 = sphi 0, %s76
      %s77 = sphi 0, %s74
      %s78 = sphi 0, %s77
      %s94 = sphi 0, %s78
      %s98 = sphi 0, %s98
      %s100 = sphi 0, %s98
      %s101 = sphi 0, %s100
      %s115 = sphi 0, %s101
      %s119 = sphi 0, %s119
      %s121 = sphi 0, %s119
      %s122 = sphi 0, %s121
      %s136 = sphi 0, %s122
      %s140 = sphi 0, %s140
      %s142 = sphi 0, %s140
      %s143 = sphi 0, %s142
      %s157 = sphi 0, %s143
      %s161 = sphi 0, %s161
      %s163 = sphi 0, %s161
      %s164 = sphi 0, %s163
      %s178 = sphi 0, %s164
      %s182 = sphi 0, %s182
      %s184 = sphi 0, %s182
      %s185 = sphi 0, %s184
      %s199 = sphi 0, %s185
      %s203 = sphi 0, %s203
      %s205 = sphi 0, %s203
      %s206 = sphi 0, %s205
      %s220 = sphi 0, %s206
      %s224 = sphi 0, %s224
      %s226 = sphi 0, %s224
      %s227 = sphi 0, %s226
      %s241 = sphi 0, %s227
      %s245 = sphi 0, %s245
      %s247 = sphi 0, %s245
      %s248 = sphi 0, %s247
      %s262 = sphi 0, %s248
      %s266 = sphi 0, %s266
      %s268 = sphi 0, %s266
      %s269 = sphi 0, %s268
      %s283 = sphi 0, %s269
      %s287 = sphi 0, %s287
      %s289 = sphi 0, %s287
      %s290 = sphi 0, %s289
      %s304 = sphi 0, %s290
      %s310 = sphi 0, %s312
      %s313 = sphi 0, %s310
      %s314 = sphi 0, %s313
      %s330 = sphi 0, %s314
      %s338 = sphi 0, %s340
      %s341 = sphi 0, %s338
      %s342 = sphi 0, %s341
      %s358 = sphi 0, %s342
      %s362 = sphi 0, %s362
      %s364 = sphi 0, %s362
      %s365 = sphi 0, %s364
      %s379 = sphi 0, %s365
    $region4: #{tpu_custom_call.1} parent=1 // loop_header_branch
      %39 = sbr.rel (%p37) target = $region8
    $region5: #{tpu_custom_call.1} parent=1 // loop_body
      %s41 = ssub.s32 %s36, 1
      %s42 = ssub.s32 %s36, 2
      %s43 = sadd.s32 %s36, 1
      %s44 = ssub.s32 %s36, %s43
      %p45 = scmp.eq.s32.totalorder %s44, 0
      %s47 = sadd.s32 %s46, 1
      %s48 = scalar_select %p45, %s46, %s47
      %p51 = pneg %p45
      %p52 = scmp.eq.s32.totalorder %s36, 1
      %p53 = por %p51, %p52
      %p54 = scmp.ne.s32.totalorder %s46, %s49
      %p55 = scmp.eq.s32.totalorder %s36, 0
      %p56 = por %p54, %p55
      %p57 = scmp.ne.s32.totalorder %s46, %s49
      %p58 = scmp.eq.s32.totalorder %s41, 1
      %p59 = por %p57, %p58
      %p60 = scmp.ne.s32.totalorder %s49, %s50
      %p61 = scmp.eq.s32.totalorder %s41, 0
      %p62 = por %p60, %p61
      %p63 = scmp.ne.s32.totalorder %s49, %s50
      %p64 = scmp.eq.s32.totalorder %s42, 1
      %p65 = por %p63, %p64
      %p67 = scmp.ne.s32.totalorder %s50, %s66
      %p68 = scmp.eq.s32.totalorder %s42, 0
      %p69 = por %p67, %p68
      %s70 = ssub.s32 1, %s36
      %s71 = ssub.s32 1, %s43
      %s72 = ssub.s32 %s70, %s71
      %p73 = scmp.eq.s32.totalorder %s72, 0
      %s75 = sadd.s32 %s74, 1
      %s76 = scalar_select %p73, %s74, %s75
      %p79 = pneg %p73
      %p80 = scmp.eq.s32.totalorder %s36, 1
      %p81 = por %p79, %p80
      %p82 = scmp.ne.s32.totalorder %s74, %s77
      %p83 = scmp.eq.s32.totalorder %s36, 0
      %p84 = por %p82, %p83
      %p85 = scmp.ne.s32.totalorder %s74, %s77
      %p86 = scmp.eq.s32.totalorder %s41, 1
      %p87 = por %p85, %p86
      %p88 = scmp.ne.s32.totalorder %s77, %s78
      %p89 = scmp.eq.s32.totalorder %s41, 0
      %p90 = por %p88, %p89
      %p91 = scmp.ne.s32.totalorder %s77, %s78
      %p92 = scmp.eq.s32.totalorder %s42, 1
      %p93 = por %p91, %p92
      %p95 = scmp.ne.s32.totalorder %s78, %s94
      %p96 = scmp.eq.s32.totalorder %s42, 0
      %p97 = por %p95, %p96
      %s99 = sadd.s32 %s98, 1
      %p102 = scmp.eq.s32.totalorder %s36, 1
      %p103 = scmp.ne.s32.totalorder %s98, %s100
      %p104 = scmp.eq.s32.totalorder %s36, 0
      %p105 = por %p103, %p104
      %p106 = scmp.ne.s32.totalorder %s98, %s100
      %p107 = scmp.eq.s32.totalorder %s41, 1
      %p108 = por %p106, %p107
      %p109 = scmp.ne.s32.totalorder %s100, %s101
      %p110 = scmp.eq.s32.totalorder %s41, 0
      %p111 = por %p109, %p110
      %p112 = scmp.ne.s32.totalorder %s100, %s101
      %p113 = scmp.eq.s32.totalorder %s42, 1
      %p114 = por %p112, %p113
      %p116 = scmp.ne.s32.totalorder %s101, %s115
      %p117 = scmp.eq.s32.totalorder %s42, 0
      %p118 = por %p116, %p117
      %s120 = sadd.s32 %s119, 1
      %p123 = scmp.eq.s32.totalorder %s36, 1
      %p124 = scmp.ne.s32.totalorder %s119, %s121
      %p125 = scmp.eq.s32.totalorder %s36, 0
      %p126 = por %p124, %p125
      %p127 = scmp.ne.s32.totalorder %s119, %s121
      %p128 = scmp.eq.s32.totalorder %s41, 1
      %p129 = por %p127, %p128
      %p130 = scmp.ne.s32.totalorder %s121, %s122
      %p131 = scmp.eq.s32.totalorder %s41, 0
      %p132 = por %p130, %p131
      %p133 = scmp.ne.s32.totalorder %s121, %s122
      %p134 = scmp.eq.s32.totalorder %s42, 1
      %p135 = por %p133, %p134
      %p137 = scmp.ne.s32.totalorder %s122, %s136
      %p138 = scmp.eq.s32.totalorder %s42, 0
      %p139 = por %p137, %p138
      %s141 = sadd.s32 %s140, 1
      %p144 = scmp.eq.s32.totalorder %s36, 1
      %p145 = scmp.ne.s32.totalorder %s140, %s142
      %p146 = scmp.eq.s32.totalorder %s36, 0
      %p147 = por %p145, %p146
      %p148 = scmp.ne.s32.totalorder %s140, %s142
      %p149 = scmp.eq.s32.totalorder %s41, 1
      %p150 = por %p148, %p149
      %p151 = scmp.ne.s32.totalorder %s142, %s143
      %p152 = scmp.eq.s32.totalorder %s41, 0
      %p153 = por %p151, %p152
      %p154 = scmp.ne.s32.totalorder %s142, %s143
      %p155 = scmp.eq.s32.totalorder %s42, 1
      %p156 = por %p154, %p155
      %p158 = scmp.ne.s32.totalorder %s143, %s157
      %p159 = scmp.eq.s32.totalorder %s42, 0
      %p160 = por %p158, %p159
      %s162 = sadd.s32 %s161, 1
      %p165 = scmp.eq.s32.totalorder %s36, 1
      %p166 = scmp.ne.s32.totalorder %s161, %s163
      %p167 = scmp.eq.s32.totalorder %s36, 0
      %p168 = por %p166, %p167
      %p169 = scmp.ne.s32.totalorder %s161, %s163
      %p170 = scmp.eq.s32.totalorder %s41, 1
      %p171 = por %p169, %p170
      %p172 = scmp.ne.s32.totalorder %s163, %s164
      %p173 = scmp.eq.s32.totalorder %s41, 0
      %p174 = por %p172, %p173
      %p175 = scmp.ne.s32.totalorder %s163, %s164
      %p176 = scmp.eq.s32.totalorder %s42, 1
      %p177 = por %p175, %p176
      %p179 = scmp.ne.s32.totalorder %s164, %s178
      %p180 = scmp.eq.s32.totalorder %s42, 0
      %p181 = por %p179, %p180
      %s183 = sadd.s32 %s182, 1
      %p186 = scmp.eq.s32.totalorder %s36, 1
      %p187 = scmp.ne.s32.totalorder %s182, %s184
      %p188 = scmp.eq.s32.totalorder %s36, 0
      %p189 = por %p187, %p188
      %p190 = scmp.ne.s32.totalorder %s182, %s184
      %p191 = scmp.eq.s32.totalorder %s41, 1
      %p192 = por %p190, %p191
      %p193 = scmp.ne.s32.totalorder %s184, %s185
      %p194 = scmp.eq.s32.totalorder %s41, 0
      %p195 = por %p193, %p194
      %p196 = scmp.ne.s32.totalorder %s184, %s185
      %p197 = scmp.eq.s32.totalorder %s42, 1
      %p198 = por %p196, %p197
      %p200 = scmp.ne.s32.totalorder %s185, %s199
      %p201 = scmp.eq.s32.totalorder %s42, 0
      %p202 = por %p200, %p201
      %s204 = sadd.s32 %s203, 1
      %p207 = scmp.eq.s32.totalorder %s36, 1
      %p208 = scmp.ne.s32.totalorder %s203, %s205
      %p209 = scmp.eq.s32.totalorder %s36, 0
      %p210 = por %p208, %p209
      %p211 = scmp.ne.s32.totalorder %s203, %s205
      %p212 = scmp.eq.s32.totalorder %s41, 1
      %p213 = por %p211, %p212
      %p214 = scmp.ne.s32.totalorder %s205, %s206
      %p215 = scmp.eq.s32.totalorder %s41, 0
      %p216 = por %p214, %p215
      %p217 = scmp.ne.s32.totalorder %s205, %s206
      %p218 = scmp.eq.s32.totalorder %s42, 1
      %p219 = por %p217, %p218
      %p221 = scmp.ne.s32.totalorder %s206, %s220
      %p222 = scmp.eq.s32.totalorder %s42, 0
      %p223 = por %p221, %p222
      %s225 = sadd.s32 %s224, 1
      %p228 = scmp.eq.s32.totalorder %s36, 1
      %p229 = scmp.ne.s32.totalorder %s224, %s226
      %p230 = scmp.eq.s32.totalorder %s36, 0
      %p231 = por %p229, %p230
      %p232 = scmp.ne.s32.totalorder %s224, %s226
      %p233 = scmp.eq.s32.totalorder %s41, 1
      %p234 = por %p232, %p233
      %p235 = scmp.ne.s32.totalorder %s226, %s227
      %p236 = scmp.eq.s32.totalorder %s41, 0
      %p237 = por %p235, %p236
      %p238 = scmp.ne.s32.totalorder %s226, %s227
      %p239 = scmp.eq.s32.totalorder %s42, 1
      %p240 = por %p238, %p239
      %p242 = scmp.ne.s32.totalorder %s227, %s241
      %p243 = scmp.eq.s32.totalorder %s42, 0
      %p244 = por %p242, %p243
      %s246 = sadd.s32 %s245, 1
      %p249 = scmp.eq.s32.totalorder %s36, 1
      %p250 = scmp.ne.s32.totalorder %s245, %s247
      %p251 = scmp.eq.s32.totalorder %s36, 0
      %p252 = por %p250, %p251
      %p253 = scmp.ne.s32.totalorder %s245, %s247
      %p254 = scmp.eq.s32.totalorder %s41, 1
      %p255 = por %p253, %p254
      %p256 = scmp.ne.s32.totalorder %s247, %s248
      %p257 = scmp.eq.s32.totalorder %s41, 0
      %p258 = por %p256, %p257
      %p259 = scmp.ne.s32.totalorder %s247, %s248
      %p260 = scmp.eq.s32.totalorder %s42, 1
      %p261 = por %p259, %p260
      %p263 = scmp.ne.s32.totalorder %s248, %s262
      %p264 = scmp.eq.s32.totalorder %s42, 0
      %p265 = por %p263, %p264
      %s267 = sadd.s32 %s266, 1
      %p270 = scmp.eq.s32.totalorder %s36, 1
      %p271 = scmp.ne.s32.totalorder %s266, %s268
      %p272 = scmp.eq.s32.totalorder %s36, 0
      %p273 = por %p271, %p272
      %p274 = scmp.ne.s32.totalorder %s266, %s268
      %p275 = scmp.eq.s32.totalorder %s41, 1
      %p276 = por %p274, %p275
      %p277 = scmp.ne.s32.totalorder %s268, %s269
      %p278 = scmp.eq.s32.totalorder %s41, 0
      %p279 = por %p277, %p278
      %p280 = scmp.ne.s32.totalorder %s268, %s269
      %p281 = scmp.eq.s32.totalorder %s42, 1
      %p282 = por %p280, %p281
      %p284 = scmp.ne.s32.totalorder %s269, %s283
      %p285 = scmp.eq.s32.totalorder %s42, 0
      %p286 = por %p284, %p285
      %s288 = sadd.s32 %s287, 1
      %p291 = scmp.eq.s32.totalorder %s36, 1
      %p292 = scmp.ne.s32.totalorder %s287, %s289
      %p293 = scmp.eq.s32.totalorder %s36, 0
      %p294 = por %p292, %p293
      %p295 = scmp.ne.s32.totalorder %s287, %s289
      %p296 = scmp.eq.s32.totalorder %s41, 1
      %p297 = por %p295, %p296
      %p298 = scmp.ne.s32.totalorder %s289, %s290
      %p299 = scmp.eq.s32.totalorder %s41, 0
      %p300 = por %p298, %p299
      %p301 = scmp.ne.s32.totalorder %s289, %s290
      %p302 = scmp.eq.s32.totalorder %s42, 1
      %p303 = por %p301, %p302
      %p305 = scmp.ne.s32.totalorder %s290, %s304
      %p306 = scmp.eq.s32.totalorder %s42, 0
      %p307 = por %p305, %p306
      %s308 = ssub.s32 %s36, %s43
      %p309 = scmp.eq.s32.totalorder %s308, 0
      %s311 = sadd.s32 %s310, 1
      %s312 = scalar_select %p309, %s310, %s311
      %p315 = pneg %p309
      %p316 = scmp.eq.s32.totalorder %s36, 1
      %p317 = por %p315, %p316
      %p318 = scmp.ne.s32.totalorder %s310, %s313
      %p319 = scmp.eq.s32.totalorder %s36, 0
      %p320 = por %p318, %p319
      %p321 = scmp.ne.s32.totalorder %s310, %s313
      %p322 = scmp.eq.s32.totalorder %s41, 1
      %p323 = por %p321, %p322
      %p324 = scmp.ne.s32.totalorder %s313, %s314
      %p325 = scmp.eq.s32.totalorder %s41, 0
      %p326 = por %p324, %p325
      %p327 = scmp.ne.s32.totalorder %s313, %s314
      %p328 = scmp.eq.s32.totalorder %s42, 1
      %p329 = por %p327, %p328
      %p331 = scmp.ne.s32.totalorder %s314, %s330
      %p332 = scmp.eq.s32.totalorder %s42, 0
      %p333 = por %p331, %p332
      %s334 = ssub.s32 1, %s36
      %s335 = ssub.s32 1, %s43
      %s336 = ssub.s32 %s334, %s335
      %p337 = scmp.eq.s32.totalorder %s336, 0
      %s339 = sadd.s32 %s338, 1
      %s340 = scalar_select %p337, %s338, %s339
      %p343 = pneg %p337
      %p344 = scmp.eq.s32.totalorder %s36, 1
      %p345 = por %p343, %p344
      %p346 = scmp.ne.s32.totalorder %s338, %s341
      %p347 = scmp.eq.s32.totalorder %s36, 0
      %p348 = por %p346, %p347
      %p349 = scmp.ne.s32.totalorder %s338, %s341
      %p350 = scmp.eq.s32.totalorder %s41, 1
      %p351 = por %p349, %p350
      %p352 = scmp.ne.s32.totalorder %s341, %s342
      %p353 = scmp.eq.s32.totalorder %s41, 0
      %p354 = por %p352, %p353
      %p355 = scmp.ne.s32.totalorder %s341, %s342
      %p356 = scmp.eq.s32.totalorder %s42, 1
      %p357 = por %p355, %p356
      %p359 = scmp.ne.s32.totalorder %s342, %s358
      %p360 = scmp.eq.s32.totalorder %s42, 0
      %p361 = por %p359, %p360
      %s363 = sadd.s32 %s362, 1
      %p366 = scmp.eq.s32.totalorder %s36, 1
      %p367 = scmp.ne.s32.totalorder %s362, %s364
      %p368 = scmp.eq.s32.totalorder %s36, 0
      %p369 = por %p367, %p368
      %p370 = scmp.ne.s32.totalorder %s362, %s364
      %p371 = scmp.eq.s32.totalorder %s41, 1
      %p372 = por %p370, %p371
      %p373 = scmp.ne.s32.totalorder %s364, %s365
      %p374 = scmp.eq.s32.totalorder %s41, 0
      %p375 = por %p373, %p374
      %p376 = scmp.ne.s32.totalorder %s364, %s365
      %p377 = scmp.eq.s32.totalorder %s42, 1
      %p378 = por %p376, %p377
      %p380 = scmp.ne.s32.totalorder %s365, %s379
      %p381 = scmp.eq.s32.totalorder %s42, 0
      %p382 = por %p380, %p381
      %p383 = scmp.le.s32.totalorder 1, %s36
      %p384 = scmp.lt.s32.totalorder %s36, 3
      %p385 = pnand %p383, %p384
      %p386 = pneg %p385
      // Predicated region
      $region9: #{tpu_custom_call.1} parent=5 // pred_check
        _
      $region10: #{tpu_custom_call.1} parent=5 // pred_check_branch
        %388 = sbr.rel (%p385) target = $region12
      $region11: #{tpu_custom_call.1} parent=5 // pred_region
        %s389 = ssub.s32 %s36, 1
        // Predicated region
        $region13: #{tpu_custom_call.1} parent=11 // pred_check
          %p390 = pneg %p111
        $region14: #{tpu_custom_call.1} parent=11 // pred_check_branch
          %392 = sbr.rel (%p390) target = $region16
        $region15: #{tpu_custom_call.1} parent=11 // pred_region
          _
        $region16: #{tpu_custom_call.1} parent=11 // pred_fallthru
          _
        // Predicated region
        $region17: #{tpu_custom_call.1} parent=11 // pred_check
          %p393 = pneg %p132
        $region18: #{tpu_custom_call.1} parent=11 // pred_check_branch
          %395 = sbr.rel (%p393) target = $region20
        $region19: #{tpu_custom_call.1} parent=11 // pred_region
          %397 = vsyncadd [#allocation10], 0
          %s398 = sshll.u32 %s3, 4
          %s399 = int_to_ptr.hbm [resolvable:$true] %s398
          %s400 = sshll.u32 [#allocation11], 4
          %s401 = int_to_ptr.vmem [resolvable:$true] %s400
          %406 = dma.hbm_to_vmem [thread:$0]  %s399, 3072, %s401, [#allocation10], 192, 192, 12
        $region20: #{tpu_custom_call.1} parent=11 // pred_fallthru
          _
        // Predicated region
        $region21: #{tpu_custom_call.1} parent=11 // pred_check
          %p407 = pneg %p153
        $region22: #{tpu_custom_call.1} parent=11 // pred_check_branch
          %409 = sbr.rel (%p407) target = $region24
        $region23: #{tpu_custom_call.1} parent=11 // pred_region
          %411 = vsyncadd [#allocation13], 0
          %s412 = sshll.u32 %s4, 4
          %s413 = int_to_ptr.hbm [resolvable:$true] %s412
          %s414 = sshll.u32 [#allocation12], 4
          %s415 = int_to_ptr.vmem [resolvable:$true] %s414
          %420 = dma.hbm_to_vmem [thread:$0]  %s413, 3072, %s415, [#allocation13], 192, 192, 12
        $region24: #{tpu_custom_call.1} parent=11 // pred_fallthru
          _
        // Predicated region
        $region25: #{tpu_custom_call.1} parent=11 // pred_check
          %p421 = pneg %p174
        $region26: #{tpu_custom_call.1} parent=11 // pred_check_branch
          %423 = sbr.rel (%p421) target = $region28
        $region27: #{tpu_custom_call.1} parent=11 // pred_region
          _
        $region28: #{tpu_custom_call.1} parent=11 // pred_fallthru
          _
        // Predicated region
        $region29: #{tpu_custom_call.1} parent=11 // pred_check
          %p424 = pneg %p195
        $region30: #{tpu_custom_call.1} parent=11 // pred_check_branch
          %426 = sbr.rel (%p424) target = $region32
        $region31: #{tpu_custom_call.1} parent=11 // pred_region
          %428 = vsyncadd [#allocation13], 0
          %s430 = sshll.u32 %s6, 4
          %s431 = int_to_ptr.hbm [resolvable:$true] %s430
          %s432 = sshll.u32 [#allocation14], 4
          %s433 = int_to_ptr.vmem [resolvable:$true] %s432
          %435 = dma.hbm_to_vmem [thread:$0]  %s431, 48, %s433, [#allocation13]
        $region32: #{tpu_custom_call.1} parent=11 // pred_fallthru
          _
        // Predicated region
        $region33: #{tpu_custom_call.1} parent=11 // pred_check
          %p436 = pneg %p216
        $region34: #{tpu_custom_call.1} parent=11 // pred_check_branch
          %438 = sbr.rel (%p436) target = $region36
        $region35: #{tpu_custom_call.1} parent=11 // pred_region
          %440 = vsyncadd [#allocation16], 0
          %s441 = sshll.u32 %s7, 4
          %s442 = int_to_ptr.hbm [resolvable:$true] %s441
          %s443 = sshll.u32 [#allocation15], 4
          %s444 = int_to_ptr.vmem [resolvable:$true] %s443
          %449 = dma.hbm_to_vmem [thread:$0]  %s442, 3072, %s444, [#allocation16], 192, 192, 12
        $region36: #{tpu_custom_call.1} parent=11 // pred_fallthru
          _
        // Predicated region
        $region37: #{tpu_custom_call.1} parent=11 // pred_check
          %p450 = pneg %p237
        $region38: #{tpu_custom_call.1} parent=11 // pred_check_branch
          %452 = sbr.rel (%p450) target = $region40
        $region39: #{tpu_custom_call.1} parent=11 // pred_region
          %454 = vsyncadd [#allocation16], 0
          %s455 = sshll.u32 %s8, 4
          %s456 = int_to_ptr.hbm [resolvable:$true] %s455
          %s457 = sshll.u32 [#allocation17], 4
          %s458 = int_to_ptr.vmem [resolvable:$true] %s457
          %463 = dma.hbm_to_vmem [thread:$0]  %s456, 3072, %s458, [#allocation16], 192, 192, 12
        $region40: #{tpu_custom_call.1} parent=11 // pred_fallthru
          _
        // Predicated region
        $region41: #{tpu_custom_call.1} parent=11 // pred_check
          %p464 = pneg %p258
        $region42: #{tpu_custom_call.1} parent=11 // pred_check_branch
          %466 = sbr.rel (%p464) target = $region44
        $region43: #{tpu_custom_call.1} parent=11 // pred_region
          %468 = vsyncadd [#allocation19], 0
          %s470 = sshll.u32 %s9, 4
          %s471 = int_to_ptr.hbm [resolvable:$true] %s470
          %s472 = sshll.u32 [#allocation18], 4
          %s473 = int_to_ptr.vmem [resolvable:$true] %s472
          %475 = dma.hbm_to_vmem [thread:$0]  %s471, 16, %s473, [#allocation19]
        $region44: #{tpu_custom_call.1} parent=11 // pred_fallthru
          _
        // Predicated region
        $region45: #{tpu_custom_call.1} parent=11 // pred_check
          %p476 = pneg %p279
        $region46: #{tpu_custom_call.1} parent=11 // pred_check_branch
          %478 = sbr.rel (%p476) target = $region48
        $region47: #{tpu_custom_call.1} parent=11 // pred_region
          %480 = vsyncadd [#allocation19], 0
          %s482 = sshll.u32 %s10, 4
          %s483 = int_to_ptr.hbm [resolvable:$true] %s482
          %s484 = sshll.u32 [#allocation20], 4
          %s485 = int_to_ptr.vmem [resolvable:$true] %s484
          %487 = dma.hbm_to_vmem [thread:$0]  %s483, 16, %s485, [#allocation19]
        $region48: #{tpu_custom_call.1} parent=11 // pred_fallthru
          _
        // Predicated region
        $region49: #{tpu_custom_call.1} parent=11 // pred_check
          %p488 = pneg %p300
        $region50: #{tpu_custom_call.1} parent=11 // pred_check_branch
          %490 = sbr.rel (%p488) target = $region52
        $region51: #{tpu_custom_call.1} parent=11 // pred_region
          _
        $region52: #{tpu_custom_call.1} parent=11 // pred_fallthru
          _
      $region12: #{tpu_custom_call.1} parent=5 // pred_fallthru
        _
      %p491 = scmp.lt.s32.totalorder %s36, 2
      // Predicated region
      $region53: #{tpu_custom_call.1} parent=5 // pred_check
        %p492 = pneg %p491
      $region54: #{tpu_custom_call.1} parent=5 // pred_check_branch
        %494 = sbr.rel (%p492) target = $region56
      $region55: #{tpu_custom_call.1} parent=5 // pred_region
        // Predicated region
        $region57: #{tpu_custom_call.1} parent=55 // pred_check
          %p495 = pneg %p56
        $region58: #{tpu_custom_call.1} parent=55 // pred_check_branch
          %497 = sbr.rel (%p495) target = $region60
        $region59: #{tpu_custom_call.1} parent=55 // pred_region
          %s498 = sand.u32 %s46, 1
          %s499 = scalar_lea.sflag [#allocation7], %s498
          %s500 = sand.u32 %s46, 1
          %s501 = smul.addr %s500, 16
          %s502 = scalar_lea.vmem [#allocation6], %s501
          %s503 = smul.u32 4, %s36
          %505 = vsyncadd %s499, 0
          %s506 = smul.addr %s503, 4
          %s507 = scalar_lea.hbm %s0, %s506
          %s508 = sshll.u32 %s507, 4
          %s509 = int_to_ptr.hbm [resolvable:$true] %s508
          %s510 = sshll.u32 %s502, 4
          %s511 = int_to_ptr.vmem [resolvable:$true] %s510
          %516 = dma.hbm_to_vmem [thread:$0]  %s509, 256, %s511, %s499, 64, 64, 4
        $region60: #{tpu_custom_call.1} parent=55 // pred_fallthru
          _
        // Predicated region
        $region61: #{tpu_custom_call.1} parent=55 // pred_check
          %p517 = pneg %p84
        $region62: #{tpu_custom_call.1} parent=55 // pred_check_branch
          %519 = sbr.rel (%p517) target = $region64
        $region63: #{tpu_custom_call.1} parent=55 // pred_region
          %s520 = sand.u32 %s36, 1
          %s521 = scalar_lea.sflag [#allocation10], %s520
          %s522 = sand.u32 %s74, 1
          %s523 = smul.addr %s522, 16
          %s524 = scalar_lea.vmem [#allocation9], %s523
          %s525 = ssub.s32 1, %s36
          %s526 = smul.u32 4, %s525
          %528 = vsyncadd %s521, 0
          %s529 = smul.addr %s526, 4
          %s530 = scalar_lea.hbm %s1, %s529
          %s531 = sshll.u32 %s530, 4
          %s532 = int_to_ptr.hbm [resolvable:$true] %s531
          %s533 = sshll.u32 %s524, 4
          %s534 = int_to_ptr.vmem [resolvable:$true] %s533
          %539 = dma.hbm_to_vmem [thread:$0]  %s532, 256, %s534, %s521, 64, 64, 4
        $region64: #{tpu_custom_call.1} parent=55 // pred_fallthru
          _
      $region56: #{tpu_custom_call.1} parent=5 // pred_fallthru
        _
      %p540 = scmp.le.s32.totalorder 1, %s36
      %p541 = scmp.lt.s32.totalorder %s36, 3
      %p542 = pnand %p540, %p541
      %p543 = pneg %p542
      // Predicated region
      $region65: #{tpu_custom_call.1} parent=5 // pred_check
        _
      $region66: #{tpu_custom_call.1} parent=5 // pred_check_branch
        %545 = sbr.rel (%p542) target = $region68
      $region67: #{tpu_custom_call.1} parent=5 // pred_region
        %s546 = ssub.s32 %s36, 1
        %s547 = sand.u32 %s49, 1
        %s548 = scalar_lea.sflag [#allocation7], %s547
        %s549 = sand.u32 %s49, 1
        %s550 = smul.addr %s549, 16
        %s551 = scalar_lea.vmem [#allocation6], %s550
        // Predicated region
        $region69: #{tpu_custom_call.1} parent=67 // pred_check
          %p552 = pneg %p62
        $region70: #{tpu_custom_call.1} parent=67 // pred_check_branch
          %554 = sbr.rel (%p552) target = $region72
        $region71: #{tpu_custom_call.1} parent=67 // pred_region
          %556 = dma.done %s548, 256
        $region72: #{tpu_custom_call.1} parent=67 // pred_fallthru
          _
        %s557 = sand.u32 %s41, 1
        %s558 = scalar_lea.sflag [#allocation10], %s557
        %s559 = sand.u32 %s77, 1
        %s560 = smul.addr %s559, 16
        %s561 = scalar_lea.vmem [#allocation9], %s560
        // Predicated region
        $region73: #{tpu_custom_call.1} parent=67 // pred_check
          %p562 = pneg %p90
        $region74: #{tpu_custom_call.1} parent=67 // pred_check_branch
          %564 = sbr.rel (%p562) target = $region76
        $region75: #{tpu_custom_call.1} parent=67 // pred_region
          %566 = dma.done %s558, 256
        $region76: #{tpu_custom_call.1} parent=67 // pred_fallthru
          _
        // Predicated region
        $region77: #{tpu_custom_call.1} parent=67 // pred_check
          %p567 = pneg %p132
        $region78: #{tpu_custom_call.1} parent=67 // pred_check_branch
          %569 = sbr.rel (%p567) target = $region80
        $region79: #{tpu_custom_call.1} parent=67 // pred_region
          %571 = dma.done [#allocation10], 3072
        $region80: #{tpu_custom_call.1} parent=67 // pred_fallthru
          _
        // Predicated region
        $region81: #{tpu_custom_call.1} parent=67 // pred_check
          %p572 = pneg %p153
        $region82: #{tpu_custom_call.1} parent=67 // pred_check_branch
          %574 = sbr.rel (%p572) target = $region84
        $region83: #{tpu_custom_call.1} parent=67 // pred_region
          %576 = dma.done [#allocation13], 3072
        $region84: #{tpu_custom_call.1} parent=67 // pred_fallthru
          _
        // Predicated region
        $region85: #{tpu_custom_call.1} parent=67 // pred_check
          %p577 = pneg %p195
        $region86: #{tpu_custom_call.1} parent=67 // pred_check_branch
          %579 = sbr.rel (%p577) target = $region88
        $region87: #{tpu_custom_call.1} parent=67 // pred_region
          %581 = dma.done [#allocation13], 48
        $region88: #{tpu_custom_call.1} parent=67 // pred_fallthru
          _
        // Predicated region
        $region89: #{tpu_custom_call.1} parent=67 // pred_check
          %p582 = pneg %p216
        $region90: #{tpu_custom_call.1} parent=67 // pred_check_branch
          %584 = sbr.rel (%p582) target = $region92
        $region91: #{tpu_custom_call.1} parent=67 // pred_region
          %586 = dma.done [#allocation16], 3072
        $region92: #{tpu_custom_call.1} parent=67 // pred_fallthru
          _
        // Predicated region
        $region93: #{tpu_custom_call.1} parent=67 // pred_check
          %p587 = pneg %p237
        $region94: #{tpu_custom_call.1} parent=67 // pred_check_branch
          %589 = sbr.rel (%p587) target = $region96
        $region95: #{tpu_custom_call.1} parent=67 // pred_region
          %591 = dma.done [#allocation16], 3072
        $region96: #{tpu_custom_call.1} parent=67 // pred_fallthru
          _
        // Predicated region
        $region97: #{tpu_custom_call.1} parent=67 // pred_check
          %p592 = pneg %p258
        $region98: #{tpu_custom_call.1} parent=67 // pred_check_branch
          %594 = sbr.rel (%p592) target = $region100
        $region99: #{tpu_custom_call.1} parent=67 // pred_region
          %596 = dma.done [#allocation19], 16
        $region100: #{tpu_custom_call.1} parent=67 // pred_fallthru
          _
        // Predicated region
        $region101: #{tpu_custom_call.1} parent=67 // pred_check
          %p597 = pneg %p279
        $region102: #{tpu_custom_call.1} parent=67 // pred_check_branch
          %599 = sbr.rel (%p597) target = $region104
        $region103: #{tpu_custom_call.1} parent=67 // pred_region
          %601 = dma.done [#allocation19], 16
        $region104: #{tpu_custom_call.1} parent=67 // pred_fallthru
          _
        %s602 = sand.u32 %s49, 1
        %s603 = scalar_lea.sflag [#allocation7], %s602
        %s604 = sand.u32 %s49, 1
        %s605 = smul.addr %s604, 16
        %s606 = scalar_lea.vmem [#allocation6], %s605
        %p607 = pneg %p62
        %p608 = pneg %p59
        %s609 = sand.u32 %s41, 1
        %s610 = scalar_lea.sflag [#allocation10], %s609
        %s611 = sand.u32 %s77, 1
        %s612 = smul.addr %s611, 16
        %s613 = scalar_lea.vmem [#allocation9], %s612
        %p614 = pneg %p90
        %p615 = pneg %p87
        %p616 = pneg %p111
        %p617 = pneg %p108
        %p618 = pneg %p132
        %p619 = pneg %p129
        %p620 = pneg %p153
        %p621 = pneg %p150
        %p622 = pneg %p174
        %p623 = pneg %p171
        %p624 = pneg %p195
        %p625 = pneg %p192
        %p626 = pneg %p216
        %p627 = pneg %p213
        %p628 = pneg %p237
        %p629 = pneg %p234
        %p630 = pneg %p258
        %p631 = pneg %p255
        %p632 = pneg %p279
        %p633 = pneg %p276
        %p634 = pneg %p300
        %p635 = pneg %p297
        %p636 = pneg %p326
        %p637 = pneg %p323
        %s638 = sand.u32 %s313, 1
        %s639 = scalar_lea.sflag [#allocation8], %s638
        %s640 = sand.u32 %s313, 1
        %s641 = smul.addr %s640, 32
        %s642 = scalar_lea.vmem [#allocation21], %s641
        %p643 = pneg %p354
        %p644 = pneg %p351
        %s645 = sand.u32 %s41, 1
        %s646 = scalar_lea.sflag [#allocation23], %s645
        %s647 = sand.u32 %s341, 1
        %s648 = smul.addr %s647, 32
        %s649 = scalar_lea.vmem [#allocation22], %s648
        %p650 = pneg %p375
        %p651 = pneg %p372
        %s652 = smul.u32 4, %s41
        %s653 = ssub.s32 1, %s41
        %s654 = smul.u32 4, %s653
        %s655 = smul.u32 4, %s41
        %s656 = ssub.s32 1, %s41
        %s657 = smul.u32 4, %s656
        %p658 = scmp.eq.s32.totalorder %s41, 0
        // Predicated region
        $region105: #{tpu_custom_call.1} parent=67 // pred_check
          %p659 = pneg %p658
        $region106: #{tpu_custom_call.1} parent=67 // pred_check_branch
          %661 = sbr.rel (%p659) target = $region108
        $region107: #{tpu_custom_call.1} parent=67 // pred_region
          %v662 = vld [vmem:[%s11] sm:$0xff]
          %663 = vst [vmem:[#allocation4] sm:$0xff] %v662
          %s664 = scalar_lea.vmem %s11, 8
          %v665 = vld [vmem:[%s664] sm:$0xff]
          %666 = vst [vmem:[#allocation5] sm:$0xff] %v665
        $region108: #{tpu_custom_call.1} parent=67 // pred_fallthru
          _
        %v667 = vld [vmem:[%s551] sm:$0xf]
        %v668 = vld [vmem:[%s551 + $0x4] sm:$0xf]
        %v669 = vld [vmem:[%s551 + $0x8] sm:$0xf]
        %v670 = vld [vmem:[%s551 + $0xc] sm:$0xf]
        %v671 = vld [vmem:[#allocation11] sm:$0xff]
        %v672 = vld [vmem:[#allocation11 + $0x8] sm:$0xf]
        %v673 = vld [vmem:[#allocation11 + $0xc] sm:$0xff]
        %v674 = vld [vmem:[#allocation11 + $0x14] sm:$0xf]
        %v675 = vld [vmem:[#allocation11 + $0x18] sm:$0xff]
        %v676 = vld [vmem:[#allocation11 + $0x20] sm:$0xf]
        %v677 = vld [vmem:[#allocation11 + $0x24] sm:$0xff]
        %v678 = vld [vmem:[#allocation11 + $0x2c] sm:$0xf]
        %v679 = vld [vmem:[#allocation11 + $0x30] sm:$0xff]
        %v680 = vld [vmem:[#allocation11 + $0x38] sm:$0xf]
        %v681 = vld [vmem:[#allocation11 + $0x3c] sm:$0xff]
        %v682 = vld [vmem:[#allocation11 + $0x44] sm:$0xf]
        %v683 = vld [vmem:[#allocation11 + $0x48] sm:$0xff]
        %v684 = vld [vmem:[#allocation11 + $0x50] sm:$0xf]
        %v685 = vld [vmem:[#allocation11 + $0x54] sm:$0xff]
        %v686 = vld [vmem:[#allocation11 + $0x5c] sm:$0xf]
        %v687 = vld [vmem:[#allocation11 + $0x60] sm:$0xff]
        %v688 = vld [vmem:[#allocation11 + $0x68] sm:$0xf]
        %v689 = vld [vmem:[#allocation11 + $0x6c] sm:$0xff]
        %v690 = vld [vmem:[#allocation11 + $0x74] sm:$0xf]
        %v691 = vld [vmem:[#allocation11 + $0x78] sm:$0xff]
        %v692 = vld [vmem:[#allocation11 + $0x80] sm:$0xf]
        %v693 = vld [vmem:[#allocation11 + $0x84] sm:$0xff]
        %v694 = vld [vmem:[#allocation11 + $0x8c] sm:$0xf]
        %v695 = vld [vmem:[#allocation11 + $0x90] sm:$0xff]
        %v696 = vld [vmem:[#allocation11 + $0x98] sm:$0xf]
        %v697 = vld [vmem:[#allocation11 + $0x9c] sm:$0xff]
        %v698 = vld [vmem:[#allocation11 + $0xa4] sm:$0xf]
        %v699 = vld [vmem:[#allocation11 + $0xa8] sm:$0xff]
        %v700 = vld [vmem:[#allocation11 + $0xb0] sm:$0xf]
        %v701 = vld [vmem:[#allocation11 + $0xb4] sm:$0xff]
        %v702 = vld [vmem:[#allocation11 + $0xbc] sm:$0xf]
        %v703 = vld [vmem:[%s5] sm:$0x7]
        %v705 = vperm.slane %v703, 0
        %v706 = vperm.slane %v703, 1
        %v707 = vperm.slane %v703, 2
        %v715 = vunpack.c.l.b16 %v667
        %v716 = vunpack.c.l.b16 %v668
        %v717 = vunpack.c.l.b16 %v669
        %v718 = vunpack.c.l.b16 %v670
        %v719 = vpack.c.b16 %v716, %v715
        %v720 = vpack.c.b16 %v718, %v717
        %v755 = vunpack.c.l.b16 %v671
        %v756 = vunpack.c.h.b16 %v671
        %v757 = vunpack.c.l.b16 %v672
        %v758 = vunpack.c.l.b16 %v673
        %v759 = vunpack.c.h.b16 %v673
        %v760 = vunpack.c.l.b16 %v674
        %v761 = vunpack.c.l.b16 %v675
        %v762 = vunpack.c.h.b16 %v675
        %v763 = vunpack.c.l.b16 %v676
        %v764 = vunpack.c.l.b16 %v677
        %v765 = vunpack.c.h.b16 %v677
        %v766 = vunpack.c.l.b16 %v678
        %v767 = vunpack.c.l.b16 %v679
        %v768 = vunpack.c.h.b16 %v679
        %v769 = vunpack.c.l.b16 %v680
        %v770 = vunpack.c.l.b16 %v681
        %v771 = vunpack.c.h.b16 %v681
        %v772 = vunpack.c.l.b16 %v682
        %v773 = vunpack.c.l.b16 %v683
        %v774 = vunpack.c.h.b16 %v683
        %v775 = vunpack.c.l.b16 %v684
        %v776 = vunpack.c.l.b16 %v685
        %v777 = vunpack.c.h.b16 %v685
        %v778 = vunpack.c.l.b16 %v686
        %v779 = vunpack.c.l.b16 %v687
        %v780 = vunpack.c.h.b16 %v687
        %v781 = vunpack.c.l.b16 %v688
        %v782 = vunpack.c.l.b16 %v689
        %v783 = vunpack.c.h.b16 %v689
        %v784 = vunpack.c.l.b16 %v690
        %v785 = vunpack.c.l.b16 %v691
        %v786 = vunpack.c.h.b16 %v691
        %v787 = vunpack.c.l.b16 %v692
        %v788 = vunpack.c.l.b16 %v693
        %v789 = vunpack.c.h.b16 %v693
        %v790 = vunpack.c.l.b16 %v694
        %v791 = vunpack.c.l.b16 %v695
        %v792 = vunpack.c.h.b16 %v695
        %v793 = vunpack.c.l.b16 %v696
        %v794 = vunpack.c.l.b16 %v697
        %v795 = vunpack.c.h.b16 %v697
        %v796 = vunpack.c.l.b16 %v698
        %v797 = vunpack.c.l.b16 %v699
        %v798 = vunpack.c.h.b16 %v699
        %v799 = vunpack.c.l.b16 %v700
        %v800 = vunpack.c.l.b16 %v701
        %v801 = vunpack.c.h.b16 %v701
        %v802 = vunpack.c.l.b16 %v702
        %v803 = vpack.c.b16 %v758, %v755
        %v804 = vpack.c.b16 %v759, %v756
        %v805 = vpack.c.b16 %v760, %v757
        %v806 = vpack.c.b16 %v764, %v761
        %v807 = vpack.c.b16 %v765, %v762
        %v808 = vpack.c.b16 %v766, %v763
        %v809 = vpack.c.b16 %v770, %v767
        %v810 = vpack.c.b16 %v771, %v768
        %v811 = vpack.c.b16 %v772, %v769
        %v812 = vpack.c.b16 %v776, %v773
        %v813 = vpack.c.b16 %v777, %v774
        %v814 = vpack.c.b16 %v778, %v775
        %v815 = vpack.c.b16 %v782, %v779
        %v816 = vpack.c.b16 %v783, %v780
        %v817 = vpack.c.b16 %v784, %v781
        %v818 = vpack.c.b16 %v788, %v785
        %v819 = vpack.c.b16 %v789, %v786
        %v820 = vpack.c.b16 %v790, %v787
        %v821 = vpack.c.b16 %v794, %v791
        %v822 = vpack.c.b16 %v795, %v792
        %v823 = vpack.c.b16 %v796, %v793
        %v824 = vpack.c.b16 %v800, %v797
        %v825 = vpack.c.b16 %v801, %v798
        %v826 = vpack.c.b16 %v802, %v799
        %851 = vmatpush.bf16.msra.mxu0 %v824
        %852 = vmatpush.bf16.msra.mxu0 %v821
        %853 = vmatpush.bf16.msra.mxu0 %v818
        %854 = vmatpush.bf16.msra.mxu0 %v815
        %855 = vmatpush.bf16.msra.mxu0 %v812
        %856 = vmatpush.bf16.msra.mxu0 %v809
        %857 = vmatpush.bf16.msra.mxu0 %v806
        %858 = vmatpush.bf16.msra.mxu0 %v803
        %859 = vmatmul.bf16.gmra.mxu0 %v719
        %v860 = vpop.f32.mrf.mxu0
        %v861 = vadd.f32 %v705, %v860
        %v862 = vpop.f32.mrf.mxu0
        %v863 = vadd.f32 %v705, %v862
        %864 = vmatmul.bf16.gmra.mxu0 %v720
        %v865 = vpop.f32.mrf.mxu0
        %v866 = vadd.f32 %v705, %v865
        %v867 = vpop.f32.mrf.mxu0
        %v868 = vadd.f32 %v705, %v867
        %869 = vdwg.mxu0
        %870 = vmatpush.bf16.msra.mxu0 %v825
        %871 = vmatpush.bf16.msra.mxu0 %v822
        %872 = vmatpush.bf16.msra.mxu0 %v819
        %873 = vmatpush.bf16.msra.mxu0 %v816
        %874 = vmatpush.bf16.msra.mxu0 %v813
        %875 = vmatpush.bf16.msra.mxu0 %v810
        %876 = vmatpush.bf16.msra.mxu0 %v807
        %877 = vmatpush.bf16.msra.mxu0 %v804
        %878 = vmatmul.bf16.gmra.mxu0 %v719
        %v879 = vpop.f32.mrf.mxu0
        %v880 = vadd.f32 %v706, %v879
        %v881 = vpop.f32.mrf.mxu0
        %v882 = vadd.f32 %v706, %v881
        %883 = vmatmul.bf16.gmra.mxu0 %v720
        %v884 = vpop.f32.mrf.mxu0
        %v885 = vadd.f32 %v706, %v884
        %v886 = vpop.f32.mrf.mxu0
        %v887 = vadd.f32 %v706, %v886
        %888 = vdwg.mxu0
        %889 = vmatpush.bf16.msra.mxu0 %v826
        %890 = vmatpush.bf16.msra.mxu0 %v823
        %891 = vmatpush.bf16.msra.mxu0 %v820
        %892 = vmatpush.bf16.msra.mxu0 %v817
        %893 = vmatpush.bf16.msra.mxu0 %v814
        %894 = vmatpush.bf16.msra.mxu0 %v811
        %895 = vmatpush.bf16.msra.mxu0 %v808
        %896 = vmatpush.bf16.msra.mxu0 %v805
        %897 = vmatmul.bf16.gmra.mxu0 %v719
        %v898 = vpop.f32.mrf.mxu0
        %v899 = vadd.f32 %v707, %v898
        %v900 = vpop.f32.mrf.mxu0
        %v901 = vadd.f32 %v707, %v900
        %902 = vmatmul.bf16.gmra.mxu0 %v720
        %v903 = vpop.f32.mrf.mxu0
        %v904 = vadd.f32 %v707, %v903
        %v905 = vpop.f32.mrf.mxu0
        %v906 = vadd.f32 %v707, %v905
        %907 = vdwg.mxu0
        %v908 = vld [vmem:[%s561] sm:$0xf]
        %v909 = vld [vmem:[%s561 + $0x4] sm:$0xf]
        %v910 = vld [vmem:[%s561 + $0x8] sm:$0xf]
        %v911 = vld [vmem:[%s561 + $0xc] sm:$0xf]
        %v912 = vld [vmem:[#allocation12] sm:$0xff]
        %v913 = vld [vmem:[#allocation12 + $0x8] sm:$0xf]
        %v914 = vld [vmem:[#allocation12 + $0xc] sm:$0xff]
        %v915 = vld [vmem:[#allocation12 + $0x14] sm:$0xf]
        %v916 = vld [vmem:[#allocation12 + $0x18] sm:$0xff]
        %v917 = vld [vmem:[#allocation12 + $0x20] sm:$0xf]
        %v918 = vld [vmem:[#allocation12 + $0x24] sm:$0xff]
        %v919 = vld [vmem:[#allocation12 + $0x2c] sm:$0xf]
        %v920 = vld [vmem:[#allocation12 + $0x30] sm:$0xff]
        %v921 = vld [vmem:[#allocation12 + $0x38] sm:$0xf]
        %v922 = vld [vmem:[#allocation12 + $0x3c] sm:$0xff]
        %v923 = vld [vmem:[#allocation12 + $0x44] sm:$0xf]
        %v924 = vld [vmem:[#allocation12 + $0x48] sm:$0xff]
        %v925 = vld [vmem:[#allocation12 + $0x50] sm:$0xf]
        %v926 = vld [vmem:[#allocation12 + $0x54] sm:$0xff]
        %v927 = vld [vmem:[#allocation12 + $0x5c] sm:$0xf]
        %v928 = vld [vmem:[#allocation12 + $0x60] sm:$0xff]
        %v929 = vld [vmem:[#allocation12 + $0x68] sm:$0xf]
        %v930 = vld [vmem:[#allocation12 + $0x6c] sm:$0xff]
        %v931 = vld [vmem:[#allocation12 + $0x74] sm:$0xf]
        %v932 = vld [vmem:[#allocation12 + $0x78] sm:$0xff]
        %v933 = vld [vmem:[#allocation12 + $0x80] sm:$0xf]
        %v934 = vld [vmem:[#allocation12 + $0x84] sm:$0xff]
        %v935 = vld [vmem:[#allocation12 + $0x8c] sm:$0xf]
        %v936 = vld [vmem:[#allocation12 + $0x90] sm:$0xff]
        %v937 = vld [vmem:[#allocation12 + $0x98] sm:$0xf]
        %v938 = vld [vmem:[#allocation12 + $0x9c] sm:$0xff]
        %v939 = vld [vmem:[#allocation12 + $0xa4] sm:$0xf]
        %v940 = vld [vmem:[#allocation12 + $0xa8] sm:$0xff]
        %v941 = vld [vmem:[#allocation12 + $0xb0] sm:$0xf]
        %v942 = vld [vmem:[#allocation12 + $0xb4] sm:$0xff]
        %v943 = vld [vmem:[#allocation12 + $0xbc] sm:$0xf]
        %v944 = vld [vmem:[#allocation14] sm:$0x7]
        %v946 = vperm.slane %v944, 0
        %v947 = vperm.slane %v944, 1
        %v948 = vperm.slane %v944, 2
        %v956 = vunpack.c.l.b16 %v908
        %v957 = vunpack.c.l.b16 %v909
        %v958 = vunpack.c.l.b16 %v910
        %v959 = vunpack.c.l.b16 %v911
        %v960 = vpack.c.b16 %v957, %v956
        %v961 = vpack.c.b16 %v959, %v958
        %v996 = vunpack.c.l.b16 %v912
        %v997 = vunpack.c.h.b16 %v912
        %v998 = vunpack.c.l.b16 %v913
        %v999 = vunpack.c.l.b16 %v914
        %v1000 = vunpack.c.h.b16 %v914
        %v1001 = vunpack.c.l.b16 %v915
        %v1002 = vunpack.c.l.b16 %v916
        %v1003 = vunpack.c.h.b16 %v916
        %v1004 = vunpack.c.l.b16 %v917
        %v1005 = vunpack.c.l.b16 %v918
        %v1006 = vunpack.c.h.b16 %v918
        %v1007 = vunpack.c.l.b16 %v919
        %v1008 = vunpack.c.l.b16 %v920
        %v1009 = vunpack.c.h.b16 %v920
        %v1010 = vunpack.c.l.b16 %v921
        %v1011 = vunpack.c.l.b16 %v922
        %v1012 = vunpack.c.h.b16 %v922
        %v1013 = vunpack.c.l.b16 %v923
        %v1014 = vunpack.c.l.b16 %v924
        %v1015 = vunpack.c.h.b16 %v924
        %v1016 = vunpack.c.l.b16 %v925
        %v1017 = vunpack.c.l.b16 %v926
        %v1018 = vunpack.c.h.b16 %v926
        %v1019 = vunpack.c.l.b16 %v927
        %v1020 = vunpack.c.l.b16 %v928
        %v1021 = vunpack.c.h.b16 %v928
        %v1022 = vunpack.c.l.b16 %v929
        %v1023 = vunpack.c.l.b16 %v930
        %v1024 = vunpack.c.h.b16 %v930
        %v1025 = vunpack.c.l.b16 %v931
        %v1026 = vunpack.c.l.b16 %v932
        %v1027 = vunpack.c.h.b16 %v932
        %v1028 = vunpack.c.l.b16 %v933
        %v1029 = vunpack.c.l.b16 %v934
        %v1030 = vunpack.c.h.b16 %v934
        %v1031 = vunpack.c.l.b16 %v935
        %v1032 = vunpack.c.l.b16 %v936
        %v1033 = vunpack.c.h.b16 %v936
        %v1034 = vunpack.c.l.b16 %v937
        %v1035 = vunpack.c.l.b16 %v938
        %v1036 = vunpack.c.h.b16 %v938
        %v1037 = vunpack.c.l.b16 %v939
        %v1038 = vunpack.c.l.b16 %v940
        %v1039 = vunpack.c.h.b16 %v940
        %v1040 = vunpack.c.l.b16 %v941
        %v1041 = vunpack.c.l.b16 %v942
        %v1042 = vunpack.c.h.b16 %v942
        %v1043 = vunpack.c.l.b16 %v943
        %v1044 = vpack.c.b16 %v999, %v996
        %v1045 = vpack.c.b16 %v1000, %v997
        %v1046 = vpack.c.b16 %v1001, %v998
        %v1047 = vpack.c.b16 %v1005, %v1002
        %v1048 = vpack.c.b16 %v1006, %v1003
        %v1049 = vpack.c.b16 %v1007, %v1004
        %v1050 = vpack.c.b16 %v1011, %v1008
        %v1051 = vpack.c.b16 %v1012, %v1009
        %v1052 = vpack.c.b16 %v1013, %v1010
        %v1053 = vpack.c.b16 %v1017, %v1014
        %v1054 = vpack.c.b16 %v1018, %v1015
        %v1055 = vpack.c.b16 %v1019, %v1016
        %v1056 = vpack.c.b16 %v1023, %v1020
        %v1057 = vpack.c.b16 %v1024, %v1021
        %v1058 = vpack.c.b16 %v1025, %v1022
        %v1059 = vpack.c.b16 %v1029, %v1026
        %v1060 = vpack.c.b16 %v1030, %v1027
        %v1061 = vpack.c.b16 %v1031, %v1028
        %v1062 = vpack.c.b16 %v1035, %v1032
        %v1063 = vpack.c.b16 %v1036, %v1033
        %v1064 = vpack.c.b16 %v1037, %v1034
        %v1065 = vpack.c.b16 %v1041, %v1038
        %v1066 = vpack.c.b16 %v1042, %v1039
        %v1067 = vpack.c.b16 %v1043, %v1040
        %1092 = vmatpush.bf16.msra.mxu0 %v1065
        %1093 = vmatpush.bf16.msra.mxu0 %v1062
        %1094 = vmatpush.bf16.msra.mxu0 %v1059
        %1095 = vmatpush.bf16.msra.mxu0 %v1056
        %1096 = vmatpush.bf16.msra.mxu0 %v1053
        %1097 = vmatpush.bf16.msra.mxu0 %v1050
        %1098 = vmatpush.bf16.msra.mxu0 %v1047
        %1099 = vmatpush.bf16.msra.mxu0 %v1044
        %1100 = vmatmul.bf16.gmra.mxu0 %v960
        %v1101 = vpop.f32.mrf.mxu0
        %v1102 = vadd.f32 %v946, %v1101
        %v1103 = vpop.f32.mrf.mxu0
        %v1104 = vadd.f32 %v946, %v1103
        %1105 = vmatmul.bf16.gmra.mxu0 %v961
        %v1106 = vpop.f32.mrf.mxu0
        %v1107 = vadd.f32 %v946, %v1106
        %v1108 = vpop.f32.mrf.mxu0
        %v1109 = vadd.f32 %v946, %v1108
        %1110 = vdwg.mxu0
        %1111 = vmatpush.bf16.msra.mxu0 %v1066
        %1112 = vmatpush.bf16.msra.mxu0 %v1063
        %1113 = vmatpush.bf16.msra.mxu0 %v1060
        %1114 = vmatpush.bf16.msra.mxu0 %v1057
        %1115 = vmatpush.bf16.msra.mxu0 %v1054
        %1116 = vmatpush.bf16.msra.mxu0 %v1051
        %1117 = vmatpush.bf16.msra.mxu0 %v1048
        %1118 = vmatpush.bf16.msra.mxu0 %v1045
        %1119 = vmatmul.bf16.gmra.mxu0 %v960
        %v1120 = vpop.f32.mrf.mxu0
        %v1121 = vadd.f32 %v947, %v1120
        %v1122 = vpop.f32.mrf.mxu0
        %v1123 = vadd.f32 %v947, %v1122
        %1124 = vmatmul.bf16.gmra.mxu0 %v961
        %v1125 = vpop.f32.mrf.mxu0
        %v1126 = vadd.f32 %v947, %v1125
        %v1127 = vpop.f32.mrf.mxu0
        %v1128 = vadd.f32 %v947, %v1127
        %1129 = vdwg.mxu0
        %1130 = vmatpush.bf16.msra.mxu0 %v1067
        %1131 = vmatpush.bf16.msra.mxu0 %v1064
        %1132 = vmatpush.bf16.msra.mxu0 %v1061
        %1133 = vmatpush.bf16.msra.mxu0 %v1058
        %1134 = vmatpush.bf16.msra.mxu0 %v1055
        %1135 = vmatpush.bf16.msra.mxu0 %v1052
        %1136 = vmatpush.bf16.msra.mxu0 %v1049
        %1137 = vmatpush.bf16.msra.mxu0 %v1046
        %1138 = vmatmul.bf16.gmra.mxu0 %v960
        %v1139 = vpop.f32.mrf.mxu0
        %v1140 = vadd.f32 %v948, %v1139
        %v1141 = vpop.f32.mrf.mxu0
        %v1142 = vadd.f32 %v948, %v1141
        %1143 = vmatmul.bf16.gmra.mxu0 %v961
        %v1144 = vpop.f32.mrf.mxu0
        %v1145 = vadd.f32 %v948, %v1144
        %v1146 = vpop.f32.mrf.mxu0
        %v1147 = vadd.f32 %v948, %v1146
        %1148 = vdwg.mxu0
        %v1149 = vpack.c.bf16 %v880, %v861
        %v1150 = vpack.c.bf16 %v899, %v899
        %v1151 = vpack.c.bf16 %v882, %v863
        %v1152 = vpack.c.bf16 %v901, %v901
        %v1153 = vpack.c.bf16 %v885, %v866
        %v1154 = vpack.c.bf16 %v904, %v904
        %v1155 = vpack.c.bf16 %v887, %v868
        %v1156 = vpack.c.bf16 %v906, %v906
        %1157 = vst [vmem:[#allocation2] sm:$0xff] %v1149
        %1158 = vst [vmem:[#allocation2 + $0x8] sm:$0xf] %v1150
        %1159 = vst [vmem:[#allocation2 + $0xc] sm:$0xff] %v1151
        %1160 = vst [vmem:[#allocation2 + $0x14] sm:$0xf] %v1152
        %1161 = vst [vmem:[#allocation2 + $0x18] sm:$0xff] %v1153
        %1162 = vst [vmem:[#allocation2 + $0x20] sm:$0xf] %v1154
        %1163 = vst [vmem:[#allocation2 + $0x24] sm:$0xff] %v1155
        %1164 = vst [vmem:[#allocation2 + $0x2c] sm:$0xf] %v1156
        %v1165 = vpack.c.bf16 %v1121, %v1102
        %v1166 = vpack.c.bf16 %v1140, %v1140
        %v1167 = vpack.c.bf16 %v1123, %v1104
        %v1168 = vpack.c.bf16 %v1142, %v1142
        %v1169 = vpack.c.bf16 %v1126, %v1107
        %v1170 = vpack.c.bf16 %v1145, %v1145
        %v1171 = vpack.c.bf16 %v1128, %v1109
        %v1172 = vpack.c.bf16 %v1147, %v1147
        %1173 = vst [vmem:[#allocation3] sm:$0xff] %v1165
        %1174 = vst [vmem:[#allocation3 + $0x8] sm:$0xf] %v1166
        %1175 = vst [vmem:[#allocation3 + $0xc] sm:$0xff] %v1167
        %1176 = vst [vmem:[#allocation3 + $0x14] sm:$0xf] %v1168
        %1177 = vst [vmem:[#allocation3 + $0x18] sm:$0xff] %v1169
        %1178 = vst [vmem:[#allocation3 + $0x20] sm:$0xf] %v1170
        %1179 = vst [vmem:[#allocation3 + $0x24] sm:$0xff] %v1171
        %1180 = vst [vmem:[#allocation3 + $0x2c] sm:$0xf] %v1172
        %v1181 = vld [vmem:[#allocation15] sm:$0xff]
        %v1182 = vld [vmem:[#allocation15 + $0x8] sm:$0xf]
        %v1183 = vld [vmem:[#allocation15 + $0xc] sm:$0xff]
        %v1184 = vld [vmem:[#allocation15 + $0x14] sm:$0xf]
        %v1185 = vld [vmem:[#allocation15 + $0x18] sm:$0xff]
        %v1186 = vld [vmem:[#allocation15 + $0x20] sm:$0xf]
        %v1187 = vld [vmem:[#allocation15 + $0x24] sm:$0xff]
        %v1188 = vld [vmem:[#allocation15 + $0x2c] sm:$0xf]
        %v1189 = vld [vmem:[#allocation15 + $0x30] sm:$0xff]
        %v1190 = vld [vmem:[#allocation15 + $0x38] sm:$0xf]
        %v1191 = vld [vmem:[#allocation15 + $0x3c] sm:$0xff]
        %v1192 = vld [vmem:[#allocation15 + $0x44] sm:$0xf]
        %v1193 = vld [vmem:[#allocation15 + $0x48] sm:$0xff]
        %v1194 = vld [vmem:[#allocation15 + $0x50] sm:$0xf]
        %v1195 = vld [vmem:[#allocation15 + $0x54] sm:$0xff]
        %v1196 = vld [vmem:[#allocation15 + $0x5c] sm:$0xf]
        %v1197 = vld [vmem:[#allocation15 + $0x60] sm:$0xff]
        %v1198 = vld [vmem:[#allocation15 + $0x68] sm:$0xf]
        %v1199 = vld [vmem:[#allocation15 + $0x6c] sm:$0xff]
        %v1200 = vld [vmem:[#allocation15 + $0x74] sm:$0xf]
        %v1201 = vld [vmem:[#allocation15 + $0x78] sm:$0xff]
        %v1202 = vld [vmem:[#allocation15 + $0x80] sm:$0xf]
        %v1203 = vld [vmem:[#allocation15 + $0x84] sm:$0xff]
        %v1204 = vld [vmem:[#allocation15 + $0x8c] sm:$0xf]
        %v1205 = vld [vmem:[#allocation15 + $0x90] sm:$0xff]
        %v1206 = vld [vmem:[#allocation15 + $0x98] sm:$0xf]
        %v1207 = vld [vmem:[#allocation15 + $0x9c] sm:$0xff]
        %v1208 = vld [vmem:[#allocation15 + $0xa4] sm:$0xf]
        %v1209 = vld [vmem:[#allocation15 + $0xa8] sm:$0xff]
        %v1210 = vld [vmem:[#allocation15 + $0xb0] sm:$0xf]
        %v1211 = vld [vmem:[#allocation15 + $0xb4] sm:$0xff]
        %v1212 = vld [vmem:[#allocation15 + $0xbc] sm:$0xf]
        %v1213 = vld [vmem:[#allocation17] sm:$0xff]
        %v1214 = vld [vmem:[#allocation17 + $0x8] sm:$0xf]
        %v1215 = vld [vmem:[#allocation17 + $0xc] sm:$0xff]
        %v1216 = vld [vmem:[#allocation17 + $0x14] sm:$0xf]
        %v1217 = vld [vmem:[#allocation17 + $0x18] sm:$0xff]
        %v1218 = vld [vmem:[#allocation17 + $0x20] sm:$0xf]
        %v1219 = vld [vmem:[#allocation17 + $0x24] sm:$0xff]
        %v1220 = vld [vmem:[#allocation17 + $0x2c] sm:$0xf]
        %v1221 = vld [vmem:[#allocation17 + $0x30] sm:$0xff]
        %v1222 = vld [vmem:[#allocation17 + $0x38] sm:$0xf]
        %v1223 = vld [vmem:[#allocation17 + $0x3c] sm:$0xff]
        %v1224 = vld [vmem:[#allocation17 + $0x44] sm:$0xf]
        %v1225 = vld [vmem:[#allocation17 + $0x48] sm:$0xff]
        %v1226 = vld [vmem:[#allocation17 + $0x50] sm:$0xf]
        %v1227 = vld [vmem:[#allocation17 + $0x54] sm:$0xff]
        %v1228 = vld [vmem:[#allocation17 + $0x5c] sm:$0xf]
        %v1229 = vld [vmem:[#allocation17 + $0x60] sm:$0xff]
        %v1230 = vld [vmem:[#allocation17 + $0x68] sm:$0xf]
        %v1231 = vld [vmem:[#allocation17 + $0x6c] sm:$0xff]
        %v1232 = vld [vmem:[#allocation17 + $0x74] sm:$0xf]
        %v1233 = vld [vmem:[#allocation17 + $0x78] sm:$0xff]
        %v1234 = vld [vmem:[#allocation17 + $0x80] sm:$0xf]
        %v1235 = vld [vmem:[#allocation17 + $0x84] sm:$0xff]
        %v1236 = vld [vmem:[#allocation17 + $0x8c] sm:$0xf]
        %v1237 = vld [vmem:[#allocation17 + $0x90] sm:$0xff]
        %v1238 = vld [vmem:[#allocation17 + $0x98] sm:$0xf]
        %v1239 = vld [vmem:[#allocation17 + $0x9c] sm:$0xff]
        %v1240 = vld [vmem:[#allocation17 + $0xa4] sm:$0xf]
        %v1241 = vld [vmem:[#allocation17 + $0xa8] sm:$0xff]
        %v1242 = vld [vmem:[#allocation17 + $0xb0] sm:$0xf]
        %v1243 = vld [vmem:[#allocation17 + $0xb4] sm:$0xff]
        %v1244 = vld [vmem:[#allocation17 + $0xbc] sm:$0xf]
        %v1245 = vld [vmem:[#allocation18] sm:$0x1]
        %v1246 = vld [vmem:[#allocation20] sm:$0x1]
        %v1247 = vld [vmem:[%s2] sm:$0xff]
        %s1248 = smul.u32 %s41, 4
        %s1249 = ssub.s32 1, %s41
        %s1250 = smul.u32 %s1249, 4
        %v1251 = vld [vmem:[#allocation4] sm:$0xff]
        %v1252 = vld [vmem:[#allocation5] sm:$0xff]
        %v1253 = vld [vmem:[#allocation2] sm:$0xff]
        %v1254 = vld [vmem:[#allocation2 + $0x8] sm:$0xf]
        %s1255 = scalar_lea.vmem [#allocation3], 36
        %v1256 = vld [vmem:[%s1255] sm:$0xff]
        %v1257 = vld [vmem:[%s1255 + $0x8] sm:$0xf]
        %v1258 = vstv %s1248
        %vm1259 = vcmp.lt.s32.totalorder %v1258, %v1247
        %v1260 = vsel %vm1259, 1, 0
        %v1261 = vcvt.s32.f32 %v1260
        %s1262 = sadd.s32 %s1250, 3
        %v1263 = vstv %s1262
        %vm1264 = vcmp.lt.s32.totalorder %v1263, %v1247
        %v1265 = vsel %vm1264, 1, 0
        %v1266 = vcvt.s32.f32 %v1265
        %v1267 = vpack.c.bf16 %v1251, %v1251
        %v1300 = vunpack.c.l.b16 %v1181
        %v1301 = vunpack.c.h.b16 %v1181
        %v1302 = vunpack.c.l.b16 %v1182
        %v1303 = vunpack.c.l.b16 %v1183
        %v1304 = vunpack.c.h.b16 %v1183
        %v1305 = vunpack.c.l.b16 %v1184
        %v1306 = vunpack.c.l.b16 %v1185
        %v1307 = vunpack.c.h.b16 %v1185
        %v1308 = vunpack.c.l.b16 %v1186
        %v1309 = vunpack.c.l.b16 %v1187
        %v1310 = vunpack.c.h.b16 %v1187
        %v1311 = vunpack.c.l.b16 %v1188
        %v1312 = vunpack.c.l.b16 %v1189
        %v1313 = vunpack.c.h.b16 %v1189
        %v1314 = vunpack.c.l.b16 %v1190
        %v1315 = vunpack.c.l.b16 %v1191
        %v1316 = vunpack.c.h.b16 %v1191
        %v1317 = vunpack.c.l.b16 %v1192
        %v1318 = vunpack.c.l.b16 %v1193
        %v1319 = vunpack.c.h.b16 %v1193
        %v1320 = vunpack.c.l.b16 %v1194
        %v1321 = vunpack.c.l.b16 %v1195
        %v1322 = vunpack.c.h.b16 %v1195
        %v1323 = vunpack.c.l.b16 %v1196
        %v1324 = vunpack.c.l.b16 %v1197
        %v1325 = vunpack.c.h.b16 %v1197
        %v1326 = vunpack.c.l.b16 %v1198
        %v1327 = vunpack.c.l.b16 %v1199
        %v1328 = vunpack.c.h.b16 %v1199
        %v1329 = vunpack.c.l.b16 %v1200
        %v1330 = vunpack.c.l.b16 %v1201
        %v1331 = vunpack.c.h.b16 %v1201
        %v1332 = vunpack.c.l.b16 %v1202
        %v1333 = vunpack.c.l.b16 %v1203
        %v1334 = vunpack.c.h.b16 %v1203
        %v1335 = vunpack.c.l.b16 %v1204
        %v1336 = vunpack.c.l.b16 %v1205
        %v1337 = vunpack.c.h.b16 %v1205
        %v1338 = vunpack.c.l.b16 %v1206
        %v1339 = vunpack.c.l.b16 %v1207
        %v1340 = vunpack.c.h.b16 %v1207
        %v1341 = vunpack.c.l.b16 %v1208
        %v1342 = vunpack.c.l.b16 %v1209
        %v1343 = vunpack.c.h.b16 %v1209
        %v1344 = vunpack.c.l.b16 %v1210
        %v1345 = vunpack.c.l.b16 %v1211
        %v1346 = vunpack.c.h.b16 %v1211
        %v1347 = vunpack.c.l.b16 %v1212
        %v1348 = vpack.c.b16 %v1303, %v1300
        %v1349 = vpack.c.b16 %v1304, %v1301
        %v1350 = vpack.c.b16 %v1305, %v1302
        %v1351 = vpack.c.b16 %v1309, %v1306
        %v1352 = vpack.c.b16 %v1310, %v1307
        %v1353 = vpack.c.b16 %v1311, %v1308
        %v1354 = vpack.c.b16 %v1315, %v1312
        %v1355 = vpack.c.b16 %v1316, %v1313
        %v1356 = vpack.c.b16 %v1317, %v1314
        %v1357 = vpack.c.b16 %v1321, %v1318
        %v1358 = vpack.c.b16 %v1322, %v1319
        %v1359 = vpack.c.b16 %v1323, %v1320
        %v1360 = vpack.c.b16 %v1327, %v1324
        %v1361 = vpack.c.b16 %v1328, %v1325
        %v1362 = vpack.c.b16 %v1329, %v1326
        %v1363 = vpack.c.b16 %v1333, %v1330
        %v1364 = vpack.c.b16 %v1334, %v1331
        %v1365 = vpack.c.b16 %v1335, %v1332
        %v1366 = vpack.c.b16 %v1339, %v1336
        %v1367 = vpack.c.b16 %v1340, %v1337
        %v1368 = vpack.c.b16 %v1341, %v1338
        %v1369 = vpack.c.b16 %v1345, %v1342
        %v1370 = vpack.c.b16 %v1346, %v1343
        %v1371 = vpack.c.b16 %v1347, %v1344
        %1396 = vmatpush.bf16.msra.mxu0 %v1369
        %1397 = vmatpush.bf16.msra.mxu0 %v1366
        %1398 = vmatpush.bf16.msra.mxu0 %v1363
        %1399 = vmatpush.bf16.msra.mxu0 %v1360
        %1400 = vmatpush.bf16.msra.mxu0 %v1357
        %1401 = vmatpush.bf16.msra.mxu0 %v1354
        %1402 = vmatpush.bf16.msra.mxu0 %v1351
        %1403 = vmatpush.bf16.msra.mxu0 %v1348
        %1404 = vmatmul.bf16.gmra.mxu0 %v1267
        %v1405 = vpop.f32.mrf.mxu0
        %v1406 = vadd.f32 0.0, %v1405
        %v1407 = vpop.f32.mrf.mxu0
        %1408 = vdwg.mxu0
        %1409 = vmatpush.bf16.msra.mxu0 %v1370
        %1410 = vmatpush.bf16.msra.mxu0 %v1367
        %1411 = vmatpush.bf16.msra.mxu0 %v1364
        %1412 = vmatpush.bf16.msra.mxu0 %v1361
        %1413 = vmatpush.bf16.msra.mxu0 %v1358
        %1414 = vmatpush.bf16.msra.mxu0 %v1355
        %1415 = vmatpush.bf16.msra.mxu0 %v1352
        %1416 = vmatpush.bf16.msra.mxu0 %v1349
        %1417 = vmatmul.bf16.gmra.mxu0 %v1267
        %v1418 = vpop.f32.mrf.mxu0
        %v1419 = vadd.f32 0.0, %v1418
        %v1420 = vpop.f32.mrf.mxu0
        %1421 = vdwg.mxu0
        %1422 = vmatpush.bf16.msra.mxu0 %v1371
        %1423 = vmatpush.bf16.msra.mxu0 %v1368
        %1424 = vmatpush.bf16.msra.mxu0 %v1365
        %1425 = vmatpush.bf16.msra.mxu0 %v1362
        %1426 = vmatpush.bf16.msra.mxu0 %v1359
        %1427 = vmatpush.bf16.msra.mxu0 %v1356
        %1428 = vmatpush.bf16.msra.mxu0 %v1353
        %1429 = vmatpush.bf16.msra.mxu0 %v1350
        %1430 = vmatmul.bf16.gmra.mxu0 %v1267
        %v1431 = vpop.f32.mrf.mxu0
        %v1432 = vadd.f32 0.0, %v1431
        %v1433 = vpop.f32.mrf.mxu0
        %1434 = vdwg.mxu0
        %v1435 = vunpack.c.l.bf16 %v1253
        %v1436 = vadd.f32 %v1435, %v1406
        %v1437 = vxor.u32 %v1436, 2147483648
        %v1438 = vmul.f32 %v1437, 1.442695
        %v1439 = vpow.pop %v1438
        %v1440 = vadd.f32 %v1439, 1.0
        %v1441 = vrcp.pop %v1440
        %v1442 = vmul.f32 %v1440, %v1441
        %v1443 = vsub.f32 1.0, %v1442
        %v1444 = vmul.f32 %v1441, %v1443
        %v1445 = vadd.f32 %v1441, %v1444
        %vm1446 = vweird.f32 %v1440
        %vm1447 = vweird.f32 %v1441
        %vm1448 = vmor %vm1446, %vm1447
        %v1449 = vsel %vm1448, %v1441, %v1445
        %v1450 = vand.u32 2147483647, %v1440
        %vm1451 = vcmp.eq.f32.partialorder %v1450, 8.507059e+37
        %v1452 = vand.u32 %v1440, 2147483648
        %v1453 = vor.u32 1.1754944e-38, %v1452
        %v1454 = vsel %vm1451, %v1453, %v1449
        %v1455 = vmul.f32 1.0, %v1454
        %v1457 = vrot.slane %v1253, 4
        %v1459 = vunpack.c.l.bf16 %v1457
        %v1460 = vadd.f32 %v1459, %v1419
        %v1461 = vxor.u32 %v1460, 2147483648
        %v1462 = vmul.f32 %v1461, 1.442695
        %v1463 = vpow.pop %v1462
        %v1464 = vadd.f32 %v1463, 1.0
        %v1465 = vrcp.pop %v1464
        %v1466 = vmul.f32 %v1464, %v1465
        %v1467 = vsub.f32 1.0, %v1466
        %v1468 = vmul.f32 %v1465, %v1467
        %v1469 = vadd.f32 %v1465, %v1468
        %vm1470 = vweird.f32 %v1464
        %vm1471 = vweird.f32 %v1465
        %vm1472 = vmor %vm1470, %vm1471
        %v1473 = vsel %vm1472, %v1465, %v1469
        %v1474 = vand.u32 2147483647, %v1464
        %vm1475 = vcmp.eq.f32.partialorder %v1474, 8.507059e+37
        %v1476 = vand.u32 %v1464, 2147483648
        %v1477 = vor.u32 1.1754944e-38, %v1476
        %v1478 = vsel %vm1475, %v1477, %v1473
        %v1479 = vmul.f32 1.0, %v1478
        %v1481 = vperm.slane %v1245, 0
        %v1483 = vadd.f32 %v1432, %v1481
        %v1484 = vmul.f32 %v1455, %v1483
        %v1485 = vunpack.c.l.bf16 %v1254
        %v1486 = vadd.f32 %v1485, %v1484
        %v1487 = vtanh.pop %v1486
        %v1488 = vsub.f32 1.0, %v1479
        %v1489 = vmul.f32 %v1488, %v1487
        %v1490 = vmul.f32 %v1479, %v1251
        %v1491 = vadd.f32 %v1489, %v1490
        %v1492 = vpack.c.bf16 %v1252, %v1252
        %v1525 = vunpack.c.l.b16 %v1213
        %v1526 = vunpack.c.h.b16 %v1213
        %v1527 = vunpack.c.l.b16 %v1214
        %v1528 = vunpack.c.l.b16 %v1215
        %v1529 = vunpack.c.h.b16 %v1215
        %v1530 = vunpack.c.l.b16 %v1216
        %v1531 = vunpack.c.l.b16 %v1217
        %v1532 = vunpack.c.h.b16 %v1217
        %v1533 = vunpack.c.l.b16 %v1218
        %v1534 = vunpack.c.l.b16 %v1219
        %v1535 = vunpack.c.h.b16 %v1219
        %v1536 = vunpack.c.l.b16 %v1220
        %v1537 = vunpack.c.l.b16 %v1221
        %v1538 = vunpack.c.h.b16 %v1221
        %v1539 = vunpack.c.l.b16 %v1222
        %v1540 = vunpack.c.l.b16 %v1223
        %v1541 = vunpack.c.h.b16 %v1223
        %v1542 = vunpack.c.l.b16 %v1224
        %v1543 = vunpack.c.l.b16 %v1225
        %v1544 = vunpack.c.h.b16 %v1225
        %v1545 = vunpack.c.l.b16 %v1226
        %v1546 = vunpack.c.l.b16 %v1227
        %v1547 = vunpack.c.h.b16 %v1227
        %v1548 = vunpack.c.l.b16 %v1228
        %v1549 = vunpack.c.l.b16 %v1229
        %v1550 = vunpack.c.h.b16 %v1229
        %v1551 = vunpack.c.l.b16 %v1230
        %v1552 = vunpack.c.l.b16 %v1231
        %v1553 = vunpack.c.h.b16 %v1231
        %v1554 = vunpack.c.l.b16 %v1232
        %v1555 = vunpack.c.l.b16 %v1233
        %v1556 = vunpack.c.h.b16 %v1233
        %v1557 = vunpack.c.l.b16 %v1234
        %v1558 = vunpack.c.l.b16 %v1235
        %v1559 = vunpack.c.h.b16 %v1235
        %v1560 = vunpack.c.l.b16 %v1236
        %v1561 = vunpack.c.l.b16 %v1237
        %v1562 = vunpack.c.h.b16 %v1237
        %v1563 = vunpack.c.l.b16 %v1238
        %v1564 = vunpack.c.l.b16 %v1239
        %v1565 = vunpack.c.h.b16 %v1239
        %v1566 = vunpack.c.l.b16 %v1240
        %v1567 = vunpack.c.l.b16 %v1241
        %v1568 = vunpack.c.h.b16 %v1241
        %v1569 = vunpack.c.l.b16 %v1242
        %v1570 = vunpack.c.l.b16 %v1243
        %v1571 = vunpack.c.h.b16 %v1243
        %v1572 = vunpack.c.l.b16 %v1244
        %v1573 = vpack.c.b16 %v1528, %v1525
        %v1574 = vpack.c.b16 %v1529, %v1526
        %v1575 = vpack.c.b16 %v1530, %v1527
        %v1576 = vpack.c.b16 %v1534, %v1531
        %v1577 = vpack.c.b16 %v1535, %v1532
        %v1578 = vpack.c.b16 %v1536, %v1533
        %v1579 = vpack.c.b16 %v1540, %v1537
        %v1580 = vpack.c.b16 %v1541, %v1538
        %v1581 = vpack.c.b16 %v1542, %v1539
        %v1582 = vpack.c.b16 %v1546, %v1543
        %v1583 = vpack.c.b16 %v1547, %v1544
        %v1584 = vpack.c.b16 %v1548, %v1545
        %v1585 = vpack.c.b16 %v1552, %v1549
        %v1586 = vpack.c.b16 %v1553, %v1550
        %v1587 = vpack.c.b16 %v1554, %v1551
        %v1588 = vpack.c.b16 %v1558, %v1555
        %v1589 = vpack.c.b16 %v1559, %v1556
        %v1590 = vpack.c.b16 %v1560, %v1557
        %v1591 = vpack.c.b16 %v1564, %v1561
        %v1592 = vpack.c.b16 %v1565, %v1562
        %v1593 = vpack.c.b16 %v1566, %v1563
        %v1594 = vpack.c.b16 %v1570, %v1567
        %v1595 = vpack.c.b16 %v1571, %v1568
        %v1596 = vpack.c.b16 %v1572, %v1569
        %1621 = vmatpush.bf16.msra.mxu0 %v1594
        %1622 = vmatpush.bf16.msra.mxu0 %v1591
        %1623 = vmatpush.bf16.msra.mxu0 %v1588
        %1624 = vmatpush.bf16.msra.mxu0 %v1585
        %1625 = vmatpush.bf16.msra.mxu0 %v1582
        %1626 = vmatpush.bf16.msra.mxu0 %v1579
        %1627 = vmatpush.bf16.msra.mxu0 %v1576
        %1628 = vmatpush.bf16.msra.mxu0 %v1573
        %1629 = vmatmul.bf16.gmra.mxu0 %v1492
        %v1630 = vpop.f32.mrf.mxu0
        %v1631 = vadd.f32 0.0, %v1630
        %v1632 = vpop.f32.mrf.mxu0
        %1633 = vdwg.mxu0
        %1634 = vmatpush.bf16.msra.mxu0 %v1595
        %1635 = vmatpush.bf16.msra.mxu0 %v1592
        %1636 = vmatpush.bf16.msra.mxu0 %v1589
        %1637 = vmatpush.bf16.msra.mxu0 %v1586
        %1638 = vmatpush.bf16.msra.mxu0 %v1583
        %1639 = vmatpush.bf16.msra.mxu0 %v1580
        %1640 = vmatpush.bf16.msra.mxu0 %v1577
        %1641 = vmatpush.bf16.msra.mxu0 %v1574
        %1642 = vmatmul.bf16.gmra.mxu0 %v1492
        %v1643 = vpop.f32.mrf.mxu0
        %v1644 = vadd.f32 0.0, %v1643
        %v1645 = vpop.f32.mrf.mxu0
        %1646 = vdwg.mxu0
        %1647 = vmatpush.bf16.msra.mxu0 %v1596
        %1648 = vmatpush.bf16.msra.mxu0 %v1593
        %1649 = vmatpush.bf16.msra.mxu0 %v1590
        %1650 = vmatpush.bf16.msra.mxu0 %v1587
        %1651 = vmatpush.bf16.msra.mxu0 %v1584
        %1652 = vmatpush.bf16.msra.mxu0 %v1581
        %1653 = vmatpush.bf16.msra.mxu0 %v1578
        %1654 = vmatpush.bf16.msra.mxu0 %v1575
        %1655 = vmatmul.bf16.gmra.mxu0 %v1492
        %v1656 = vpop.f32.mrf.mxu0
        %v1657 = vadd.f32 0.0, %v1656
        %v1658 = vpop.f32.mrf.mxu0
        %1659 = vdwg.mxu0
        %v1660 = vunpack.c.l.bf16 %v1256
        %v1661 = vadd.f32 %v1660, %v1631
        %v1662 = vxor.u32 %v1661, 2147483648
        %v1663 = vmul.f32 %v1662, 1.442695
        %v1664 = vpow.pop %v1663
        %v1665 = vadd.f32 %v1664, 1.0
        %v1666 = vrcp.pop %v1665
        %v1667 = vmul.f32 %v1665, %v1666
        %v1668 = vsub.f32 1.0, %v1667
        %v1669 = vmul.f32 %v1666, %v1668
        %v1670 = vadd.f32 %v1666, %v1669
        %vm1671 = vweird.f32 %v1665
        %vm1672 = vweird.f32 %v1666
        %vm1673 = vmor %vm1671, %vm1672
        %v1674 = vsel %vm1673, %v1666, %v1670
        %v1675 = vand.u32 2147483647, %v1665
        %vm1676 = vcmp.eq.f32.partialorder %v1675, 8.507059e+37
        %v1677 = vand.u32 %v1665, 2147483648
        %v1678 = vor.u32 1.1754944e-38, %v1677
        %v1679 = vsel %vm1676, %v1678, %v1674
        %v1680 = vmul.f32 1.0, %v1679
        %v1682 = vrot.slane %v1256, 4
        %v1684 = vunpack.c.l.bf16 %v1682
        %v1685 = vadd.f32 %v1684, %v1644
        %v1686 = vxor.u32 %v1685, 2147483648
        %v1687 = vmul.f32 %v1686, 1.442695
        %v1688 = vpow.pop %v1687
        %v1689 = vadd.f32 %v1688, 1.0
        %v1690 = vrcp.pop %v1689
        %v1691 = vmul.f32 %v1689, %v1690
        %v1692 = vsub.f32 1.0, %v1691
        %v1693 = vmul.f32 %v1690, %v1692
        %v1694 = vadd.f32 %v1690, %v1693
        %vm1695 = vweird.f32 %v1689
        %vm1696 = vweird.f32 %v1690
        %vm1697 = vmor %vm1695, %vm1696
        %v1698 = vsel %vm1697, %v1690, %v1694
        %v1699 = vand.u32 2147483647, %v1689
        %vm1700 = vcmp.eq.f32.partialorder %v1699, 8.507059e+37
        %v1701 = vand.u32 %v1689, 2147483648
        %v1702 = vor.u32 1.1754944e-38, %v1701
        %v1703 = vsel %vm1700, %v1702, %v1698
        %v1704 = vmul.f32 1.0, %v1703
        %v1706 = vperm.slane %v1246, 0
        %v1708 = vadd.f32 %v1657, %v1706
        %v1709 = vmul.f32 %v1680, %v1708
        %v1710 = vunpack.c.l.bf16 %v1257
        %v1711 = vadd.f32 %v1710, %v1709
        %v1712 = vtanh.pop %v1711
        %v1713 = vsub.f32 1.0, %v1704
        %v1714 = vmul.f32 %v1713, %v1712
        %v1715 = vmul.f32 %v1704, %v1252
        %v1716 = vadd.f32 %v1714, %v1715
        %1718 = vset.pattern.permute.xlu0 0
        %1719 = vperm.xlu0 %1718, %v1261
        %v1720 = vpop.permute.xlu0 %1719
        %v1722 = vmul.f32 %v1720, %v1491
        %1723 = vst [vmem:[%s642] sm:$0xff] %v1722
        %1725 = vset.pattern.permute.xlu0 0
        %1726 = vperm.xlu0 %1725, %v1266
        %v1727 = vpop.permute.xlu0 %1726
        %v1729 = vmul.f32 %v1727, %v1716
        %s1730 = scalar_lea.vmem %s649, 24 [#allocation22]
        %1731 = vst [vmem:[%s1730] sm:$0xff] %v1729
        %v1732 = vsub.f32 1.0, %v1261
        %1734 = vset.pattern.permute.xlu0 0
        %1735 = vperm.xlu0 %1734, %v1732
        %v1736 = vpop.permute.xlu0 %1735
        %v1738 = vmul.f32 %v1736, %v1251
        %v1739 = vadd.f32 %v1722, %v1738
        %v1740 = vsub.f32 1.0, %v1266
        %1742 = vset.pattern.permute.xlu0 0
        %1743 = vperm.xlu0 %1742, %v1740
        %v1744 = vpop.permute.xlu0 %1743
        %v1746 = vmul.f32 %v1744, %v1252
        %v1747 = vadd.f32 %v1729, %v1746
        %s1748 = scalar_lea.vmem [#allocation2], 12
        %v1749 = vld [vmem:[%s1748] sm:$0xff]
        %v1750 = vld [vmem:[%s1748 + $0x8] sm:$0xf]
        %s1751 = scalar_lea.vmem [#allocation3], 24
        %v1752 = vld [vmem:[%s1751] sm:$0xff]
        %v1753 = vld [vmem:[%s1751 + $0x8] sm:$0xf]
        %s1754 = sadd.s32 %s1248, 1
        %v1755 = vstv %s1754
        %vm1756 = vcmp.lt.s32.totalorder %v1755, %v1247
        %v1757 = vsel %vm1756, 1, 0
        %v1758 = vcvt.s32.f32 %v1757
        %s1759 = sadd.s32 %s1250, 2
        %v1760 = vstv %s1759
        %vm1761 = vcmp.lt.s32.totalorder %v1760, %v1247
        %v1762 = vsel %vm1761, 1, 0
        %v1763 = vcvt.s32.f32 %v1762
        %v1764 = vpack.c.bf16 %v1739, %v1739
        %1765 = vmatpush.bf16.msra.mxu0 %v1369
        %1766 = vmatpush.bf16.msra.mxu0 %v1366
        %1767 = vmatpush.bf16.msra.mxu0 %v1363
        %1768 = vmatpush.bf16.msra.mxu0 %v1360
        %1769 = vmatpush.bf16.msra.mxu0 %v1357
        %1770 = vmatpush.bf16.msra.mxu0 %v1354
        %1771 = vmatpush.bf16.msra.mxu0 %v1351
        %1772 = vmatpush.bf16.msra.mxu0 %v1348
        %1773 = vmatmul.bf16.gmra.mxu0 %v1764
        %v1774 = vpop.f32.mrf.mxu0
        %v1775 = vadd.f32 0.0, %v1774
        %v1776 = vpop.f32.mrf.mxu0
        %1777 = vdwg.mxu0
        %1778 = vmatpush.bf16.msra.mxu0 %v1370
        %1779 = vmatpush.bf16.msra.mxu0 %v1367
        %1780 = vmatpush.bf16.msra.mxu0 %v1364
        %1781 = vmatpush.bf16.msra.mxu0 %v1361
        %1782 = vmatpush.bf16.msra.mxu0 %v1358
        %1783 = vmatpush.bf16.msra.mxu0 %v1355
        %1784 = vmatpush.bf16.msra.mxu0 %v1352
        %1785 = vmatpush.bf16.msra.mxu0 %v1349
        %1786 = vmatmul.bf16.gmra.mxu0 %v1764
        %v1787 = vpop.f32.mrf.mxu0
        %v1788 = vadd.f32 0.0, %v1787
        %v1789 = vpop.f32.mrf.mxu0
        %1790 = vdwg.mxu0
        %1791 = vmatpush.bf16.msra.mxu0 %v1371
        %1792 = vmatpush.bf16.msra.mxu0 %v1368
        %1793 = vmatpush.bf16.msra.mxu0 %v1365
        %1794 = vmatpush.bf16.msra.mxu0 %v1362
        %1795 = vmatpush.bf16.msra.mxu0 %v1359
        %1796 = vmatpush.bf16.msra.mxu0 %v1356
        %1797 = vmatpush.bf16.msra.mxu0 %v1353
        %1798 = vmatpush.bf16.msra.mxu0 %v1350
        %1799 = vmatmul.bf16.gmra.mxu0 %v1764
        %v1800 = vpop.f32.mrf.mxu0
        %v1801 = vadd.f32 0.0, %v1800
        %v1802 = vpop.f32.mrf.mxu0
        %1803 = vdwg.mxu0
        %v1804 = vunpack.c.l.bf16 %v1749
        %v1805 = vadd.f32 %v1804, %v1775
        %v1806 = vxor.u32 %v1805, 2147483648
        %v1807 = vmul.f32 %v1806, 1.442695
        %v1808 = vpow.pop %v1807
        %v1809 = vadd.f32 %v1808, 1.0
        %v1810 = vrcp.pop %v1809
        %v1811 = vmul.f32 %v1809, %v1810
        %v1812 = vsub.f32 1.0, %v1811
        %v1813 = vmul.f32 %v1810, %v1812
        %v1814 = vadd.f32 %v1810, %v1813
        %vm1815 = vweird.f32 %v1809
        %vm1816 = vweird.f32 %v1810
        %vm1817 = vmor %vm1815, %vm1816
        %v1818 = vsel %vm1817, %v1810, %v1814
        %v1819 = vand.u32 2147483647, %v1809
        %vm1820 = vcmp.eq.f32.partialorder %v1819, 8.507059e+37
        %v1821 = vand.u32 %v1809, 2147483648
        %v1822 = vor.u32 1.1754944e-38, %v1821
        %v1823 = vsel %vm1820, %v1822, %v1818
        %v1824 = vmul.f32 1.0, %v1823
        %v1826 = vrot.slane %v1749, 4
        %v1828 = vunpack.c.l.bf16 %v1826
        %v1829 = vadd.f32 %v1828, %v1788
        %v1830 = vxor.u32 %v1829, 2147483648
        %v1831 = vmul.f32 %v1830, 1.442695
        %v1832 = vpow.pop %v1831
        %v1833 = vadd.f32 %v1832, 1.0
        %v1834 = vrcp.pop %v1833
        %v1835 = vmul.f32 %v1833, %v1834
        %v1836 = vsub.f32 1.0, %v1835
        %v1837 = vmul.f32 %v1834, %v1836
        %v1838 = vadd.f32 %v1834, %v1837
        %vm1839 = vweird.f32 %v1833
        %vm1840 = vweird.f32 %v1834
        %vm1841 = vmor %vm1839, %vm1840
        %v1842 = vsel %vm1841, %v1834, %v1838
        %v1843 = vand.u32 2147483647, %v1833
        %vm1844 = vcmp.eq.f32.partialorder %v1843, 8.507059e+37
        %v1845 = vand.u32 %v1833, 2147483648
        %v1846 = vor.u32 1.1754944e-38, %v1845
        %v1847 = vsel %vm1844, %v1846, %v1842
        %v1848 = vmul.f32 1.0, %v1847
        %v1849 = vadd.f32 %v1801, %v1481
        %v1850 = vmul.f32 %v1824, %v1849
        %v1851 = vunpack.c.l.bf16 %v1750
        %v1852 = vadd.f32 %v1851, %v1850
        %v1853 = vtanh.pop %v1852
        %v1854 = vsub.f32 1.0, %v1848
        %v1855 = vmul.f32 %v1854, %v1853
        %v1856 = vmul.f32 %v1848, %v1739
        %v1857 = vadd.f32 %v1855, %v1856
        %v1858 = vpack.c.bf16 %v1747, %v1747
        %1859 = vmatpush.bf16.msra.mxu0 %v1594
        %1860 = vmatpush.bf16.msra.mxu0 %v1591
        %1861 = vmatpush.bf16.msra.mxu0 %v1588
        %1862 = vmatpush.bf16.msra.mxu0 %v1585
        %1863 = vmatpush.bf16.msra.mxu0 %v1582
        %1864 = vmatpush.bf16.msra.mxu0 %v1579
        %1865 = vmatpush.bf16.msra.mxu0 %v1576
        %1866 = vmatpush.bf16.msra.mxu0 %v1573
        %1867 = vmatmul.bf16.gmra.mxu0 %v1858
        %v1868 = vpop.f32.mrf.mxu0
        %v1869 = vadd.f32 0.0, %v1868
        %v1870 = vpop.f32.mrf.mxu0
        %1871 = vdwg.mxu0
        %1872 = vmatpush.bf16.msra.mxu0 %v1595
        %1873 = vmatpush.bf16.msra.mxu0 %v1592
        %1874 = vmatpush.bf16.msra.mxu0 %v1589
        %1875 = vmatpush.bf16.msra.mxu0 %v1586
        %1876 = vmatpush.bf16.msra.mxu0 %v1583
        %1877 = vmatpush.bf16.msra.mxu0 %v1580
        %1878 = vmatpush.bf16.msra.mxu0 %v1577
        %1879 = vmatpush.bf16.msra.mxu0 %v1574
        %1880 = vmatmul.bf16.gmra.mxu0 %v1858
        %v1881 = vpop.f32.mrf.mxu0
        %v1882 = vadd.f32 0.0, %v1881
        %v1883 = vpop.f32.mrf.mxu0
        %1884 = vdwg.mxu0
        %1885 = vmatpush.bf16.msra.mxu0 %v1596
        %1886 = vmatpush.bf16.msra.mxu0 %v1593
        %1887 = vmatpush.bf16.msra.mxu0 %v1590
        %1888 = vmatpush.bf16.msra.mxu0 %v1587
        %1889 = vmatpush.bf16.msra.mxu0 %v1584
        %1890 = vmatpush.bf16.msra.mxu0 %v1581
        %1891 = vmatpush.bf16.msra.mxu0 %v1578
        %1892 = vmatpush.bf16.msra.mxu0 %v1575
        %1893 = vmatmul.bf16.gmra.mxu0 %v1858
        %v1894 = vpop.f32.mrf.mxu0
        %v1895 = vadd.f32 0.0, %v1894
        %v1896 = vpop.f32.mrf.mxu0
        %1897 = vdwg.mxu0
        %v1898 = vunpack.c.l.bf16 %v1752
        %v1899 = vadd.f32 %v1898, %v1869
        %v1900 = vxor.u32 %v1899, 2147483648
        %v1901 = vmul.f32 %v1900, 1.442695
        %v1902 = vpow.pop %v1901
        %v1903 = vadd.f32 %v1902, 1.0
        %v1904 = vrcp.pop %v1903
        %v1905 = vmul.f32 %v1903, %v1904
        %v1906 = vsub.f32 1.0, %v1905
        %v1907 = vmul.f32 %v1904, %v1906
        %v1908 = vadd.f32 %v1904, %v1907
        %vm1909 = vweird.f32 %v1903
        %vm1910 = vweird.f32 %v1904
        %vm1911 = vmor %vm1909, %vm1910
        %v1912 = vsel %vm1911, %v1904, %v1908
        %v1913 = vand.u32 2147483647, %v1903
        %vm1914 = vcmp.eq.f32.partialorder %v1913, 8.507059e+37
        %v1915 = vand.u32 %v1903, 2147483648
        %v1916 = vor.u32 1.1754944e-38, %v1915
        %v1917 = vsel %vm1914, %v1916, %v1912
        %v1918 = vmul.f32 1.0, %v1917
        %v1920 = vrot.slane %v1752, 4
        %v1922 = vunpack.c.l.bf16 %v1920
        %v1923 = vadd.f32 %v1922, %v1882
        %v1924 = vxor.u32 %v1923, 2147483648
        %v1925 = vmul.f32 %v1924, 1.442695
        %v1926 = vpow.pop %v1925
        %v1927 = vadd.f32 %v1926, 1.0
        %v1928 = vrcp.pop %v1927
        %v1929 = vmul.f32 %v1927, %v1928
        %v1930 = vsub.f32 1.0, %v1929
        %v1931 = vmul.f32 %v1928, %v1930
        %v1932 = vadd.f32 %v1928, %v1931
        %vm1933 = vweird.f32 %v1927
        %vm1934 = vweird.f32 %v1928
        %vm1935 = vmor %vm1933, %vm1934
        %v1936 = vsel %vm1935, %v1928, %v1932
        %v1937 = vand.u32 2147483647, %v1927
        %vm1938 = vcmp.eq.f32.partialorder %v1937, 8.507059e+37
        %v1939 = vand.u32 %v1927, 2147483648
        %v1940 = vor.u32 1.1754944e-38, %v1939
        %v1941 = vsel %vm1938, %v1940, %v1936
        %v1942 = vmul.f32 1.0, %v1941
        %v1943 = vadd.f32 %v1895, %v1706
        %v1944 = vmul.f32 %v1918, %v1943
        %v1945 = vunpack.c.l.bf16 %v1753
        %v1946 = vadd.f32 %v1945, %v1944
        %v1947 = vtanh.pop %v1946
        %v1948 = vsub.f32 1.0, %v1942
        %v1949 = vmul.f32 %v1948, %v1947
        %v1950 = vmul.f32 %v1942, %v1747
        %v1951 = vadd.f32 %v1949, %v1950
        %1953 = vset.pattern.permute.xlu0 0
        %1954 = vperm.xlu0 %1953, %v1758
        %v1955 = vpop.permute.xlu0 %1954
        %v1957 = vmul.f32 %v1955, %v1857
        %s1958 = scalar_lea.vmem %s642, 8 [#allocation21]
        %1959 = vst [vmem:[%s1958] sm:$0xff] %v1957
        %1961 = vset.pattern.permute.xlu0 0
        %1962 = vperm.xlu0 %1961, %v1763
        %v1963 = vpop.permute.xlu0 %1962
        %v1965 = vmul.f32 %v1963, %v1951
        %s1966 = scalar_lea.vmem %s649, 16 [#allocation22]
        %1967 = vst [vmem:[%s1966] sm:$0xff] %v1965
        %v1968 = vsub.f32 1.0, %v1758
        %1970 = vset.pattern.permute.xlu0 0
        %1971 = vperm.xlu0 %1970, %v1968
        %v1972 = vpop.permute.xlu0 %1971
        %v1974 = vmul.f32 %v1972, %v1739
        %v1975 = vadd.f32 %v1957, %v1974
        %v1976 = vsub.f32 1.0, %v1763
        %1978 = vset.pattern.permute.xlu0 0
        %1979 = vperm.xlu0 %1978, %v1976
        %v1980 = vpop.permute.xlu0 %1979
        %v1982 = vmul.f32 %v1980, %v1747
        %v1983 = vadd.f32 %v1965, %v1982
        %s1984 = scalar_lea.vmem [#allocation2], 24
        %v1985 = vld [vmem:[%s1984] sm:$0xff]
        %v1986 = vld [vmem:[%s1984 + $0x8] sm:$0xf]
        %s1987 = scalar_lea.vmem [#allocation3], 12
        %v1988 = vld [vmem:[%s1987] sm:$0xff]
        %v1989 = vld [vmem:[%s1987 + $0x8] sm:$0xf]
        %s1990 = sadd.s32 %s1248, 2
        %v1991 = vstv %s1990
        %vm1992 = vcmp.lt.s32.totalorder %v1991, %v1247
        %v1993 = vsel %vm1992, 1, 0
        %v1994 = vcvt.s32.f32 %v1993
        %s1995 = sadd.s32 %s1250, 1
        %v1996 = vstv %s1995
        %vm1997 = vcmp.lt.s32.totalorder %v1996, %v1247
        %v1998 = vsel %vm1997, 1, 0
        %v1999 = vcvt.s32.f32 %v1998
        %v2000 = vpack.c.bf16 %v1975, %v1975
        %2001 = vmatpush.bf16.msra.mxu0 %v1369
        %2002 = vmatpush.bf16.msra.mxu0 %v1366
        %2003 = vmatpush.bf16.msra.mxu0 %v1363
        %2004 = vmatpush.bf16.msra.mxu0 %v1360
        %2005 = vmatpush.bf16.msra.mxu0 %v1357
        %2006 = vmatpush.bf16.msra.mxu0 %v1354
        %2007 = vmatpush.bf16.msra.mxu0 %v1351
        %2008 = vmatpush.bf16.msra.mxu0 %v1348
        %2009 = vmatmul.bf16.gmra.mxu0 %v2000
        %v2010 = vpop.f32.mrf.mxu0
        %v2011 = vadd.f32 0.0, %v2010
        %v2012 = vpop.f32.mrf.mxu0
        %2013 = vdwg.mxu0
        %2014 = vmatpush.bf16.msra.mxu0 %v1370
        %2015 = vmatpush.bf16.msra.mxu0 %v1367
        %2016 = vmatpush.bf16.msra.mxu0 %v1364
        %2017 = vmatpush.bf16.msra.mxu0 %v1361
        %2018 = vmatpush.bf16.msra.mxu0 %v1358
        %2019 = vmatpush.bf16.msra.mxu0 %v1355
        %2020 = vmatpush.bf16.msra.mxu0 %v1352
        %2021 = vmatpush.bf16.msra.mxu0 %v1349
        %2022 = vmatmul.bf16.gmra.mxu0 %v2000
        %v2023 = vpop.f32.mrf.mxu0
        %v2024 = vadd.f32 0.0, %v2023
        %v2025 = vpop.f32.mrf.mxu0
        %2026 = vdwg.mxu0
        %2027 = vmatpush.bf16.msra.mxu0 %v1371
        %2028 = vmatpush.bf16.msra.mxu0 %v1368
        %2029 = vmatpush.bf16.msra.mxu0 %v1365
        %2030 = vmatpush.bf16.msra.mxu0 %v1362
        %2031 = vmatpush.bf16.msra.mxu0 %v1359
        %2032 = vmatpush.bf16.msra.mxu0 %v1356
        %2033 = vmatpush.bf16.msra.mxu0 %v1353
        %2034 = vmatpush.bf16.msra.mxu0 %v1350
        %2035 = vmatmul.bf16.gmra.mxu0 %v2000
        %v2036 = vpop.f32.mrf.mxu0
        %v2037 = vadd.f32 0.0, %v2036
        %v2038 = vpop.f32.mrf.mxu0
        %2039 = vdwg.mxu0
        %v2040 = vunpack.c.l.bf16 %v1985
        %v2041 = vadd.f32 %v2040, %v2011
        %v2042 = vxor.u32 %v2041, 2147483648
        %v2043 = vmul.f32 %v2042, 1.442695
        %v2044 = vpow.pop %v2043
        %v2045 = vadd.f32 %v2044, 1.0
        %v2046 = vrcp.pop %v2045
        %v2047 = vmul.f32 %v2045, %v2046
        %v2048 = vsub.f32 1.0, %v2047
        %v2049 = vmul.f32 %v2046, %v2048
        %v2050 = vadd.f32 %v2046, %v2049
        %vm2051 = vweird.f32 %v2045
        %vm2052 = vweird.f32 %v2046
        %vm2053 = vmor %vm2051, %vm2052
        %v2054 = vsel %vm2053, %v2046, %v2050
        %v2055 = vand.u32 2147483647, %v2045
        %vm2056 = vcmp.eq.f32.partialorder %v2055, 8.507059e+37
        %v2057 = vand.u32 %v2045, 2147483648
        %v2058 = vor.u32 1.1754944e-38, %v2057
        %v2059 = vsel %vm2056, %v2058, %v2054
        %v2060 = vmul.f32 1.0, %v2059
        %v2062 = vrot.slane %v1985, 4
        %v2064 = vunpack.c.l.bf16 %v2062
        %v2065 = vadd.f32 %v2064, %v2024
        %v2066 = vxor.u32 %v2065, 2147483648
        %v2067 = vmul.f32 %v2066, 1.442695
        %v2068 = vpow.pop %v2067
        %v2069 = vadd.f32 %v2068, 1.0
        %v2070 = vrcp.pop %v2069
        %v2071 = vmul.f32 %v2069, %v2070
        %v2072 = vsub.f32 1.0, %v2071
        %v2073 = vmul.f32 %v2070, %v2072
        %v2074 = vadd.f32 %v2070, %v2073
        %vm2075 = vweird.f32 %v2069
        %vm2076 = vweird.f32 %v2070
        %vm2077 = vmor %vm2075, %vm2076
        %v2078 = vsel %vm2077, %v2070, %v2074
        %v2079 = vand.u32 2147483647, %v2069
        %vm2080 = vcmp.eq.f32.partialorder %v2079, 8.507059e+37
        %v2081 = vand.u32 %v2069, 2147483648
        %v2082 = vor.u32 1.1754944e-38, %v2081
        %v2083 = vsel %vm2080, %v2082, %v2078
        %v2084 = vmul.f32 1.0, %v2083
        %v2085 = vadd.f32 %v2037, %v1481
        %v2086 = vmul.f32 %v2060, %v2085
        %v2087 = vunpack.c.l.bf16 %v1986
        %v2088 = vadd.f32 %v2087, %v2086
        %v2089 = vtanh.pop %v2088
        %v2090 = vsub.f32 1.0, %v2084
        %v2091 = vmul.f32 %v2090, %v2089
        %v2092 = vmul.f32 %v2084, %v1975
        %v2093 = vadd.f32 %v2091, %v2092
        %v2094 = vpack.c.bf16 %v1983, %v1983
        %2095 = vmatpush.bf16.msra.mxu0 %v1594
        %2096 = vmatpush.bf16.msra.mxu0 %v1591
        %2097 = vmatpush.bf16.msra.mxu0 %v1588
        %2098 = vmatpush.bf16.msra.mxu0 %v1585
        %2099 = vmatpush.bf16.msra.mxu0 %v1582
        %2100 = vmatpush.bf16.msra.mxu0 %v1579
        %2101 = vmatpush.bf16.msra.mxu0 %v1576
        %2102 = vmatpush.bf16.msra.mxu0 %v1573
        %2103 = vmatmul.bf16.gmra.mxu0 %v2094
        %v2104 = vpop.f32.mrf.mxu0
        %v2105 = vadd.f32 0.0, %v2104
        %v2106 = vpop.f32.mrf.mxu0
        %2107 = vdwg.mxu0
        %2108 = vmatpush.bf16.msra.mxu0 %v1595
        %2109 = vmatpush.bf16.msra.mxu0 %v1592
        %2110 = vmatpush.bf16.msra.mxu0 %v1589
        %2111 = vmatpush.bf16.msra.mxu0 %v1586
        %2112 = vmatpush.bf16.msra.mxu0 %v1583
        %2113 = vmatpush.bf16.msra.mxu0 %v1580
        %2114 = vmatpush.bf16.msra.mxu0 %v1577
        %2115 = vmatpush.bf16.msra.mxu0 %v1574
        %2116 = vmatmul.bf16.gmra.mxu0 %v2094
        %v2117 = vpop.f32.mrf.mxu0
        %v2118 = vadd.f32 0.0, %v2117
        %v2119 = vpop.f32.mrf.mxu0
        %2120 = vdwg.mxu0
        %2121 = vmatpush.bf16.msra.mxu0 %v1596
        %2122 = vmatpush.bf16.msra.mxu0 %v1593
        %2123 = vmatpush.bf16.msra.mxu0 %v1590
        %2124 = vmatpush.bf16.msra.mxu0 %v1587
        %2125 = vmatpush.bf16.msra.mxu0 %v1584
        %2126 = vmatpush.bf16.msra.mxu0 %v1581
        %2127 = vmatpush.bf16.msra.mxu0 %v1578
        %2128 = vmatpush.bf16.msra.mxu0 %v1575
        %2129 = vmatmul.bf16.gmra.mxu0 %v2094
        %v2130 = vpop.f32.mrf.mxu0
        %v2131 = vadd.f32 0.0, %v2130
        %v2132 = vpop.f32.mrf.mxu0
        %2133 = vdwg.mxu0
        %v2134 = vunpack.c.l.bf16 %v1988
        %v2135 = vadd.f32 %v2134, %v2105
        %v2136 = vxor.u32 %v2135, 2147483648
        %v2137 = vmul.f32 %v2136, 1.442695
        %v2138 = vpow.pop %v2137
        %v2139 = vadd.f32 %v2138, 1.0
        %v2140 = vrcp.pop %v2139
        %v2141 = vmul.f32 %v2139, %v2140
        %v2142 = vsub.f32 1.0, %v2141
        %v2143 = vmul.f32 %v2140, %v2142
        %v2144 = vadd.f32 %v2140, %v2143
        %vm2145 = vweird.f32 %v2139
        %vm2146 = vweird.f32 %v2140
        %vm2147 = vmor %vm2145, %vm2146
        %v2148 = vsel %vm2147, %v2140, %v2144
        %v2149 = vand.u32 2147483647, %v2139
        %vm2150 = vcmp.eq.f32.partialorder %v2149, 8.507059e+37
        %v2151 = vand.u32 %v2139, 2147483648
        %v2152 = vor.u32 1.1754944e-38, %v2151
        %v2153 = vsel %vm2150, %v2152, %v2148
        %v2154 = vmul.f32 1.0, %v2153
        %v2156 = vrot.slane %v1988, 4
        %v2158 = vunpack.c.l.bf16 %v2156
        %v2159 = vadd.f32 %v2158, %v2118
        %v2160 = vxor.u32 %v2159, 2147483648
        %v2161 = vmul.f32 %v2160, 1.442695
        %v2162 = vpow.pop %v2161
        %v2163 = vadd.f32 %v2162, 1.0
        %v2164 = vrcp.pop %v2163
        %v2165 = vmul.f32 %v2163, %v2164
        %v2166 = vsub.f32 1.0, %v2165
        %v2167 = vmul.f32 %v2164, %v2166
        %v2168 = vadd.f32 %v2164, %v2167
        %vm2169 = vweird.f32 %v2163
        %vm2170 = vweird.f32 %v2164
        %vm2171 = vmor %vm2169, %vm2170
        %v2172 = vsel %vm2171, %v2164, %v2168
        %v2173 = vand.u32 2147483647, %v2163
        %vm2174 = vcmp.eq.f32.partialorder %v2173, 8.507059e+37
        %v2175 = vand.u32 %v2163, 2147483648
        %v2176 = vor.u32 1.1754944e-38, %v2175
        %v2177 = vsel %vm2174, %v2176, %v2172
        %v2178 = vmul.f32 1.0, %v2177
        %v2179 = vadd.f32 %v2131, %v1706
        %v2180 = vmul.f32 %v2154, %v2179
        %v2181 = vunpack.c.l.bf16 %v1989
        %v2182 = vadd.f32 %v2181, %v2180
        %v2183 = vtanh.pop %v2182
        %v2184 = vsub.f32 1.0, %v2178
        %v2185 = vmul.f32 %v2184, %v2183
        %v2186 = vmul.f32 %v2178, %v1983
        %v2187 = vadd.f32 %v2185, %v2186
        %2189 = vset.pattern.permute.xlu0 0
        %2190 = vperm.xlu0 %2189, %v1994
        %v2191 = vpop.permute.xlu0 %2190
        %v2193 = vmul.f32 %v2191, %v2093
        %s2194 = scalar_lea.vmem %s642, 16 [#allocation21]
        %2195 = vst [vmem:[%s2194] sm:$0xff] %v2193
        %2197 = vset.pattern.permute.xlu0 0
        %2198 = vperm.xlu0 %2197, %v1999
        %v2199 = vpop.permute.xlu0 %2198
        %v2201 = vmul.f32 %v2199, %v2187
        %s2202 = scalar_lea.vmem %s649, 8 [#allocation22]
        %2203 = vst [vmem:[%s2202] sm:$0xff] %v2201
        %v2204 = vsub.f32 1.0, %v1994
        %2206 = vset.pattern.permute.xlu0 0
        %2207 = vperm.xlu0 %2206, %v2204
        %v2208 = vpop.permute.xlu0 %2207
        %v2210 = vmul.f32 %v2208, %v1975
        %v2211 = vadd.f32 %v2193, %v2210
        %v2212 = vsub.f32 1.0, %v1999
        %2214 = vset.pattern.permute.xlu0 0
        %2215 = vperm.xlu0 %2214, %v2212
        %v2216 = vpop.permute.xlu0 %2215
        %v2218 = vmul.f32 %v2216, %v1983
        %v2219 = vadd.f32 %v2201, %v2218
        %s2220 = scalar_lea.vmem [#allocation2], 36
        %v2221 = vld [vmem:[%s2220] sm:$0xff]
        %v2222 = vld [vmem:[%s2220 + $0x8] sm:$0xf]
        %v2223 = vld [vmem:[#allocation3] sm:$0xff]
        %v2224 = vld [vmem:[#allocation3 + $0x8] sm:$0xf]
        %s2225 = sadd.s32 %s1248, 3
        %v2226 = vstv %s2225
        %vm2227 = vcmp.lt.s32.totalorder %v2226, %v1247
        %v2228 = vsel %vm2227, 1, 0
        %v2229 = vcvt.s32.f32 %v2228
        %v2230 = vstv %s1250
        %vm2231 = vcmp.lt.s32.totalorder %v2230, %v1247
        %v2232 = vsel %vm2231, 1, 0
        %v2233 = vcvt.s32.f32 %v2232
        %v2234 = vpack.c.bf16 %v2211, %v2211
        %2235 = vmatpush.bf16.msra.mxu0 %v1369
        %2236 = vmatpush.bf16.msra.mxu0 %v1366
        %2237 = vmatpush.bf16.msra.mxu0 %v1363
        %2238 = vmatpush.bf16.msra.mxu0 %v1360
        %2239 = vmatpush.bf16.msra.mxu0 %v1357
        %2240 = vmatpush.bf16.msra.mxu0 %v1354
        %2241 = vmatpush.bf16.msra.mxu0 %v1351
        %2242 = vmatpush.bf16.msra.mxu0 %v1348
        %2243 = vmatmul.bf16.gmra.mxu0 %v2234
        %v2244 = vpop.f32.mrf.mxu0
        %v2245 = vadd.f32 0.0, %v2244
        %v2246 = vpop.f32.mrf.mxu0
        %2247 = vdwg.mxu0
        %2248 = vmatpush.bf16.msra.mxu0 %v1370
        %2249 = vmatpush.bf16.msra.mxu0 %v1367
        %2250 = vmatpush.bf16.msra.mxu0 %v1364
        %2251 = vmatpush.bf16.msra.mxu0 %v1361
        %2252 = vmatpush.bf16.msra.mxu0 %v1358
        %2253 = vmatpush.bf16.msra.mxu0 %v1355
        %2254 = vmatpush.bf16.msra.mxu0 %v1352
        %2255 = vmatpush.bf16.msra.mxu0 %v1349
        %2256 = vmatmul.bf16.gmra.mxu0 %v2234
        %v2257 = vpop.f32.mrf.mxu0
        %v2258 = vadd.f32 0.0, %v2257
        %v2259 = vpop.f32.mrf.mxu0
        %2260 = vdwg.mxu0
        %2261 = vmatpush.bf16.msra.mxu0 %v1371
        %2262 = vmatpush.bf16.msra.mxu0 %v1368
        %2263 = vmatpush.bf16.msra.mxu0 %v1365
        %2264 = vmatpush.bf16.msra.mxu0 %v1362
        %2265 = vmatpush.bf16.msra.mxu0 %v1359
        %2266 = vmatpush.bf16.msra.mxu0 %v1356
        %2267 = vmatpush.bf16.msra.mxu0 %v1353
        %2268 = vmatpush.bf16.msra.mxu0 %v1350
        %2269 = vmatmul.bf16.gmra.mxu0 %v2234
        %v2270 = vpop.f32.mrf.mxu0
        %v2271 = vadd.f32 0.0, %v2270
        %v2272 = vpop.f32.mrf.mxu0
        %2273 = vdwg.mxu0
        %v2274 = vunpack.c.l.bf16 %v2221
        %v2275 = vadd.f32 %v2274, %v2245
        %v2276 = vxor.u32 %v2275, 2147483648
        %v2277 = vmul.f32 %v2276, 1.442695
        %v2278 = vpow.pop %v2277
        %v2279 = vadd.f32 %v2278, 1.0
        %v2280 = vrcp.pop %v2279
        %v2281 = vmul.f32 %v2279, %v2280
        %v2282 = vsub.f32 1.0, %v2281
        %v2283 = vmul.f32 %v2280, %v2282
        %v2284 = vadd.f32 %v2280, %v2283
        %vm2285 = vweird.f32 %v2279
        %vm2286 = vweird.f32 %v2280
        %vm2287 = vmor %vm2285, %vm2286
        %v2288 = vsel %vm2287, %v2280, %v2284
        %v2289 = vand.u32 2147483647, %v2279
        %vm2290 = vcmp.eq.f32.partialorder %v2289, 8.507059e+37
        %v2291 = vand.u32 %v2279, 2147483648
        %v2292 = vor.u32 1.1754944e-38, %v2291
        %v2293 = vsel %vm2290, %v2292, %v2288
        %v2294 = vmul.f32 1.0, %v2293
        %v2296 = vrot.slane %v2221, 4
        %v2298 = vunpack.c.l.bf16 %v2296
        %v2299 = vadd.f32 %v2298, %v2258
        %v2300 = vxor.u32 %v2299, 2147483648
        %v2301 = vmul.f32 %v2300, 1.442695
        %v2302 = vpow.pop %v2301
        %v2303 = vadd.f32 %v2302, 1.0
        %v2304 = vrcp.pop %v2303
        %v2305 = vmul.f32 %v2303, %v2304
        %v2306 = vsub.f32 1.0, %v2305
        %v2307 = vmul.f32 %v2304, %v2306
        %v2308 = vadd.f32 %v2304, %v2307
        %vm2309 = vweird.f32 %v2303
        %vm2310 = vweird.f32 %v2304
        %vm2311 = vmor %vm2309, %vm2310
        %v2312 = vsel %vm2311, %v2304, %v2308
        %v2313 = vand.u32 2147483647, %v2303
        %vm2314 = vcmp.eq.f32.partialorder %v2313, 8.507059e+37
        %v2315 = vand.u32 %v2303, 2147483648
        %v2316 = vor.u32 1.1754944e-38, %v2315
        %v2317 = vsel %vm2314, %v2316, %v2312
        %v2318 = vmul.f32 1.0, %v2317
        %v2319 = vadd.f32 %v2271, %v1481
        %v2320 = vmul.f32 %v2294, %v2319
        %v2321 = vunpack.c.l.bf16 %v2222
        %v2322 = vadd.f32 %v2321, %v2320
        %v2323 = vtanh.pop %v2322
        %v2324 = vsub.f32 1.0, %v2318
        %v2325 = vmul.f32 %v2324, %v2323
        %v2326 = vmul.f32 %v2318, %v2211
        %v2327 = vadd.f32 %v2325, %v2326
        %v2328 = vpack.c.bf16 %v2219, %v2219
        %2329 = vmatpush.bf16.msra.mxu0 %v1594
        %2330 = vmatpush.bf16.msra.mxu0 %v1591
        %2331 = vmatpush.bf16.msra.mxu0 %v1588
        %2332 = vmatpush.bf16.msra.mxu0 %v1585
        %2333 = vmatpush.bf16.msra.mxu0 %v1582
        %2334 = vmatpush.bf16.msra.mxu0 %v1579
        %2335 = vmatpush.bf16.msra.mxu0 %v1576
        %2336 = vmatpush.bf16.msra.mxu0 %v1573
        %2337 = vmatmul.bf16.gmra.mxu0 %v2328
        %v2338 = vpop.f32.mrf.mxu0
        %v2339 = vadd.f32 0.0, %v2338
        %v2340 = vpop.f32.mrf.mxu0
        %2341 = vdwg.mxu0
        %2342 = vmatpush.bf16.msra.mxu0 %v1595
        %2343 = vmatpush.bf16.msra.mxu0 %v1592
        %2344 = vmatpush.bf16.msra.mxu0 %v1589
        %2345 = vmatpush.bf16.msra.mxu0 %v1586
        %2346 = vmatpush.bf16.msra.mxu0 %v1583
        %2347 = vmatpush.bf16.msra.mxu0 %v1580
        %2348 = vmatpush.bf16.msra.mxu0 %v1577
        %2349 = vmatpush.bf16.msra.mxu0 %v1574
        %2350 = vmatmul.bf16.gmra.mxu0 %v2328
        %v2351 = vpop.f32.mrf.mxu0
        %v2352 = vadd.f32 0.0, %v2351
        %v2353 = vpop.f32.mrf.mxu0
        %2354 = vdwg.mxu0
        %2355 = vmatpush.bf16.msra.mxu0 %v1596
        %2356 = vmatpush.bf16.msra.mxu0 %v1593
        %2357 = vmatpush.bf16.msra.mxu0 %v1590
        %2358 = vmatpush.bf16.msra.mxu0 %v1587
        %2359 = vmatpush.bf16.msra.mxu0 %v1584
        %2360 = vmatpush.bf16.msra.mxu0 %v1581
        %2361 = vmatpush.bf16.msra.mxu0 %v1578
        %2362 = vmatpush.bf16.msra.mxu0 %v1575
        %2363 = vmatmul.bf16.gmra.mxu0 %v2328
        %v2364 = vpop.f32.mrf.mxu0
        %v2365 = vadd.f32 0.0, %v2364
        %v2366 = vpop.f32.mrf.mxu0
        %2367 = vdwg.mxu0
        %v2368 = vunpack.c.l.bf16 %v2223
        %v2369 = vadd.f32 %v2368, %v2339
        %v2370 = vxor.u32 %v2369, 2147483648
        %v2371 = vmul.f32 %v2370, 1.442695
        %v2372 = vpow.pop %v2371
        %v2373 = vadd.f32 %v2372, 1.0
        %v2374 = vrcp.pop %v2373
        %v2375 = vmul.f32 %v2373, %v2374
        %v2376 = vsub.f32 1.0, %v2375
        %v2377 = vmul.f32 %v2374, %v2376
        %v2378 = vadd.f32 %v2374, %v2377
        %vm2379 = vweird.f32 %v2373
        %vm2380 = vweird.f32 %v2374
        %vm2381 = vmor %vm2379, %vm2380
        %v2382 = vsel %vm2381, %v2374, %v2378
        %v2383 = vand.u32 2147483647, %v2373
        %vm2384 = vcmp.eq.f32.partialorder %v2383, 8.507059e+37
        %v2385 = vand.u32 %v2373, 2147483648
        %v2386 = vor.u32 1.1754944e-38, %v2385
        %v2387 = vsel %vm2384, %v2386, %v2382
        %v2388 = vmul.f32 1.0, %v2387
        %v2390 = vrot.slane %v2223, 4
        %v2392 = vunpack.c.l.bf16 %v2390
        %v2393 = vadd.f32 %v2392, %v2352
        %v2394 = vxor.u32 %v2393, 2147483648
        %v2395 = vmul.f32 %v2394, 1.442695
        %v2396 = vpow.pop %v2395
        %v2397 = vadd.f32 %v2396, 1.0
        %v2398 = vrcp.pop %v2397
        %v2399 = vmul.f32 %v2397, %v2398
        %v2400 = vsub.f32 1.0, %v2399
        %v2401 = vmul.f32 %v2398, %v2400
        %v2402 = vadd.f32 %v2398, %v2401
        %vm2403 = vweird.f32 %v2397
        %vm2404 = vweird.f32 %v2398
        %vm2405 = vmor %vm2403, %vm2404
        %v2406 = vsel %vm2405, %v2398, %v2402
        %v2407 = vand.u32 2147483647, %v2397
        %vm2408 = vcmp.eq.f32.partialorder %v2407, 8.507059e+37
        %v2409 = vand.u32 %v2397, 2147483648
        %v2410 = vor.u32 1.1754944e-38, %v2409
        %v2411 = vsel %vm2408, %v2410, %v2406
        %v2412 = vmul.f32 1.0, %v2411
        %v2413 = vadd.f32 %v2365, %v1706
        %v2414 = vmul.f32 %v2388, %v2413
        %v2415 = vunpack.c.l.bf16 %v2224
        %v2416 = vadd.f32 %v2415, %v2414
        %v2417 = vtanh.pop %v2416
        %v2418 = vsub.f32 1.0, %v2412
        %v2419 = vmul.f32 %v2418, %v2417
        %v2420 = vmul.f32 %v2412, %v2219
        %v2421 = vadd.f32 %v2419, %v2420
        %2423 = vset.pattern.permute.xlu0 0
        %2424 = vperm.xlu0 %2423, %v2229
        %v2425 = vpop.permute.xlu0 %2424
        %v2427 = vmul.f32 %v2425, %v2327
        %s2428 = scalar_lea.vmem %s642, 24 [#allocation21]
        %2429 = vst [vmem:[%s2428] sm:$0xff] %v2427
        %2431 = vset.pattern.permute.xlu0 0
        %2432 = vperm.xlu0 %2431, %v2233
        %v2433 = vpop.permute.xlu0 %2432
        %v2435 = vmul.f32 %v2433, %v2421
        %2436 = vst [vmem:[%s649] sm:$0xff] %v2435
        %v2437 = vsub.f32 1.0, %v2229
        %2439 = vset.pattern.permute.xlu0 0
        %2440 = vperm.xlu0 %2439, %v2437
        %v2441 = vpop.permute.xlu0 %2440
        %v2443 = vmul.f32 %v2441, %v2211
        %v2444 = vadd.f32 %v2427, %v2443
        %v2445 = vsub.f32 1.0, %v2233
        %2447 = vset.pattern.permute.xlu0 0
        %2448 = vperm.xlu0 %2447, %v2445
        %v2449 = vpop.permute.xlu0 %2448
        %v2451 = vmul.f32 %v2449, %v2219
        %v2452 = vadd.f32 %v2435, %v2451
        %2453 = vst [vmem:[#allocation4] sm:$0xff] %v2444
        %2454 = vst [vmem:[#allocation5] sm:$0xff] %v2452
        %p2455 = scmp.eq.s32.totalorder %s41, 1
        // Predicated region
        $region109: #{tpu_custom_call.1} parent=67 // pred_check
          %p2456 = pneg %p2455
        $region110: #{tpu_custom_call.1} parent=67 // pred_check_branch
          %2458 = sbr.rel (%p2456) target = $region112
        $region111: #{tpu_custom_call.1} parent=67 // pred_region
          %2459 = vst [vmem:[#allocation24] sm:$0xff] %v2444
          %s2460 = scalar_lea.vmem [#allocation24], 8
          %2461 = vst [vmem:[%s2460] sm:$0xff] %v2452
        $region112: #{tpu_custom_call.1} parent=67 // pred_fallthru
          _
        %s2462 = sand.u32 %s313, 1
        %s2463 = scalar_lea.sflag [#allocation8], %s2462
        %s2464 = sand.u32 %s313, 1
        %s2465 = smul.addr %s2464, 32
        %s2466 = scalar_lea.vmem [#allocation21], %s2465
        %s2467 = sand.u32 %s41, 1
        %s2468 = scalar_lea.sflag [#allocation23], %s2467
        %s2469 = sand.u32 %s341, 1
        %s2470 = smul.addr %s2469, 32
        %s2471 = scalar_lea.vmem [#allocation22], %s2470
        // Predicated region
        $region113: #{tpu_custom_call.1} parent=67 // pred_check
          %p2472 = pneg %p323
        $region114: #{tpu_custom_call.1} parent=67 // pred_check_branch
          %2474 = sbr.rel (%p2472) target = $region116
        $region115: #{tpu_custom_call.1} parent=67 // pred_region
          %s2475 = smul.u32 4, %s41
          %2477 = vsyncadd %s2463, 0
          %s2478 = smul.addr %s2475, 8
          %s2479 = scalar_lea.hbm %s12, %s2478
          %s2480 = sshll.u32 %s2466, 4
          %s2481 = int_to_ptr.vmem [resolvable:$true] %s2480
          %s2482 = sshll.u32 %s2479, 4
          %s2483 = int_to_ptr.hbm [resolvable:$true] %s2482
          %2488 = dma.vmem_to_hbm [thread:$0]  %s2481, 512, %s2483, %s2463, 128, 128, 8
        $region116: #{tpu_custom_call.1} parent=67 // pred_fallthru
          _
        // Predicated region
        $region117: #{tpu_custom_call.1} parent=67 // pred_check
          %p2489 = pneg %p351
        $region118: #{tpu_custom_call.1} parent=67 // pred_check_branch
          %2491 = sbr.rel (%p2489) target = $region120
        $region119: #{tpu_custom_call.1} parent=67 // pred_region
          %s2492 = ssub.s32 1, %s41
          %s2493 = smul.u32 4, %s2492
          %2495 = vsyncadd %s2468, 0
          %s2496 = smul.addr %s2493, 8
          %s2497 = scalar_lea.hbm %s13, %s2496
          %s2498 = sshll.u32 %s2471, 4
          %s2499 = int_to_ptr.vmem [resolvable:$true] %s2498
          %s2500 = sshll.u32 %s2497, 4
          %s2501 = int_to_ptr.hbm [resolvable:$true] %s2500
          %2506 = dma.vmem_to_hbm [thread:$0]  %s2499, 512, %s2501, %s2468, 128, 128, 8
        $region120: #{tpu_custom_call.1} parent=67 // pred_fallthru
          _
        // Predicated region
        $region121: #{tpu_custom_call.1} parent=67 // pred_check
          %p2507 = pneg %p372
        $region122: #{tpu_custom_call.1} parent=67 // pred_check_branch
          %2509 = sbr.rel (%p2507) target = $region124
        $region123: #{tpu_custom_call.1} parent=67 // pred_region
          %2511 = vsyncadd [#allocation23], 0
          %s2512 = sshll.u32 [#allocation24], 4
          %s2513 = int_to_ptr.vmem [resolvable:$true] %s2512
          %s2514 = sshll.u32 %s14, 4
          %s2515 = int_to_ptr.hbm [resolvable:$true] %s2514
          %2520 = dma.vmem_to_hbm [thread:$0]  %s2513, 256, %s2515, [#allocation23], 128, 128, 8
        $region124: #{tpu_custom_call.1} parent=67 // pred_fallthru
          _
        // Predicated region
        $region125: #{tpu_custom_call.1} parent=67 // pred_check
          %p2521 = pneg %p372
        $region126: #{tpu_custom_call.1} parent=67 // pred_check_branch
          %2523 = sbr.rel (%p2521) target = $region128
        $region127: #{tpu_custom_call.1} parent=67 // pred_region
          %2525 = dma.done [#allocation23], 256
        $region128: #{tpu_custom_call.1} parent=67 // pred_fallthru
          _
      $region68: #{tpu_custom_call.1} parent=5 // pred_fallthru
        _
      %p2526 = scmp.le.s32.totalorder 2, %s36
      // Predicated region
      $region129: #{tpu_custom_call.1} parent=5 // pred_check
        %p2527 = pneg %p2526
      $region130: #{tpu_custom_call.1} parent=5 // pred_check_branch
        %2529 = sbr.rel (%p2527) target = $region132
      $region131: #{tpu_custom_call.1} parent=5 // pred_region
        %s2530 = ssub.s32 %s36, 2
        // Predicated region
        $region133: #{tpu_custom_call.1} parent=131 // pred_check
          %p2531 = pneg %p329
        $region134: #{tpu_custom_call.1} parent=131 // pred_check_branch
          %2533 = sbr.rel (%p2531) target = $region136
        $region135: #{tpu_custom_call.1} parent=131 // pred_region
          %s2534 = sand.u32 %s314, 1
          %s2535 = scalar_lea.sflag [#allocation8], %s2534
          %s2536 = sand.u32 %s314, 1
          %s2537 = smul.addr %s2536, 32
          %s2538 = scalar_lea.vmem [#allocation21], %s2537
          %2540 = dma.done %s2535, 512
        $region136: #{tpu_custom_call.1} parent=131 // pred_fallthru
          _
        // Predicated region
        $region137: #{tpu_custom_call.1} parent=131 // pred_check
          %p2541 = pneg %p357
        $region138: #{tpu_custom_call.1} parent=131 // pred_check_branch
          %2543 = sbr.rel (%p2541) target = $region140
        $region139: #{tpu_custom_call.1} parent=131 // pred_region
          %s2544 = sand.u32 %s42, 1
          %s2545 = scalar_lea.sflag [#allocation23], %s2544
          %s2546 = sand.u32 %s342, 1
          %s2547 = smul.addr %s2546, 32
          %s2548 = scalar_lea.vmem [#allocation22], %s2547
          %2550 = dma.done %s2545, 512
        $region140: #{tpu_custom_call.1} parent=131 // pred_fallthru
          _
      $region132: #{tpu_custom_call.1} parent=5 // pred_fallthru
        _
    $region6: #{tpu_custom_call.1} parent=1 // loop_footer
      %s40 = sadd.s32 1, %s36
    $region7: #{tpu_custom_call.1} parent=1 // loop_footer_branch
      %35 = sbr.rel target = $region3
    $region8: #{tpu_custom_call.1} parent=1 // loop_exit
      _
    %2551 = vsyncpa [#allocation7], 1
    %s2552 = scalar_lea.sflag [#allocation7], 1
    %2553 = vsyncpa %s2552, 1
    %2554 = vsyncpa [#allocation10], 1
    %s2555 = scalar_lea.sflag [#allocation10], 1
    %2556 = vsyncpa %s2555, 1
    %2557 = vsyncpa [#allocation13], 1
    %2558 = vsyncpa [#allocation16], 1
    %2559 = vsyncpa [#allocation19], 1
    %2560 = vsyncpa [#allocation8], 1
    %s2561 = scalar_lea.sflag [#allocation8], 1
    %2562 = vsyncpa %s2561, 1
    %2563 = vsyncpa [#allocation23], 1
    %s2564 = scalar_lea.sflag [#allocation23], 1
    %2565 = vsyncpa %s2564, 1

</llo_original>
